<compile_context>
chip_gen: v6e
topology: v6e:2x2x1
jax: 0.10.0
libtpu: 0.0.40
codegen_flags: <defaults>
</compile_context>

<pallas_src>
import functools

import jax
import jax.numpy as jnp
import numpy as np
from jax.experimental import pallas as pl
from jax.experimental.pallas import tpu as pltpu


def _round_up(x, m):
    return ((x + m - 1) // m) * m


def _guarded_softplus(rho):
    # log1p(exp(rho)) without overflow for large positive rho.
    return jnp.where(rho > 20.0, rho,
                     jnp.log1p(jnp.exp(jnp.minimum(rho, 20.0))))


def _bayesian_linear_kernel(x_ref, wmu_ref, wrho_ref, eps_w_ref, cg_ref,
                            bmu_ref, brho_ref, eps_b_ref, o_ref, acc_ref):
    k = pl.program_id(1)

    @pl.when(k == 0)
    def _():
        acc_ref[...] = jnp.zeros_like(acc_ref)

    # Sampled-weight construction (VPU / EUP).  Weight params come in
    # pre-transposed as [tk, tn] so no in-kernel transpose is needed.
    sigma_w = _guarded_softplus(wrho_ref[...])
    w = cg_ref[...] * (wmu_ref[...] + sigma_w * eps_w_ref[...])   # (tk, tn)

    # MXU: x[Bp, tk] @ w[tk, tn], accumulate in f32.
    acc_ref[...] += jnp.dot(x_ref[...], w, preferred_element_type=jnp.float32)

    @pl.when(k == pl.num_programs(1) - 1)
    def _():
        # Bias sampling + add only once, at the final K step.
        sigma_b = _guarded_softplus(brho_ref[...])                # (1, tn)
        b = bmu_ref[...] + sigma_b * eps_b_ref[...]               # (1, tn)
        o_ref[...] = (acc_ref[...] + b).astype(o_ref.dtype)


@functools.partial(jax.jit, static_argnames=("tn", "tk"))
def bayesian_linear_forward(x, weight_mu, weight_rho, eps_w, cgamma,
                            bias_mu, bias_rho, eps_b, *, tn=256, tk=512):
    """x: [B, in], weight params: [out, in] (PyTorch layout), bias: [out]."""
    B, K = x.shape
    N = weight_mu.shape[0]

    # Pre-transpose weight-shaped params to [in, out] so the MXU consumes
    # x @ w directly (kills the in-kernel XLU transpose).
    wmu_t = weight_mu.T
    wrho_t = weight_rho.T
    eps_w_t = eps_w.T
    cg_t = cgamma.T

    # Lane/sublane-dense, tile-divisible padded dims.
    tk = min(tk, _round_up(K, 128))
    tn = min(tn, _round_up(N, 128))
    Bp = _round_up(B, 8)
    Kp = _round_up(K, tk)
    Np = _round_up(N, tn)

    def pad2(a, rows, cols):
        return jnp.pad(a, ((0, rows - a.shape[0]), (0, cols - a.shape[1])))

    xp = pad2(x, Bp, Kp)
    wmu_p = pad2(wmu_t, Kp, Np)
    wrho_p = pad2(wrho_t, Kp, Np)
    epsw_p = pad2(eps_w_t, Kp, Np)
    cg_p = pad2(cg_t, Kp, Np)
    bmu_p = jnp.pad(bias_mu, (0, Np - N)).reshape(1, Np)
    brho_p = jnp.pad(bias_rho, (0, Np - N)).reshape(1, Np)
    epsb_p = jnp.pad(eps_b, (0, Np - N)).reshape(1, Np)

    grid = (Np // tn, Kp // tk)   # (out_features tiles, reduction tiles last)

    w_spec = pl.BlockSpec((tk, tn), lambda i, k: (k, i))
    b_spec = pl.BlockSpec((1, tn), lambda i, k: (0, i))

    # Rough per-tile working set (double-buffered inputs/outputs + scratch),
    # kept well under v7x's 32 MiB scoped / 64 MiB physical VMEM.
    vmem_limit = 32 * 1024 * 1024

    out_padded = pl.pallas_call(
        _bayesian_linear_kernel,
        out_shape=jax.ShapeDtypeStruct((Bp, Np), x.dtype),
        grid_spec=pltpu.PrefetchScalarGridSpec(
            num_scalar_prefetch=0,
            grid=grid,
            in_specs=[
                pl.BlockSpec((Bp, tk), lambda i, k: (0, k)),   # x
                w_spec,                                        # weight_mu.T
                w_spec,                                        # weight_rho.T
                w_spec,                                        # eps_w.T
                w_spec,                                        # cgamma.T
                b_spec,                                        # bias_mu
                b_spec,                                        # bias_rho
                b_spec,                                        # eps_b
            ],
            out_specs=pl.BlockSpec((Bp, tn), lambda i, k: (0, i)),
            scratch_shapes=[pltpu.VMEM((Bp, tn), jnp.float32)],
        ),
        compiler_params=pltpu.CompilerParams(
            dimension_semantics=("parallel", "arbitrary"),
            vmem_limit_bytes=vmem_limit,
        ),
    )(xp, wmu_p, wrho_p, epsw_p, cg_p, bmu_p, brho_p, epsb_p)

    return out_padded[:B, :N]


if __name__ == "__main__":
    # Small-but-tiled shapes: 2 N-tiles x 2 K-tiles with tn=256, tk=512.
    B, in_features, out_features = 8, 1024, 384
    key = jax.random.PRNGKey(0)
    ks = jax.random.split(key, 8)

    # Deterministic parameter init mirroring the module's __init__.
    weight_mu = jax.random.uniform(ks[0], (out_features, in_features),
                                   minval=-0.01, maxval=0.01,
                                   dtype=jnp.float32)
    weight_rho = -9.0 + 0.1 * jax.random.normal(
        ks[1], (out_features, in_features), dtype=jnp.float32)
    bias_mu = jax.random.uniform(ks[2], (out_features,),
                                 minval=-0.2, maxval=0.2, dtype=jnp.float32)
    bias_rho = -9.0 + 1.0 * jax.random.normal(ks[3], (out_features,),
                                              dtype=jnp.float32)
    # cgamma (relaxed-Bernoulli inclusion sample), near 1.
    cgamma = jax.random.uniform(ks[4], (out_features, in_features),
                                minval=0.99, maxval=1.0, dtype=jnp.float32)
    # Reparameterization noise (epsilon ~ N(0, 1)), fixed for determinism.
    eps_w = jax.random.normal(ks[5], (out_features, in_features),
                              dtype=jnp.float32)
    eps_b = jax.random.normal(ks[6], (out_features,), dtype=jnp.float32)
    # Input batch.
    x = jax.random.normal(ks[7], (B, in_features), dtype=jnp.float32)

    out = bayesian_linear_forward(x, weight_mu, weight_rho, eps_w, cgamma,
                                  bias_mu, bias_rho, eps_b)
    out = jax.block_until_ready(out)

    # Pure-JAX reference check of the F.linear semantics.
    sigma_w = jnp.log1p(jnp.exp(weight_rho))
    w_ref = cgamma * (weight_mu + sigma_w * eps_w)
    sigma_b = jnp.log1p(jnp.exp(bias_rho))
    b_ref = bias_mu + sigma_b * eps_b
    ref = x @ w_ref.T + b_ref
    np.testing.assert_allclose(np.asarray(out), np.asarray(ref),
                               rtol=1e-5, atol=1e-4)

    print("KERNEL_OK")
</pallas_src>

<mosaic_0001>
module attributes {stable_mosaic.version = 11 : i64} {
  func.func @_bayesian_linear_kernel(%arg0: i32, %arg1: i32, %arg2: memref<8x512xf32, #tpu.memory_space<vmem>>, %arg3: memref<512x256xf32, #tpu.memory_space<vmem>>, %arg4: memref<512x256xf32, #tpu.memory_space<vmem>>, %arg5: memref<512x256xf32, #tpu.memory_space<vmem>>, %arg6: memref<512x256xf32, #tpu.memory_space<vmem>>, %arg7: memref<1x256xf32, #tpu.memory_space<vmem>>, %arg8: memref<1x256xf32, #tpu.memory_space<vmem>>, %arg9: memref<1x256xf32, #tpu.memory_space<vmem>>, %arg10: memref<8x256xf32, #tpu.memory_space<vmem>>, %arg11: memref<8x256xf32, #tpu.memory_space<vmem>>) attributes {dimension_semantics = [#tpu.dimension_semantics<parallel>, #tpu.dimension_semantics<arbitrary>], iteration_bounds = array<i64: 2, 2>, scalar_prefetch = 0 : i64, scratch_operands = 1 : i64, tpu.core_type = #tpu.core_type<tc>, window_params = [{transform_indices = @transform_0, window_bounds = array<i64: 8, 512>}, {transform_indices = @transform_1, window_bounds = array<i64: 512, 256>}, {transform_indices = @transform_2, window_bounds = array<i64: 512, 256>}, {transform_indices = @transform_3, window_bounds = array<i64: 512, 256>}, {transform_indices = @transform_4, window_bounds = array<i64: 512, 256>}, {transform_indices = @transform_5, window_bounds = array<i64: 1, 256>}, {transform_indices = @transform_6, window_bounds = array<i64: 1, 256>}, {transform_indices = @transform_7, window_bounds = array<i64: 1, 256>}, {transform_indices = @transform_8, window_bounds = array<i64: 8, 256>}]} {
    %c0_i32 = arith.constant 0 : i32
    %0 = arith.cmpi eq, %arg1, %c0_i32 : i32
    %1 = arith.extui %0 : i1 to i32
    %c0_i32_0 = arith.constant 0 : i32
    %2 = arith.cmpi ne, %1, %c0_i32_0 : i32
    scf.if %2 {
      %cst_17 = arith.constant 0.000000e+00 : f32
      %25 = vector.broadcast %cst_17 : f32 to vector<8x256xf32>
      %c0_18 = arith.constant 0 : index
      %c0_19 = arith.constant 0 : index
      %26 = vector.load %arg11[%c0_18, %c0_19] : memref<8x256xf32, #tpu.memory_space<vmem>>, vector<8x256xf32>
      tpu.vector_store %arg11[%c0_18, %c0_19], %25 {strides = array<i32>} : memref<8x256xf32, #tpu.memory_space<vmem>>, vector<8x256xf32>,
    } else {
    }
    %c0 = arith.constant 0 : index
    %c0_1 = arith.constant 0 : index
    %3 = vector.load %arg4[%c0, %c0_1] : memref<512x256xf32, #tpu.memory_space<vmem>>, vector<512x256xf32>
    %cst = arith.constant 2.000000e+01 : f32
    %4 = vector.broadcast %cst : f32 to vector<512x256xf32>
    %5 = arith.cmpf ogt, %3, %4 : vector<512x256xf32>
    %cst_2 = arith.constant 2.000000e+01 : f32
    %6 = vector.broadcast %cst_2 : f32 to vector<512x256xf32>
    %7 = arith.minimumf %3, %6 : vector<512x256xf32>
    %8 = math.exp %7 : vector<512x256xf32>
    %9 = math.log1p %8 : vector<512x256xf32>
    %10 = arith.select %5, %3, %9 : vector<512x256xi1>, vector<512x256xf32>
    %c0_3 = arith.constant 0 : index
    %c0_4 = arith.constant 0 : index
    %11 = vector.load %arg6[%c0_3, %c0_4] : memref<512x256xf32, #tpu.memory_space<vmem>>, vector<512x256xf32>
    %c0_5 = arith.constant 0 : index
    %c0_6 = arith.constant 0 : index
    %12 = vector.load %arg3[%c0_5, %c0_6] : memref<512x256xf32, #tpu.memory_space<vmem>>, vector<512x256xf32>
    %c0_7 = arith.constant 0 : index
    %c0_8 = arith.constant 0 : index
    %13 = vector.load %arg5[%c0_7, %c0_8] : memref<512x256xf32, #tpu.memory_space<vmem>>, vector<512x256xf32>
    %14 = arith.mulf %10, %13 : vector<512x256xf32>
    %15 = arith.addf %12, %14 : vector<512x256xf32>
    %16 = arith.mulf %11, %15 : vector<512x256xf32>
    %c0_9 = arith.constant 0 : index
    %c0_10 = arith.constant 0 : index
    %17 = vector.load %arg11[%c0_9, %c0_10] : memref<8x256xf32, #tpu.memory_space<vmem>>, vector<8x256xf32>
    %c0_11 = arith.constant 0 : index
    %c0_12 = arith.constant 0 : index
    %18 = vector.load %arg2[%c0_11, %c0_12] : memref<8x512xf32, #tpu.memory_space<vmem>>, vector<8x512xf32>
    %cst_13 = arith.constant dense<0.000000e+00> : vector<8x256xf32>
    %19 = tpu.matmul %18, %16, %cst_13 {dimension_numbers = #tpu.dot_dimension_numbers<[1], [0], [0], [1], [0, 0, 1, 1], [], []>} : vector<8x512xf32>, vector<512x256xf32>, vector<8x256xf32> -> vector<8x256xf32>
    %20 = arith.addf %17, %19 : vector<8x256xf32>
    %c0_14 = arith.constant 0 : index
    %c0_15 = arith.constant 0 : index
    %21 = vector.load %arg11[%c0_14, %c0_15] : memref<8x256xf32, #tpu.memory_space<vmem>>, vector<8x256xf32>
    tpu.vector_store %arg11[%c0_14, %c0_15], %20 {strides = array<i32>} : memref<8x256xf32, #tpu.memory_space<vmem>>, vector<8x256xf32>,
    %c1_i32 = arith.constant 1 : i32
    %22 = arith.cmpi eq, %arg1, %c1_i32 : i32
    %23 = arith.extui %22 : i1 to i32
    %c0_i32_16 = arith.constant 0 : i32
    %24 = arith.cmpi ne, %23, %c0_i32_16 : i32
    scf.if %24 {
      %c0_17 = arith.constant 0 : index
      %c0_18 = arith.constant 0 : index
      %25 = vector.load %arg8[%c0_17, %c0_18] : memref<1x256xf32, #tpu.memory_space<vmem>>, vector<1x256xf32>
      %cst_19 = arith.constant 2.000000e+01 : f32
      %26 = vector.broadcast %cst_19 : f32 to vector<1x256xf32>
      %27 = arith.cmpf ogt, %25, %26 : vector<1x256xf32>
      %cst_20 = arith.constant 2.000000e+01 : f32
      %28 = vector.broadcast %cst_20 : f32 to vector<1x256xf32>
      %29 = arith.minimumf %25, %28 : vector<1x256xf32>
      %30 = math.exp %29 : vector<1x256xf32>
      %31 = math.log1p %30 : vector<1x256xf32>
      %32 = arith.select %27, %25, %31 : vector<1x256xi1>, vector<1x256xf32>
      %c0_21 = arith.constant 0 : index
      %c0_22 = arith.constant 0 : index
      %33 = vector.load %arg7[%c0_21, %c0_22] : memref<1x256xf32, #tpu.memory_space<vmem>>, vector<1x256xf32>
      %c0_23 = arith.constant 0 : index
      %c0_24 = arith.constant 0 : index
      %34 = vector.load %arg9[%c0_23, %c0_24] : memref<1x256xf32, #tpu.memory_space<vmem>>, vector<1x256xf32>
      %35 = arith.mulf %32, %34 : vector<1x256xf32>
      %36 = arith.addf %33, %35 : vector<1x256xf32>
      %c0_25 = arith.constant 0 : index
      %c0_26 = arith.constant 0 : index
      %37 = vector.load %arg11[%c0_25, %c0_26] : memref<8x256xf32, #tpu.memory_space<vmem>>, vector<8x256xf32>
      %38 = vector.broadcast %36 : vector<1x256xf32> to vector<8x256xf32>
      %39 = arith.addf %37, %38 : vector<8x256xf32>
      %c0_27 = arith.constant 0 : index
      %c0_28 = arith.constant 0 : index
      %40 = vector.load %arg10[%c0_27, %c0_28] : memref<8x256xf32, #tpu.memory_space<vmem>>, vector<8x256xf32>
      tpu.vector_store %arg10[%c0_27, %c0_28], %39 {strides = array<i32>} : memref<8x256xf32, #tpu.memory_space<vmem>>, vector<8x256xf32>,
    } else {
    }
    return
  }
  func.func @transform_0(%arg0: i32, %arg1: i32) -> (i32, i32) {
    %c0_i32 = arith.constant 0 : i32
    %c0_i32_0 = arith.constant 0 : i32
    return %c0_i32, %arg1 : i32, i32
  }
  func.func @transform_1(%arg0: i32, %arg1: i32) -> (i32, i32) {
    %c0_i32 = arith.constant 0 : i32
    return %arg1, %arg0 : i32, i32
  }
  func.func @transform_2(%arg0: i32, %arg1: i32) -> (i32, i32) {
    %c0_i32 = arith.constant 0 : i32
    return %arg1, %arg0 : i32, i32
  }
  func.func @transform_3(%arg0: i32, %arg1: i32) -> (i32, i32) {
    %c0_i32 = arith.constant 0 : i32
    return %arg1, %arg0 : i32, i32
  }
  func.func @transform_4(%arg0: i32, %arg1: i32) -> (i32, i32) {
    %c0_i32 = arith.constant 0 : i32
    return %arg1, %arg0 : i32, i32
  }
  func.func @transform_5(%arg0: i32, %arg1: i32) -> (i32, i32) {
    %c0_i32 = arith.constant 0 : i32
    %c0_i32_0 = arith.constant 0 : i32
    return %c0_i32, %arg0 : i32, i32
  }
  func.func @transform_6(%arg0: i32, %arg1: i32) -> (i32, i32) {
    %c0_i32 = arith.constant 0 : i32
    %c0_i32_0 = arith.constant 0 : i32
    return %c0_i32, %arg0 : i32, i32
  }
  func.func @transform_7(%arg0: i32, %arg1: i32) -> (i32, i32) {
    %c0_i32 = arith.constant 0 : i32
    %c0_i32_0 = arith.constant 0 : i32
    return %c0_i32, %arg0 : i32, i32
  }
  func.func @transform_8(%arg0: i32, %arg1: i32) -> (i32, i32) {
    %c0_i32 = arith.constant 0 : i32
    %c0_i32_0 = arith.constant 0 : i32
    return %c0_i32, %arg0 : i32, i32
  }
}

</mosaic_0001>

<llo_original>
// kernel: bayesian_linear_forward.1
$region0: #{bayesian_linear_forward.1}
  #allocation0 [shape = 'u32[]', space=smem, size = 0x4, offset = 0x4, fixed_abs, tag = 'smem constant byte address 0x4 - core index']
  #allocation1 [shape = 'u32[144,128]{1,0:T(1,128)}', space=vmem, size = 0x12000, scoped, tag = 'internal scratch']
  #allocation2 [shape = 'f32[8,256]{1,0:T(8,128)}', space=vmem, size = 0x2000, scoped, tag = 'scratch operand']
  %s0 = inlined_call_operand.vmem [shape: f32[8,1024], index: 0, kind: input, shape index: {}]
  %s1 = inlined_call_operand.vmem [shape: f32[1024,512], index: 1, kind: input, shape index: {}]
  %s2 = inlined_call_operand.vmem [shape: f32[1024,512], index: 2, kind: input, shape index: {}]
  %s3 = inlined_call_operand.vmem [shape: f32[1024,512], index: 3, kind: input, shape index: {}]
  %s4 = inlined_call_operand.vmem [shape: f32[1024,512], index: 4, kind: input, shape index: {}]
  %s5 = inlined_call_operand.vmem [shape: f32[1,512], index: 5, kind: input, shape index: {}]
  %s6 = inlined_call_operand.vmem [shape: f32[1,512], index: 6, kind: input, shape index: {}]
  %s7 = inlined_call_operand.vmem [shape: f32[1,512], index: 7, kind: input, shape index: {}]
  %s8 = inlined_call_operand.vmem [shape: f32[8,512], index: 8, kind: output, shape index: {}]
  %s9 = sld [smem:[#allocation0]]
  $region165: #{bayesian_linear_forward.1} parent=0
    _
  %s11 = ssub.s32 1, %s9
  %s12 = scalar_select 0, %s11, %s9
  $region1: #{bayesian_linear_forward.1} parent=0
    #allocation3 [shape = 'u8[1048576]{0}', space=vmem, size = 0x100000, scoped, tag = 'input window, operand 1']
    #allocation4 [shape = 'u8[1048576]{0}', space=vmem, size = 0x100000, scoped, tag = 'input window, operand 2']
    #allocation5 [shape = 'u8[1048576]{0}', space=vmem, size = 0x100000, scoped, tag = 'input window, operand 3']
    #allocation6 [shape = 'u8[1048576]{0}', space=vmem, size = 0x100000, scoped, tag = 'input window, operand 4']
    loop: start=0, step=1, limit=6
    $region2: #{bayesian_linear_forward.1} parent=1 // loop_pre_header
      _
    $region3: #{bayesian_linear_forward.1} parent=1 // loop_header
      %s14 = sphi 0, %s18
      %p15 = scmp.ge.s32.totalorder %s14, 6
      %s21 = sphi 0, %s33
      %s22 = sphi 0, %s29
      %s23 = sphi 0, %s21
      %s24 = sphi 0, %s22
      %s25 = sphi 0, %s23
      %s26 = sphi 0, %s24
      %s36 = sphi 0, %s38
      %s39 = sphi 0, %s36
      %s40 = sphi 0, %s39
      %s56 = sphi 0, %s40
      %s64 = sphi 0, %s66
      %s67 = sphi 0, %s64
      %s68 = sphi 0, %s67
      %s84 = sphi 0, %s68
      %s92 = sphi 0, %s94
      %s95 = sphi 0, %s92
      %s96 = sphi 0, %s95
      %s112 = sphi 0, %s96
      %s120 = sphi 0, %s122
      %s123 = sphi 0, %s120
      %s124 = sphi 0, %s123
      %s140 = sphi 0, %s124
      %s148 = sphi 0, %s150
      %s151 = sphi 0, %s148
      %s152 = sphi 0, %s151
      %s168 = sphi 0, %s152
      %s174 = sphi 0, %s176
      %s177 = sphi 0, %s174
      %s178 = sphi 0, %s177
      %s194 = sphi 0, %s178
      %s200 = sphi 0, %s202
      %s203 = sphi 0, %s200
      %s204 = sphi 0, %s203
      %s220 = sphi 0, %s204
      %s226 = sphi 0, %s228
      %s229 = sphi 0, %s226
      %s230 = sphi 0, %s229
      %s246 = sphi 0, %s230
      %s252 = sphi 0, %s254
      %s255 = sphi 0, %s252
      %s256 = sphi 0, %s255
      %s272 = sphi 0, %s256
    $region4: #{bayesian_linear_forward.1} parent=1 // loop_header_branch
      %17 = sbr.rel (%p15) target = $region8
    $region5: #{bayesian_linear_forward.1} parent=1 // loop_body
      %s19 = ssub.s32 %s14, 1
      %s20 = ssub.s32 %s14, 2
      %s27 = sadd.s32 1, %s22
      %p28 = scmp.ge.s32.totalorder %s27, 2
      %s29 = scalar_select %p28, 0, %s27
      %s30 = sadd.s32 1, %s21
      %s31 = scalar_select %p28, %s30, %s21
      %p32 = scmp.ge.s32.totalorder %s31, 2
      %s33 = scalar_select %p32, 0, %s31
      %s34 = ssub.s32 %s22, %s29
      %p35 = scmp.eq.s32.totalorder %s34, 0
      %s37 = sadd.s32 %s36, 1
      %s38 = scalar_select %p35, %s36, %s37
      %p41 = pneg %p35
      %p42 = scmp.eq.s32.totalorder %s14, 3
      %p43 = por %p41, %p42
      %p44 = scmp.ne.s32.totalorder %s36, %s39
      %p45 = scmp.eq.s32.totalorder %s14, 0
      %p46 = por %p44, %p45
      %p47 = scmp.ne.s32.totalorder %s36, %s39
      %p48 = scmp.eq.s32.totalorder %s19, 3
      %p49 = por %p47, %p48
      %p50 = scmp.ne.s32.totalorder %s39, %s40
      %p51 = scmp.eq.s32.totalorder %s19, 0
      %p52 = por %p50, %p51
      %p53 = scmp.ne.s32.totalorder %s39, %s40
      %p54 = scmp.eq.s32.totalorder %s20, 3
      %p55 = por %p53, %p54
      %p57 = scmp.ne.s32.totalorder %s40, %s56
      %p58 = scmp.eq.s32.totalorder %s20, 0
      %p59 = por %p57, %p58
      %s60 = ssub.s32 %s22, %s29
      %s61 = ssub.s32 %s21, %s33
      %s62 = sor.u32 %s60, %s61
      %p63 = scmp.eq.s32.totalorder %s62, 0
      %s65 = sadd.s32 %s64, 1
      %s66 = scalar_select %p63, %s64, %s65
      %p69 = pneg %p63
      %p70 = scmp.eq.s32.totalorder %s14, 3
      %p71 = por %p69, %p70
      %p72 = scmp.ne.s32.totalorder %s64, %s67
      %p73 = scmp.eq.s32.totalorder %s14, 0
      %p74 = por %p72, %p73
      %p75 = scmp.ne.s32.totalorder %s64, %s67
      %p76 = scmp.eq.s32.totalorder %s19, 3
      %p77 = por %p75, %p76
      %p78 = scmp.ne.s32.totalorder %s67, %s68
      %p79 = scmp.eq.s32.totalorder %s19, 0
      %p80 = por %p78, %p79
      %p81 = scmp.ne.s32.totalorder %s67, %s68
      %p82 = scmp.eq.s32.totalorder %s20, 3
      %p83 = por %p81, %p82
      %p85 = scmp.ne.s32.totalorder %s68, %s84
      %p86 = scmp.eq.s32.totalorder %s20, 0
      %p87 = por %p85, %p86
      %s88 = ssub.s32 %s22, %s29
      %s89 = ssub.s32 %s21, %s33
      %s90 = sor.u32 %s88, %s89
      %p91 = scmp.eq.s32.totalorder %s90, 0
      %s93 = sadd.s32 %s92, 1
      %s94 = scalar_select %p91, %s92, %s93
      %p97 = pneg %p91
      %p98 = scmp.eq.s32.totalorder %s14, 3
      %p99 = por %p97, %p98
      %p100 = scmp.ne.s32.totalorder %s92, %s95
      %p101 = scmp.eq.s32.totalorder %s14, 0
      %p102 = por %p100, %p101
      %p103 = scmp.ne.s32.totalorder %s92, %s95
      %p104 = scmp.eq.s32.totalorder %s19, 3
      %p105 = por %p103, %p104
      %p106 = scmp.ne.s32.totalorder %s95, %s96
      %p107 = scmp.eq.s32.totalorder %s19, 0
      %p108 = por %p106, %p107
      %p109 = scmp.ne.s32.totalorder %s95, %s96
      %p110 = scmp.eq.s32.totalorder %s20, 3
      %p111 = por %p109, %p110
      %p113 = scmp.ne.s32.totalorder %s96, %s112
      %p114 = scmp.eq.s32.totalorder %s20, 0
      %p115 = por %p113, %p114
      %s116 = ssub.s32 %s22, %s29
      %s117 = ssub.s32 %s21, %s33
      %s118 = sor.u32 %s116, %s117
      %p119 = scmp.eq.s32.totalorder %s118, 0
      %s121 = sadd.s32 %s120, 1
      %s122 = scalar_select %p119, %s120, %s121
      %p125 = pneg %p119
      %p126 = scmp.eq.s32.totalorder %s14, 3
      %p127 = por %p125, %p126
      %p128 = scmp.ne.s32.totalorder %s120, %s123
      %p129 = scmp.eq.s32.totalorder %s14, 0
      %p130 = por %p128, %p129
      %p131 = scmp.ne.s32.totalorder %s120, %s123
      %p132 = scmp.eq.s32.totalorder %s19, 3
      %p133 = por %p131, %p132
      %p134 = scmp.ne.s32.totalorder %s123, %s124
      %p135 = scmp.eq.s32.totalorder %s19, 0
      %p136 = por %p134, %p135
      %p137 = scmp.ne.s32.totalorder %s123, %s124
      %p138 = scmp.eq.s32.totalorder %s20, 3
      %p139 = por %p137, %p138
      %p141 = scmp.ne.s32.totalorder %s124, %s140
      %p142 = scmp.eq.s32.totalorder %s20, 0
      %p143 = por %p141, %p142
      %s144 = ssub.s32 %s22, %s29
      %s145 = ssub.s32 %s21, %s33
      %s146 = sor.u32 %s144, %s145
      %p147 = scmp.eq.s32.totalorder %s146, 0
      %s149 = sadd.s32 %s148, 1
      %s150 = scalar_select %p147, %s148, %s149
      %p153 = pneg %p147
      %p154 = scmp.eq.s32.totalorder %s14, 3
      %p155 = por %p153, %p154
      %p156 = scmp.ne.s32.totalorder %s148, %s151
      %p157 = scmp.eq.s32.totalorder %s14, 0
      %p158 = por %p156, %p157
      %p159 = scmp.ne.s32.totalorder %s148, %s151
      %p160 = scmp.eq.s32.totalorder %s19, 3
      %p161 = por %p159, %p160
      %p162 = scmp.ne.s32.totalorder %s151, %s152
      %p163 = scmp.eq.s32.totalorder %s19, 0
      %p164 = por %p162, %p163
      %p165 = scmp.ne.s32.totalorder %s151, %s152
      %p166 = scmp.eq.s32.totalorder %s20, 3
      %p167 = por %p165, %p166
      %p169 = scmp.ne.s32.totalorder %s152, %s168
      %p170 = scmp.eq.s32.totalorder %s20, 0
      %p171 = por %p169, %p170
      %s172 = ssub.s32 %s21, %s33
      %p173 = scmp.eq.s32.totalorder %s172, 0
      %s175 = sadd.s32 %s174, 1
      %s176 = scalar_select %p173, %s174, %s175
      %p179 = pneg %p173
      %p180 = scmp.eq.s32.totalorder %s14, 3
      %p181 = por %p179, %p180
      %p182 = scmp.ne.s32.totalorder %s174, %s177
      %p183 = scmp.eq.s32.totalorder %s14, 0
      %p184 = por %p182, %p183
      %p185 = scmp.ne.s32.totalorder %s174, %s177
      %p186 = scmp.eq.s32.totalorder %s19, 3
      %p187 = por %p185, %p186
      %p188 = scmp.ne.s32.totalorder %s177, %s178
      %p189 = scmp.eq.s32.totalorder %s19, 0
      %p190 = por %p188, %p189
      %p191 = scmp.ne.s32.totalorder %s177, %s178
      %p192 = scmp.eq.s32.totalorder %s20, 3
      %p193 = por %p191, %p192
      %p195 = scmp.ne.s32.totalorder %s178, %s194
      %p196 = scmp.eq.s32.totalorder %s20, 0
      %p197 = por %p195, %p196
      %s198 = ssub.s32 %s21, %s33
      %p199 = scmp.eq.s32.totalorder %s198, 0
      %s201 = sadd.s32 %s200, 1
      %s202 = scalar_select %p199, %s200, %s201
      %p205 = pneg %p199
      %p206 = scmp.eq.s32.totalorder %s14, 3
      %p207 = por %p205, %p206
      %p208 = scmp.ne.s32.totalorder %s200, %s203
      %p209 = scmp.eq.s32.totalorder %s14, 0
      %p210 = por %p208, %p209
      %p211 = scmp.ne.s32.totalorder %s200, %s203
      %p212 = scmp.eq.s32.totalorder %s19, 3
      %p213 = por %p211, %p212
      %p214 = scmp.ne.s32.totalorder %s203, %s204
      %p215 = scmp.eq.s32.totalorder %s19, 0
      %p216 = por %p214, %p215
      %p217 = scmp.ne.s32.totalorder %s203, %s204
      %p218 = scmp.eq.s32.totalorder %s20, 3
      %p219 = por %p217, %p218
      %p221 = scmp.ne.s32.totalorder %s204, %s220
      %p222 = scmp.eq.s32.totalorder %s20, 0
      %p223 = por %p221, %p222
      %s224 = ssub.s32 %s21, %s33
      %p225 = scmp.eq.s32.totalorder %s224, 0
      %s227 = sadd.s32 %s226, 1
      %s228 = scalar_select %p225, %s226, %s227
      %p231 = pneg %p225
      %p232 = scmp.eq.s32.totalorder %s14, 3
      %p233 = por %p231, %p232
      %p234 = scmp.ne.s32.totalorder %s226, %s229
      %p235 = scmp.eq.s32.totalorder %s14, 0
      %p236 = por %p234, %p235
      %p237 = scmp.ne.s32.totalorder %s226, %s229
      %p238 = scmp.eq.s32.totalorder %s19, 3
      %p239 = por %p237, %p238
      %p240 = scmp.ne.s32.totalorder %s229, %s230
      %p241 = scmp.eq.s32.totalorder %s19, 0
      %p242 = por %p240, %p241
      %p243 = scmp.ne.s32.totalorder %s229, %s230
      %p244 = scmp.eq.s32.totalorder %s20, 3
      %p245 = por %p243, %p244
      %p247 = scmp.ne.s32.totalorder %s230, %s246
      %p248 = scmp.eq.s32.totalorder %s20, 0
      %p249 = por %p247, %p248
      %s250 = ssub.s32 %s21, %s33
      %p251 = scmp.eq.s32.totalorder %s250, 0
      %s253 = sadd.s32 %s252, 1
      %s254 = scalar_select %p251, %s252, %s253
      %p257 = pneg %p251
      %p258 = scmp.eq.s32.totalorder %s14, 3
      %p259 = por %p257, %p258
      %p260 = scmp.ne.s32.totalorder %s252, %s255
      %p261 = scmp.eq.s32.totalorder %s14, 0
      %p262 = por %p260, %p261
      %p263 = scmp.ne.s32.totalorder %s252, %s255
      %p264 = scmp.eq.s32.totalorder %s19, 3
      %p265 = por %p263, %p264
      %p266 = scmp.ne.s32.totalorder %s255, %s256
      %p267 = scmp.eq.s32.totalorder %s19, 0
      %p268 = por %p266, %p267
      %p269 = scmp.ne.s32.totalorder %s255, %s256
      %p270 = scmp.eq.s32.totalorder %s20, 3
      %p271 = por %p269, %p270
      %p273 = scmp.ne.s32.totalorder %s256, %s272
      %p274 = scmp.eq.s32.totalorder %s20, 0
      %p275 = por %p273, %p274
      %p276 = scmp.le.s32.totalorder 1, %s14
      %p277 = scmp.lt.s32.totalorder %s14, 5
      %p278 = pnand %p276, %p277
      %p279 = pneg %p278
      // Predicated region
      $region9: #{bayesian_linear_forward.1} parent=5 // pred_check
        _
      $region10: #{bayesian_linear_forward.1} parent=5 // pred_check_branch
        %281 = sbr.rel (%p278) target = $region12
      $region11: #{bayesian_linear_forward.1} parent=5 // pred_region
        %s282 = ssub.s32 %s14, 1
      $region12: #{bayesian_linear_forward.1} parent=5 // pred_fallthru
        _
      %p283 = scmp.lt.s32.totalorder %s14, 4
      // Predicated region
      $region13: #{bayesian_linear_forward.1} parent=5 // pred_check
        %p284 = pneg %p283
      $region14: #{bayesian_linear_forward.1} parent=5 // pred_check_branch
        %286 = sbr.rel (%p284) target = $region16
      $region15: #{bayesian_linear_forward.1} parent=5 // pred_region
        // Predicated region
        $region17: #{bayesian_linear_forward.1} parent=15 // pred_check
          %p287 = pneg %p46
        $region18: #{bayesian_linear_forward.1} parent=15 // pred_check_branch
          %289 = sbr.rel (%p287) target = $region20
        $region19: #{bayesian_linear_forward.1} parent=15 // pred_region
          %s290 = smul.u32 4, %s22
          %p291 = scmp.lt.s32.totalorder %s290, 7
          %s292 = scalar_select %p291, %s290, 7
          %s293 = smul.addr %s292, 8
          %s294 = scalar_lea.vmem %s0, %s293
          %s295 = smul.u32 4, %s22
        $region20: #{bayesian_linear_forward.1} parent=15 // pred_fallthru
          _
        // Predicated region
        $region21: #{bayesian_linear_forward.1} parent=15 // pred_check
          %p296 = pneg %p74
        $region22: #{bayesian_linear_forward.1} parent=15 // pred_check_branch
          %298 = sbr.rel (%p296) target = $region24
        $region23: #{bayesian_linear_forward.1} parent=15 // pred_region
          %s299 = sand.u32 %s64, 1
          %s300 = sand.u32 %s64, 1
          %s301 = smul.addr %s300, 1024
          %s302 = scalar_lea.vmem [#allocation3], %s301
          %s303 = smul.u32 64, %s22
          %s304 = smul.u32 2, %s21
          %s305 = smul.addr %s303, 4
          %s306 = sadd.s32 %s304, %s305
          %s307 = smul.addr %s306, 8
          %s308 = scalar_lea.vmem %s1, %s307
          // Predicated region
          $region25: #{bayesian_linear_forward.1} parent=23 // pred_check
            _
          $region26: #{bayesian_linear_forward.1} parent=23 // pred_check_branch
            %310 = sbr.rel (0) target = $region28
          $region27: #{bayesian_linear_forward.1} parent=23 // pred_region
            // Predicated region
            $region29: #{bayesian_linear_forward.1} parent=27 // pred_check
              _
            $region30: #{bayesian_linear_forward.1} parent=27 // pred_check_branch
              %312 = sbr.rel (0) target = $region32
            $region31: #{bayesian_linear_forward.1} parent=27 // pred_region
              loop: start=0, step=1, limit=1
              $region33: #{bayesian_linear_forward.1} parent=31 // loop_pre_header
                _
              $region34: #{bayesian_linear_forward.1} parent=31 // loop_header
                %s314 = sphi 0, %s318
                %p315 = scmp.ge.s32.totalorder %s314, 1
                %s319 = sphi %s308, %s308
                %s320 = sphi %s302, %s302
              $region35: #{bayesian_linear_forward.1} parent=31 // loop_header_branch
                %317 = sbr.rel (%p315) target = $region39
              $region36: #{bayesian_linear_forward.1} parent=31 // loop_body
                %v321 = vld [vmem:[%s319] sm:$0xff]
                %322 = vst [vmem:[%s320] sm:$0xff] %v321
                %v323 = vld [vmem:[%s319 + $0x8] sm:$0xff]
                %324 = vst [vmem:[%s320 + $0x8] sm:$0xff] %v323
                %v325 = vld [vmem:[%s319 + $0x20] sm:$0xff]
                %326 = vst [vmem:[%s320 + $0x10] sm:$0xff] %v325
                %v327 = vld [vmem:[%s319 + $0x28] sm:$0xff]
                %328 = vst [vmem:[%s320 + $0x18] sm:$0xff] %v327
                %v329 = vld [vmem:[%s319 + $0x40] sm:$0xff]
                %330 = vst [vmem:[%s320 + $0x20] sm:$0xff] %v329
                %v331 = vld [vmem:[%s319 + $0x48] sm:$0xff]
                %332 = vst [vmem:[%s320 + $0x28] sm:$0xff] %v331
                %v333 = vld [vmem:[%s319 + $0x60] sm:$0xff]
                %334 = vst [vmem:[%s320 + $0x30] sm:$0xff] %v333
                %v335 = vld [vmem:[%s319 + $0x68] sm:$0xff]
                %336 = vst [vmem:[%s320 + $0x38] sm:$0xff] %v335
                %v337 = vld [vmem:[%s319 + $0x80] sm:$0xff]
                %338 = vst [vmem:[%s320 + $0x40] sm:$0xff] %v337
                %v339 = vld [vmem:[%s319 + $0x88] sm:$0xff]
                %340 = vst [vmem:[%s320 + $0x48] sm:$0xff] %v339
                %v341 = vld [vmem:[%s319 + $0xa0] sm:$0xff]
                %342 = vst [vmem:[%s320 + $0x50] sm:$0xff] %v341
                %v343 = vld [vmem:[%s319 + $0xa8] sm:$0xff]
                %344 = vst [vmem:[%s320 + $0x58] sm:$0xff] %v343
                %v345 = vld [vmem:[%s319 + $0xc0] sm:$0xff]
                %346 = vst [vmem:[%s320 + $0x60] sm:$0xff] %v345
                %v347 = vld [vmem:[%s319 + $0xc8] sm:$0xff]
                %348 = vst [vmem:[%s320 + $0x68] sm:$0xff] %v347
                %v349 = vld [vmem:[%s319 + $0xe0] sm:$0xff]
                %350 = vst [vmem:[%s320 + $0x70] sm:$0xff] %v349
                %v351 = vld [vmem:[%s319 + $0xe8] sm:$0xff]
                %352 = vst [vmem:[%s320 + $0x78] sm:$0xff] %v351
                %v353 = vld [vmem:[%s319 + $0x100] sm:$0xff]
                %354 = vst [vmem:[%s320 + $0x80] sm:$0xff] %v353
                %v355 = vld [vmem:[%s319 + $0x108] sm:$0xff]
                %356 = vst [vmem:[%s320 + $0x88] sm:$0xff] %v355
                %v357 = vld [vmem:[%s319 + $0x120] sm:$0xff]
                %358 = vst [vmem:[%s320 + $0x90] sm:$0xff] %v357
                %v359 = vld [vmem:[%s319 + $0x128] sm:$0xff]
                %360 = vst [vmem:[%s320 + $0x98] sm:$0xff] %v359
                %v361 = vld [vmem:[%s319 + $0x140] sm:$0xff]
                %362 = vst [vmem:[%s320 + $0xa0] sm:$0xff] %v361
                %v363 = vld [vmem:[%s319 + $0x148] sm:$0xff]
                %364 = vst [vmem:[%s320 + $0xa8] sm:$0xff] %v363
                %v365 = vld [vmem:[%s319 + $0x160] sm:$0xff]
                %366 = vst [vmem:[%s320 + $0xb0] sm:$0xff] %v365
                %v367 = vld [vmem:[%s319 + $0x168] sm:$0xff]
                %368 = vst [vmem:[%s320 + $0xb8] sm:$0xff] %v367
                %v369 = vld [vmem:[%s319 + $0x180] sm:$0xff]
                %370 = vst [vmem:[%s320 + $0xc0] sm:$0xff] %v369
                %v371 = vld [vmem:[%s319 + $0x188] sm:$0xff]
                %372 = vst [vmem:[%s320 + $0xc8] sm:$0xff] %v371
                %v373 = vld [vmem:[%s319 + $0x1a0] sm:$0xff]
                %374 = vst [vmem:[%s320 + $0xd0] sm:$0xff] %v373
                %v375 = vld [vmem:[%s319 + $0x1a8] sm:$0xff]
                %376 = vst [vmem:[%s320 + $0xd8] sm:$0xff] %v375
                %v377 = vld [vmem:[%s319 + $0x1c0] sm:$0xff]
                %378 = vst [vmem:[%s320 + $0xe0] sm:$0xff] %v377
                %v379 = vld [vmem:[%s319 + $0x1c8] sm:$0xff]
                %380 = vst [vmem:[%s320 + $0xe8] sm:$0xff] %v379
                %v381 = vld [vmem:[%s319 + $0x1e0] sm:$0xff]
                %382 = vst [vmem:[%s320 + $0xf0] sm:$0xff] %v381
                %v383 = vld [vmem:[%s319 + $0x1e8] sm:$0xff]
                %384 = vst [vmem:[%s320 + $0xf8] sm:$0xff] %v383
                %v385 = vld [vmem:[%s319 + $0x200] sm:$0xff]
                %386 = vst [vmem:[%s320 + $0x100] sm:$0xff] %v385
                %v387 = vld [vmem:[%s319 + $0x208] sm:$0xff]
                %388 = vst [vmem:[%s320 + $0x108] sm:$0xff] %v387
                %v389 = vld [vmem:[%s319 + $0x220] sm:$0xff]
                %390 = vst [vmem:[%s320 + $0x110] sm:$0xff] %v389
                %v391 = vld [vmem:[%s319 + $0x228] sm:$0xff]
                %392 = vst [vmem:[%s320 + $0x118] sm:$0xff] %v391
                %v393 = vld [vmem:[%s319 + $0x240] sm:$0xff]
                %394 = vst [vmem:[%s320 + $0x120] sm:$0xff] %v393
                %v395 = vld [vmem:[%s319 + $0x248] sm:$0xff]
                %396 = vst [vmem:[%s320 + $0x128] sm:$0xff] %v395
                %v397 = vld [vmem:[%s319 + $0x260] sm:$0xff]
                %398 = vst [vmem:[%s320 + $0x130] sm:$0xff] %v397
                %v399 = vld [vmem:[%s319 + $0x268] sm:$0xff]
                %400 = vst [vmem:[%s320 + $0x138] sm:$0xff] %v399
                %v401 = vld [vmem:[%s319 + $0x280] sm:$0xff]
                %402 = vst [vmem:[%s320 + $0x140] sm:$0xff] %v401
                %v403 = vld [vmem:[%s319 + $0x288] sm:$0xff]
                %404 = vst [vmem:[%s320 + $0x148] sm:$0xff] %v403
                %v405 = vld [vmem:[%s319 + $0x2a0] sm:$0xff]
                %406 = vst [vmem:[%s320 + $0x150] sm:$0xff] %v405
                %v407 = vld [vmem:[%s319 + $0x2a8] sm:$0xff]
                %408 = vst [vmem:[%s320 + $0x158] sm:$0xff] %v407
                %v409 = vld [vmem:[%s319 + $0x2c0] sm:$0xff]
                %410 = vst [vmem:[%s320 + $0x160] sm:$0xff] %v409
                %v411 = vld [vmem:[%s319 + $0x2c8] sm:$0xff]
                %412 = vst [vmem:[%s320 + $0x168] sm:$0xff] %v411
                %v413 = vld [vmem:[%s319 + $0x2e0] sm:$0xff]
                %414 = vst [vmem:[%s320 + $0x170] sm:$0xff] %v413
                %v415 = vld [vmem:[%s319 + $0x2e8] sm:$0xff]
                %416 = vst [vmem:[%s320 + $0x178] sm:$0xff] %v415
                %v417 = vld [vmem:[%s319 + $0x300] sm:$0xff]
                %418 = vst [vmem:[%s320 + $0x180] sm:$0xff] %v417
                %v419 = vld [vmem:[%s319 + $0x308] sm:$0xff]
                %420 = vst [vmem:[%s320 + $0x188] sm:$0xff] %v419
                %v421 = vld [vmem:[%s319 + $0x320] sm:$0xff]
                %422 = vst [vmem:[%s320 + $0x190] sm:$0xff] %v421
                %v423 = vld [vmem:[%s319 + $0x328] sm:$0xff]
                %424 = vst [vmem:[%s320 + $0x198] sm:$0xff] %v423
                %v425 = vld [vmem:[%s319 + $0x340] sm:$0xff]
                %426 = vst [vmem:[%s320 + $0x1a0] sm:$0xff] %v425
                %v427 = vld [vmem:[%s319 + $0x348] sm:$0xff]
                %428 = vst [vmem:[%s320 + $0x1a8] sm:$0xff] %v427
                %v429 = vld [vmem:[%s319 + $0x360] sm:$0xff]
                %430 = vst [vmem:[%s320 + $0x1b0] sm:$0xff] %v429
                %v431 = vld [vmem:[%s319 + $0x368] sm:$0xff]
                %432 = vst [vmem:[%s320 + $0x1b8] sm:$0xff] %v431
                %v433 = vld [vmem:[%s319 + $0x380] sm:$0xff]
                %434 = vst [vmem:[%s320 + $0x1c0] sm:$0xff] %v433
                %v435 = vld [vmem:[%s319 + $0x388] sm:$0xff]
                %436 = vst [vmem:[%s320 + $0x1c8] sm:$0xff] %v435
                %v437 = vld [vmem:[%s319 + $0x3a0] sm:$0xff]
                %438 = vst [vmem:[%s320 + $0x1d0] sm:$0xff] %v437
                %v439 = vld [vmem:[%s319 + $0x3a8] sm:$0xff]
                %440 = vst [vmem:[%s320 + $0x1d8] sm:$0xff] %v439
                %v441 = vld [vmem:[%s319 + $0x3c0] sm:$0xff]
                %442 = vst [vmem:[%s320 + $0x1e0] sm:$0xff] %v441
                %v443 = vld [vmem:[%s319 + $0x3c8] sm:$0xff]
                %444 = vst [vmem:[%s320 + $0x1e8] sm:$0xff] %v443
                %v445 = vld [vmem:[%s319 + $0x3e0] sm:$0xff]
                %446 = vst [vmem:[%s320 + $0x1f0] sm:$0xff] %v445
                %v447 = vld [vmem:[%s319 + $0x3e8] sm:$0xff]
                %448 = vst [vmem:[%s320 + $0x1f8] sm:$0xff] %v447
                %v449 = vld [vmem:[%s319 + $0x400] sm:$0xff]
                %450 = vst [vmem:[%s320 + $0x200] sm:$0xff] %v449
                %v451 = vld [vmem:[%s319 + $0x408] sm:$0xff]
                %452 = vst [vmem:[%s320 + $0x208] sm:$0xff] %v451
                %v453 = vld [vmem:[%s319 + $0x420] sm:$0xff]
                %454 = vst [vmem:[%s320 + $0x210] sm:$0xff] %v453
                %v455 = vld [vmem:[%s319 + $0x428] sm:$0xff]
                %456 = vst [vmem:[%s320 + $0x218] sm:$0xff] %v455
                %v457 = vld [vmem:[%s319 + $0x440] sm:$0xff]
                %458 = vst [vmem:[%s320 + $0x220] sm:$0xff] %v457
                %v459 = vld [vmem:[%s319 + $0x448] sm:$0xff]
                %460 = vst [vmem:[%s320 + $0x228] sm:$0xff] %v459
                %v461 = vld [vmem:[%s319 + $0x460] sm:$0xff]
                %462 = vst [vmem:[%s320 + $0x230] sm:$0xff] %v461
                %v463 = vld [vmem:[%s319 + $0x468] sm:$0xff]
                %464 = vst [vmem:[%s320 + $0x238] sm:$0xff] %v463
                %v465 = vld [vmem:[%s319 + $0x480] sm:$0xff]
                %466 = vst [vmem:[%s320 + $0x240] sm:$0xff] %v465
                %v467 = vld [vmem:[%s319 + $0x488] sm:$0xff]
                %468 = vst [vmem:[%s320 + $0x248] sm:$0xff] %v467
                %v469 = vld [vmem:[%s319 + $0x4a0] sm:$0xff]
                %470 = vst [vmem:[%s320 + $0x250] sm:$0xff] %v469
                %v471 = vld [vmem:[%s319 + $0x4a8] sm:$0xff]
                %472 = vst [vmem:[%s320 + $0x258] sm:$0xff] %v471
                %v473 = vld [vmem:[%s319 + $0x4c0] sm:$0xff]
                %474 = vst [vmem:[%s320 + $0x260] sm:$0xff] %v473
                %v475 = vld [vmem:[%s319 + $0x4c8] sm:$0xff]
                %476 = vst [vmem:[%s320 + $0x268] sm:$0xff] %v475
                %v477 = vld [vmem:[%s319 + $0x4e0] sm:$0xff]
                %478 = vst [vmem:[%s320 + $0x270] sm:$0xff] %v477
                %v479 = vld [vmem:[%s319 + $0x4e8] sm:$0xff]
                %480 = vst [vmem:[%s320 + $0x278] sm:$0xff] %v479
                %v481 = vld [vmem:[%s319 + $0x500] sm:$0xff]
                %482 = vst [vmem:[%s320 + $0x280] sm:$0xff] %v481
                %v483 = vld [vmem:[%s319 + $0x508] sm:$0xff]
                %484 = vst [vmem:[%s320 + $0x288] sm:$0xff] %v483
                %v485 = vld [vmem:[%s319 + $0x520] sm:$0xff]
                %486 = vst [vmem:[%s320 + $0x290] sm:$0xff] %v485
                %v487 = vld [vmem:[%s319 + $0x528] sm:$0xff]
                %488 = vst [vmem:[%s320 + $0x298] sm:$0xff] %v487
                %v489 = vld [vmem:[%s319 + $0x540] sm:$0xff]
                %490 = vst [vmem:[%s320 + $0x2a0] sm:$0xff] %v489
                %v491 = vld [vmem:[%s319 + $0x548] sm:$0xff]
                %492 = vst [vmem:[%s320 + $0x2a8] sm:$0xff] %v491
                %v493 = vld [vmem:[%s319 + $0x560] sm:$0xff]
                %494 = vst [vmem:[%s320 + $0x2b0] sm:$0xff] %v493
                %v495 = vld [vmem:[%s319 + $0x568] sm:$0xff]
                %496 = vst [vmem:[%s320 + $0x2b8] sm:$0xff] %v495
                %v497 = vld [vmem:[%s319 + $0x580] sm:$0xff]
                %498 = vst [vmem:[%s320 + $0x2c0] sm:$0xff] %v497
                %v499 = vld [vmem:[%s319 + $0x588] sm:$0xff]
                %500 = vst [vmem:[%s320 + $0x2c8] sm:$0xff] %v499
                %v501 = vld [vmem:[%s319 + $0x5a0] sm:$0xff]
                %502 = vst [vmem:[%s320 + $0x2d0] sm:$0xff] %v501
                %v503 = vld [vmem:[%s319 + $0x5a8] sm:$0xff]
                %504 = vst [vmem:[%s320 + $0x2d8] sm:$0xff] %v503
                %v505 = vld [vmem:[%s319 + $0x5c0] sm:$0xff]
                %506 = vst [vmem:[%s320 + $0x2e0] sm:$0xff] %v505
                %v507 = vld [vmem:[%s319 + $0x5c8] sm:$0xff]
                %508 = vst [vmem:[%s320 + $0x2e8] sm:$0xff] %v507
                %v509 = vld [vmem:[%s319 + $0x5e0] sm:$0xff]
                %510 = vst [vmem:[%s320 + $0x2f0] sm:$0xff] %v509
                %v511 = vld [vmem:[%s319 + $0x5e8] sm:$0xff]
                %512 = vst [vmem:[%s320 + $0x2f8] sm:$0xff] %v511
                %v513 = vld [vmem:[%s319 + $0x600] sm:$0xff]
                %514 = vst [vmem:[%s320 + $0x300] sm:$0xff] %v513
                %v515 = vld [vmem:[%s319 + $0x608] sm:$0xff]
                %516 = vst [vmem:[%s320 + $0x308] sm:$0xff] %v515
                %v517 = vld [vmem:[%s319 + $0x620] sm:$0xff]
                %518 = vst [vmem:[%s320 + $0x310] sm:$0xff] %v517
                %v519 = vld [vmem:[%s319 + $0x628] sm:$0xff]
                %520 = vst [vmem:[%s320 + $0x318] sm:$0xff] %v519
                %v521 = vld [vmem:[%s319 + $0x640] sm:$0xff]
                %522 = vst [vmem:[%s320 + $0x320] sm:$0xff] %v521
                %v523 = vld [vmem:[%s319 + $0x648] sm:$0xff]
                %524 = vst [vmem:[%s320 + $0x328] sm:$0xff] %v523
                %v525 = vld [vmem:[%s319 + $0x660] sm:$0xff]
                %526 = vst [vmem:[%s320 + $0x330] sm:$0xff] %v525
                %v527 = vld [vmem:[%s319 + $0x668] sm:$0xff]
                %528 = vst [vmem:[%s320 + $0x338] sm:$0xff] %v527
                %v529 = vld [vmem:[%s319 + $0x680] sm:$0xff]
                %530 = vst [vmem:[%s320 + $0x340] sm:$0xff] %v529
                %v531 = vld [vmem:[%s319 + $0x688] sm:$0xff]
                %532 = vst [vmem:[%s320 + $0x348] sm:$0xff] %v531
                %v533 = vld [vmem:[%s319 + $0x6a0] sm:$0xff]
                %534 = vst [vmem:[%s320 + $0x350] sm:$0xff] %v533
                %v535 = vld [vmem:[%s319 + $0x6a8] sm:$0xff]
                %536 = vst [vmem:[%s320 + $0x358] sm:$0xff] %v535
                %v537 = vld [vmem:[%s319 + $0x6c0] sm:$0xff]
                %538 = vst [vmem:[%s320 + $0x360] sm:$0xff] %v537
                %v539 = vld [vmem:[%s319 + $0x6c8] sm:$0xff]
                %540 = vst [vmem:[%s320 + $0x368] sm:$0xff] %v539
                %v541 = vld [vmem:[%s319 + $0x6e0] sm:$0xff]
                %542 = vst [vmem:[%s320 + $0x370] sm:$0xff] %v541
                %v543 = vld [vmem:[%s319 + $0x6e8] sm:$0xff]
                %544 = vst [vmem:[%s320 + $0x378] sm:$0xff] %v543
                %v545 = vld [vmem:[%s319 + $0x700] sm:$0xff]
                %546 = vst [vmem:[%s320 + $0x380] sm:$0xff] %v545
                %v547 = vld [vmem:[%s319 + $0x708] sm:$0xff]
                %548 = vst [vmem:[%s320 + $0x388] sm:$0xff] %v547
                %v549 = vld [vmem:[%s319 + $0x720] sm:$0xff]
                %550 = vst [vmem:[%s320 + $0x390] sm:$0xff] %v549
                %v551 = vld [vmem:[%s319 + $0x728] sm:$0xff]
                %552 = vst [vmem:[%s320 + $0x398] sm:$0xff] %v551
                %v553 = vld [vmem:[%s319 + $0x740] sm:$0xff]
                %554 = vst [vmem:[%s320 + $0x3a0] sm:$0xff] %v553
                %v555 = vld [vmem:[%s319 + $0x748] sm:$0xff]
                %556 = vst [vmem:[%s320 + $0x3a8] sm:$0xff] %v555
                %v557 = vld [vmem:[%s319 + $0x760] sm:$0xff]
                %558 = vst [vmem:[%s320 + $0x3b0] sm:$0xff] %v557
                %v559 = vld [vmem:[%s319 + $0x768] sm:$0xff]
                %560 = vst [vmem:[%s320 + $0x3b8] sm:$0xff] %v559
                %v561 = vld [vmem:[%s319 + $0x780] sm:$0xff]
                %562 = vst [vmem:[%s320 + $0x3c0] sm:$0xff] %v561
                %v563 = vld [vmem:[%s319 + $0x788] sm:$0xff]
                %564 = vst [vmem:[%s320 + $0x3c8] sm:$0xff] %v563
                %v565 = vld [vmem:[%s319 + $0x7a0] sm:$0xff]
                %566 = vst [vmem:[%s320 + $0x3d0] sm:$0xff] %v565
                %v567 = vld [vmem:[%s319 + $0x7a8] sm:$0xff]
                %568 = vst [vmem:[%s320 + $0x3d8] sm:$0xff] %v567
                %v569 = vld [vmem:[%s319 + $0x7c0] sm:$0xff]
                %570 = vst [vmem:[%s320 + $0x3e0] sm:$0xff] %v569
                %v571 = vld [vmem:[%s319 + $0x7c8] sm:$0xff]
                %572 = vst [vmem:[%s320 + $0x3e8] sm:$0xff] %v571
                %v573 = vld [vmem:[%s319 + $0x7e0] sm:$0xff]
                %574 = vst [vmem:[%s320 + $0x3f0] sm:$0xff] %v573
                %v575 = vld [vmem:[%s319 + $0x7e8] sm:$0xff]
                %576 = vst [vmem:[%s320 + $0x3f8] sm:$0xff] %v575
              $region37: #{bayesian_linear_forward.1} parent=31 // loop_footer
                %s318 = sadd.s32 1, %s314
              $region38: #{bayesian_linear_forward.1} parent=31 // loop_footer_branch
                %313 = sbr.rel target = $region34
              $region39: #{bayesian_linear_forward.1} parent=31 // loop_exit
                _
            $region32: #{bayesian_linear_forward.1} parent=27 // pred_fallthru
              _
            // Predicated region
            $region40: #{bayesian_linear_forward.1} parent=27 // pred_check
              _
            $region41: #{bayesian_linear_forward.1} parent=27 // pred_check_branch
              %578 = sbr.rel target = $region43
            $region42: #{bayesian_linear_forward.1} parent=27 // pred_region
              _
            $region43: #{bayesian_linear_forward.1} parent=27 // pred_fallthru
              _
          $region28: #{bayesian_linear_forward.1} parent=23 // pred_fallthru
            _
          %579 = vnop
        $region24: #{bayesian_linear_forward.1} parent=15 // pred_fallthru
          _
        // Predicated region
        $region44: #{bayesian_linear_forward.1} parent=15 // pred_check
          %p580 = pneg %p102
        $region45: #{bayesian_linear_forward.1} parent=15 // pred_check_branch
          %582 = sbr.rel (%p580) target = $region47
        $region46: #{bayesian_linear_forward.1} parent=15 // pred_region
          %s583 = sand.u32 %s92, 1
          %s584 = sand.u32 %s92, 1
          %s585 = smul.addr %s584, 1024
          %s586 = scalar_lea.vmem [#allocation4], %s585
          %s587 = smul.u32 64, %s22
          %s588 = smul.u32 2, %s21
          %s589 = smul.addr %s587, 4
          %s590 = sadd.s32 %s588, %s589
          %s591 = smul.addr %s590, 8
          %s592 = scalar_lea.vmem %s2, %s591
          // Predicated region
          $region48: #{bayesian_linear_forward.1} parent=46 // pred_check
            _
          $region49: #{bayesian_linear_forward.1} parent=46 // pred_check_branch
            %594 = sbr.rel (0) target = $region51
          $region50: #{bayesian_linear_forward.1} parent=46 // pred_region
            // Predicated region
            $region52: #{bayesian_linear_forward.1} parent=50 // pred_check
              _
            $region53: #{bayesian_linear_forward.1} parent=50 // pred_check_branch
              %596 = sbr.rel (0) target = $region55
            $region54: #{bayesian_linear_forward.1} parent=50 // pred_region
              loop: start=0, step=1, limit=1
              $region56: #{bayesian_linear_forward.1} parent=54 // loop_pre_header
                _
              $region57: #{bayesian_linear_forward.1} parent=54 // loop_header
                %s598 = sphi 0, %s602
                %p599 = scmp.ge.s32.totalorder %s598, 1
                %s603 = sphi %s592, %s592
                %s604 = sphi %s586, %s586
              $region58: #{bayesian_linear_forward.1} parent=54 // loop_header_branch
                %601 = sbr.rel (%p599) target = $region62
              $region59: #{bayesian_linear_forward.1} parent=54 // loop_body
                %v605 = vld [vmem:[%s603] sm:$0xff]
                %606 = vst [vmem:[%s604] sm:$0xff] %v605
                %v607 = vld [vmem:[%s603 + $0x8] sm:$0xff]
                %608 = vst [vmem:[%s604 + $0x8] sm:$0xff] %v607
                %v609 = vld [vmem:[%s603 + $0x20] sm:$0xff]
                %610 = vst [vmem:[%s604 + $0x10] sm:$0xff] %v609
                %v611 = vld [vmem:[%s603 + $0x28] sm:$0xff]
                %612 = vst [vmem:[%s604 + $0x18] sm:$0xff] %v611
                %v613 = vld [vmem:[%s603 + $0x40] sm:$0xff]
                %614 = vst [vmem:[%s604 + $0x20] sm:$0xff] %v613
                %v615 = vld [vmem:[%s603 + $0x48] sm:$0xff]
                %616 = vst [vmem:[%s604 + $0x28] sm:$0xff] %v615
                %v617 = vld [vmem:[%s603 + $0x60] sm:$0xff]
                %618 = vst [vmem:[%s604 + $0x30] sm:$0xff] %v617
                %v619 = vld [vmem:[%s603 + $0x68] sm:$0xff]
                %620 = vst [vmem:[%s604 + $0x38] sm:$0xff] %v619
                %v621 = vld [vmem:[%s603 + $0x80] sm:$0xff]
                %622 = vst [vmem:[%s604 + $0x40] sm:$0xff] %v621
                %v623 = vld [vmem:[%s603 + $0x88] sm:$0xff]
                %624 = vst [vmem:[%s604 + $0x48] sm:$0xff] %v623
                %v625 = vld [vmem:[%s603 + $0xa0] sm:$0xff]
                %626 = vst [vmem:[%s604 + $0x50] sm:$0xff] %v625
                %v627 = vld [vmem:[%s603 + $0xa8] sm:$0xff]
                %628 = vst [vmem:[%s604 + $0x58] sm:$0xff] %v627
                %v629 = vld [vmem:[%s603 + $0xc0] sm:$0xff]
                %630 = vst [vmem:[%s604 + $0x60] sm:$0xff] %v629
                %v631 = vld [vmem:[%s603 + $0xc8] sm:$0xff]
                %632 = vst [vmem:[%s604 + $0x68] sm:$0xff] %v631
                %v633 = vld [vmem:[%s603 + $0xe0] sm:$0xff]
                %634 = vst [vmem:[%s604 + $0x70] sm:$0xff] %v633
                %v635 = vld [vmem:[%s603 + $0xe8] sm:$0xff]
                %636 = vst [vmem:[%s604 + $0x78] sm:$0xff] %v635
                %v637 = vld [vmem:[%s603 + $0x100] sm:$0xff]
                %638 = vst [vmem:[%s604 + $0x80] sm:$0xff] %v637
                %v639 = vld [vmem:[%s603 + $0x108] sm:$0xff]
                %640 = vst [vmem:[%s604 + $0x88] sm:$0xff] %v639
                %v641 = vld [vmem:[%s603 + $0x120] sm:$0xff]
                %642 = vst [vmem:[%s604 + $0x90] sm:$0xff] %v641
                %v643 = vld [vmem:[%s603 + $0x128] sm:$0xff]
                %644 = vst [vmem:[%s604 + $0x98] sm:$0xff] %v643
                %v645 = vld [vmem:[%s603 + $0x140] sm:$0xff]
                %646 = vst [vmem:[%s604 + $0xa0] sm:$0xff] %v645
                %v647 = vld [vmem:[%s603 + $0x148] sm:$0xff]
                %648 = vst [vmem:[%s604 + $0xa8] sm:$0xff] %v647
                %v649 = vld [vmem:[%s603 + $0x160] sm:$0xff]
                %650 = vst [vmem:[%s604 + $0xb0] sm:$0xff] %v649
                %v651 = vld [vmem:[%s603 + $0x168] sm:$0xff]
                %652 = vst [vmem:[%s604 + $0xb8] sm:$0xff] %v651
                %v653 = vld [vmem:[%s603 + $0x180] sm:$0xff]
                %654 = vst [vmem:[%s604 + $0xc0] sm:$0xff] %v653
                %v655 = vld [vmem:[%s603 + $0x188] sm:$0xff]
                %656 = vst [vmem:[%s604 + $0xc8] sm:$0xff] %v655
                %v657 = vld [vmem:[%s603 + $0x1a0] sm:$0xff]
                %658 = vst [vmem:[%s604 + $0xd0] sm:$0xff] %v657
                %v659 = vld [vmem:[%s603 + $0x1a8] sm:$0xff]
                %660 = vst [vmem:[%s604 + $0xd8] sm:$0xff] %v659
                %v661 = vld [vmem:[%s603 + $0x1c0] sm:$0xff]
                %662 = vst [vmem:[%s604 + $0xe0] sm:$0xff] %v661
                %v663 = vld [vmem:[%s603 + $0x1c8] sm:$0xff]
                %664 = vst [vmem:[%s604 + $0xe8] sm:$0xff] %v663
                %v665 = vld [vmem:[%s603 + $0x1e0] sm:$0xff]
                %666 = vst [vmem:[%s604 + $0xf0] sm:$0xff] %v665
                %v667 = vld [vmem:[%s603 + $0x1e8] sm:$0xff]
                %668 = vst [vmem:[%s604 + $0xf8] sm:$0xff] %v667
                %v669 = vld [vmem:[%s603 + $0x200] sm:$0xff]
                %670 = vst [vmem:[%s604 + $0x100] sm:$0xff] %v669
                %v671 = vld [vmem:[%s603 + $0x208] sm:$0xff]
                %672 = vst [vmem:[%s604 + $0x108] sm:$0xff] %v671
                %v673 = vld [vmem:[%s603 + $0x220] sm:$0xff]
                %674 = vst [vmem:[%s604 + $0x110] sm:$0xff] %v673
                %v675 = vld [vmem:[%s603 + $0x228] sm:$0xff]
                %676 = vst [vmem:[%s604 + $0x118] sm:$0xff] %v675
                %v677 = vld [vmem:[%s603 + $0x240] sm:$0xff]
                %678 = vst [vmem:[%s604 + $0x120] sm:$0xff] %v677
                %v679 = vld [vmem:[%s603 + $0x248] sm:$0xff]
                %680 = vst [vmem:[%s604 + $0x128] sm:$0xff] %v679
                %v681 = vld [vmem:[%s603 + $0x260] sm:$0xff]
                %682 = vst [vmem:[%s604 + $0x130] sm:$0xff] %v681
                %v683 = vld [vmem:[%s603 + $0x268] sm:$0xff]
                %684 = vst [vmem:[%s604 + $0x138] sm:$0xff] %v683
                %v685 = vld [vmem:[%s603 + $0x280] sm:$0xff]
                %686 = vst [vmem:[%s604 + $0x140] sm:$0xff] %v685
                %v687 = vld [vmem:[%s603 + $0x288] sm:$0xff]
                %688 = vst [vmem:[%s604 + $0x148] sm:$0xff] %v687
                %v689 = vld [vmem:[%s603 + $0x2a0] sm:$0xff]
                %690 = vst [vmem:[%s604 + $0x150] sm:$0xff] %v689
                %v691 = vld [vmem:[%s603 + $0x2a8] sm:$0xff]
                %692 = vst [vmem:[%s604 + $0x158] sm:$0xff] %v691
                %v693 = vld [vmem:[%s603 + $0x2c0] sm:$0xff]
                %694 = vst [vmem:[%s604 + $0x160] sm:$0xff] %v693
                %v695 = vld [vmem:[%s603 + $0x2c8] sm:$0xff]
                %696 = vst [vmem:[%s604 + $0x168] sm:$0xff] %v695
                %v697 = vld [vmem:[%s603 + $0x2e0] sm:$0xff]
                %698 = vst [vmem:[%s604 + $0x170] sm:$0xff] %v697
                %v699 = vld [vmem:[%s603 + $0x2e8] sm:$0xff]
                %700 = vst [vmem:[%s604 + $0x178] sm:$0xff] %v699
                %v701 = vld [vmem:[%s603 + $0x300] sm:$0xff]
                %702 = vst [vmem:[%s604 + $0x180] sm:$0xff] %v701
                %v703 = vld [vmem:[%s603 + $0x308] sm:$0xff]
                %704 = vst [vmem:[%s604 + $0x188] sm:$0xff] %v703
                %v705 = vld [vmem:[%s603 + $0x320] sm:$0xff]
                %706 = vst [vmem:[%s604 + $0x190] sm:$0xff] %v705
                %v707 = vld [vmem:[%s603 + $0x328] sm:$0xff]
                %708 = vst [vmem:[%s604 + $0x198] sm:$0xff] %v707
                %v709 = vld [vmem:[%s603 + $0x340] sm:$0xff]
                %710 = vst [vmem:[%s604 + $0x1a0] sm:$0xff] %v709
                %v711 = vld [vmem:[%s603 + $0x348] sm:$0xff]
                %712 = vst [vmem:[%s604 + $0x1a8] sm:$0xff] %v711
                %v713 = vld [vmem:[%s603 + $0x360] sm:$0xff]
                %714 = vst [vmem:[%s604 + $0x1b0] sm:$0xff] %v713
                %v715 = vld [vmem:[%s603 + $0x368] sm:$0xff]
                %716 = vst [vmem:[%s604 + $0x1b8] sm:$0xff] %v715
                %v717 = vld [vmem:[%s603 + $0x380] sm:$0xff]
                %718 = vst [vmem:[%s604 + $0x1c0] sm:$0xff] %v717
                %v719 = vld [vmem:[%s603 + $0x388] sm:$0xff]
                %720 = vst [vmem:[%s604 + $0x1c8] sm:$0xff] %v719
                %v721 = vld [vmem:[%s603 + $0x3a0] sm:$0xff]
                %722 = vst [vmem:[%s604 + $0x1d0] sm:$0xff] %v721
                %v723 = vld [vmem:[%s603 + $0x3a8] sm:$0xff]
                %724 = vst [vmem:[%s604 + $0x1d8] sm:$0xff] %v723
                %v725 = vld [vmem:[%s603 + $0x3c0] sm:$0xff]
                %726 = vst [vmem:[%s604 + $0x1e0] sm:$0xff] %v725
                %v727 = vld [vmem:[%s603 + $0x3c8] sm:$0xff]
                %728 = vst [vmem:[%s604 + $0x1e8] sm:$0xff] %v727
                %v729 = vld [vmem:[%s603 + $0x3e0] sm:$0xff]
                %730 = vst [vmem:[%s604 + $0x1f0] sm:$0xff] %v729
                %v731 = vld [vmem:[%s603 + $0x3e8] sm:$0xff]
                %732 = vst [vmem:[%s604 + $0x1f8] sm:$0xff] %v731
                %v733 = vld [vmem:[%s603 + $0x400] sm:$0xff]
                %734 = vst [vmem:[%s604 + $0x200] sm:$0xff] %v733
                %v735 = vld [vmem:[%s603 + $0x408] sm:$0xff]
                %736 = vst [vmem:[%s604 + $0x208] sm:$0xff] %v735
                %v737 = vld [vmem:[%s603 + $0x420] sm:$0xff]
                %738 = vst [vmem:[%s604 + $0x210] sm:$0xff] %v737
                %v739 = vld [vmem:[%s603 + $0x428] sm:$0xff]
                %740 = vst [vmem:[%s604 + $0x218] sm:$0xff] %v739
                %v741 = vld [vmem:[%s603 + $0x440] sm:$0xff]
                %742 = vst [vmem:[%s604 + $0x220] sm:$0xff] %v741
                %v743 = vld [vmem:[%s603 + $0x448] sm:$0xff]
                %744 = vst [vmem:[%s604 + $0x228] sm:$0xff] %v743
                %v745 = vld [vmem:[%s603 + $0x460] sm:$0xff]
                %746 = vst [vmem:[%s604 + $0x230] sm:$0xff] %v745
                %v747 = vld [vmem:[%s603 + $0x468] sm:$0xff]
                %748 = vst [vmem:[%s604 + $0x238] sm:$0xff] %v747
                %v749 = vld [vmem:[%s603 + $0x480] sm:$0xff]
                %750 = vst [vmem:[%s604 + $0x240] sm:$0xff] %v749
                %v751 = vld [vmem:[%s603 + $0x488] sm:$0xff]
                %752 = vst [vmem:[%s604 + $0x248] sm:$0xff] %v751
                %v753 = vld [vmem:[%s603 + $0x4a0] sm:$0xff]
                %754 = vst [vmem:[%s604 + $0x250] sm:$0xff] %v753
                %v755 = vld [vmem:[%s603 + $0x4a8] sm:$0xff]
                %756 = vst [vmem:[%s604 + $0x258] sm:$0xff] %v755
                %v757 = vld [vmem:[%s603 + $0x4c0] sm:$0xff]
                %758 = vst [vmem:[%s604 + $0x260] sm:$0xff] %v757
                %v759 = vld [vmem:[%s603 + $0x4c8] sm:$0xff]
                %760 = vst [vmem:[%s604 + $0x268] sm:$0xff] %v759
                %v761 = vld [vmem:[%s603 + $0x4e0] sm:$0xff]
                %762 = vst [vmem:[%s604 + $0x270] sm:$0xff] %v761
                %v763 = vld [vmem:[%s603 + $0x4e8] sm:$0xff]
                %764 = vst [vmem:[%s604 + $0x278] sm:$0xff] %v763
                %v765 = vld [vmem:[%s603 + $0x500] sm:$0xff]
                %766 = vst [vmem:[%s604 + $0x280] sm:$0xff] %v765
                %v767 = vld [vmem:[%s603 + $0x508] sm:$0xff]
                %768 = vst [vmem:[%s604 + $0x288] sm:$0xff] %v767
                %v769 = vld [vmem:[%s603 + $0x520] sm:$0xff]
                %770 = vst [vmem:[%s604 + $0x290] sm:$0xff] %v769
                %v771 = vld [vmem:[%s603 + $0x528] sm:$0xff]
                %772 = vst [vmem:[%s604 + $0x298] sm:$0xff] %v771
                %v773 = vld [vmem:[%s603 + $0x540] sm:$0xff]
                %774 = vst [vmem:[%s604 + $0x2a0] sm:$0xff] %v773
                %v775 = vld [vmem:[%s603 + $0x548] sm:$0xff]
                %776 = vst [vmem:[%s604 + $0x2a8] sm:$0xff] %v775
                %v777 = vld [vmem:[%s603 + $0x560] sm:$0xff]
                %778 = vst [vmem:[%s604 + $0x2b0] sm:$0xff] %v777
                %v779 = vld [vmem:[%s603 + $0x568] sm:$0xff]
                %780 = vst [vmem:[%s604 + $0x2b8] sm:$0xff] %v779
                %v781 = vld [vmem:[%s603 + $0x580] sm:$0xff]
                %782 = vst [vmem:[%s604 + $0x2c0] sm:$0xff] %v781
                %v783 = vld [vmem:[%s603 + $0x588] sm:$0xff]
                %784 = vst [vmem:[%s604 + $0x2c8] sm:$0xff] %v783
                %v785 = vld [vmem:[%s603 + $0x5a0] sm:$0xff]
                %786 = vst [vmem:[%s604 + $0x2d0] sm:$0xff] %v785
                %v787 = vld [vmem:[%s603 + $0x5a8] sm:$0xff]
                %788 = vst [vmem:[%s604 + $0x2d8] sm:$0xff] %v787
                %v789 = vld [vmem:[%s603 + $0x5c0] sm:$0xff]
                %790 = vst [vmem:[%s604 + $0x2e0] sm:$0xff] %v789
                %v791 = vld [vmem:[%s603 + $0x5c8] sm:$0xff]
                %792 = vst [vmem:[%s604 + $0x2e8] sm:$0xff] %v791
                %v793 = vld [vmem:[%s603 + $0x5e0] sm:$0xff]
                %794 = vst [vmem:[%s604 + $0x2f0] sm:$0xff] %v793
                %v795 = vld [vmem:[%s603 + $0x5e8] sm:$0xff]
                %796 = vst [vmem:[%s604 + $0x2f8] sm:$0xff] %v795
                %v797 = vld [vmem:[%s603 + $0x600] sm:$0xff]
                %798 = vst [vmem:[%s604 + $0x300] sm:$0xff] %v797
                %v799 = vld [vmem:[%s603 + $0x608] sm:$0xff]
                %800 = vst [vmem:[%s604 + $0x308] sm:$0xff] %v799
                %v801 = vld [vmem:[%s603 + $0x620] sm:$0xff]
                %802 = vst [vmem:[%s604 + $0x310] sm:$0xff] %v801
                %v803 = vld [vmem:[%s603 + $0x628] sm:$0xff]
                %804 = vst [vmem:[%s604 + $0x318] sm:$0xff] %v803
                %v805 = vld [vmem:[%s603 + $0x640] sm:$0xff]
                %806 = vst [vmem:[%s604 + $0x320] sm:$0xff] %v805
                %v807 = vld [vmem:[%s603 + $0x648] sm:$0xff]
                %808 = vst [vmem:[%s604 + $0x328] sm:$0xff] %v807
                %v809 = vld [vmem:[%s603 + $0x660] sm:$0xff]
                %810 = vst [vmem:[%s604 + $0x330] sm:$0xff] %v809
                %v811 = vld [vmem:[%s603 + $0x668] sm:$0xff]
                %812 = vst [vmem:[%s604 + $0x338] sm:$0xff] %v811
                %v813 = vld [vmem:[%s603 + $0x680] sm:$0xff]
                %814 = vst [vmem:[%s604 + $0x340] sm:$0xff] %v813
                %v815 = vld [vmem:[%s603 + $0x688] sm:$0xff]
                %816 = vst [vmem:[%s604 + $0x348] sm:$0xff] %v815
                %v817 = vld [vmem:[%s603 + $0x6a0] sm:$0xff]
                %818 = vst [vmem:[%s604 + $0x350] sm:$0xff] %v817
                %v819 = vld [vmem:[%s603 + $0x6a8] sm:$0xff]
                %820 = vst [vmem:[%s604 + $0x358] sm:$0xff] %v819
                %v821 = vld [vmem:[%s603 + $0x6c0] sm:$0xff]
                %822 = vst [vmem:[%s604 + $0x360] sm:$0xff] %v821
                %v823 = vld [vmem:[%s603 + $0x6c8] sm:$0xff]
                %824 = vst [vmem:[%s604 + $0x368] sm:$0xff] %v823
                %v825 = vld [vmem:[%s603 + $0x6e0] sm:$0xff]
                %826 = vst [vmem:[%s604 + $0x370] sm:$0xff] %v825
                %v827 = vld [vmem:[%s603 + $0x6e8] sm:$0xff]
                %828 = vst [vmem:[%s604 + $0x378] sm:$0xff] %v827
                %v829 = vld [vmem:[%s603 + $0x700] sm:$0xff]
                %830 = vst [vmem:[%s604 + $0x380] sm:$0xff] %v829
                %v831 = vld [vmem:[%s603 + $0x708] sm:$0xff]
                %832 = vst [vmem:[%s604 + $0x388] sm:$0xff] %v831
                %v833 = vld [vmem:[%s603 + $0x720] sm:$0xff]
                %834 = vst [vmem:[%s604 + $0x390] sm:$0xff] %v833
                %v835 = vld [vmem:[%s603 + $0x728] sm:$0xff]
                %836 = vst [vmem:[%s604 + $0x398] sm:$0xff] %v835
                %v837 = vld [vmem:[%s603 + $0x740] sm:$0xff]
                %838 = vst [vmem:[%s604 + $0x3a0] sm:$0xff] %v837
                %v839 = vld [vmem:[%s603 + $0x748] sm:$0xff]
                %840 = vst [vmem:[%s604 + $0x3a8] sm:$0xff] %v839
                %v841 = vld [vmem:[%s603 + $0x760] sm:$0xff]
                %842 = vst [vmem:[%s604 + $0x3b0] sm:$0xff] %v841
                %v843 = vld [vmem:[%s603 + $0x768] sm:$0xff]
                %844 = vst [vmem:[%s604 + $0x3b8] sm:$0xff] %v843
                %v845 = vld [vmem:[%s603 + $0x780] sm:$0xff]
                %846 = vst [vmem:[%s604 + $0x3c0] sm:$0xff] %v845
                %v847 = vld [vmem:[%s603 + $0x788] sm:$0xff]
                %848 = vst [vmem:[%s604 + $0x3c8] sm:$0xff] %v847
                %v849 = vld [vmem:[%s603 + $0x7a0] sm:$0xff]
                %850 = vst [vmem:[%s604 + $0x3d0] sm:$0xff] %v849
                %v851 = vld [vmem:[%s603 + $0x7a8] sm:$0xff]
                %852 = vst [vmem:[%s604 + $0x3d8] sm:$0xff] %v851
                %v853 = vld [vmem:[%s603 + $0x7c0] sm:$0xff]
                %854 = vst [vmem:[%s604 + $0x3e0] sm:$0xff] %v853
                %v855 = vld [vmem:[%s603 + $0x7c8] sm:$0xff]
                %856 = vst [vmem:[%s604 + $0x3e8] sm:$0xff] %v855
                %v857 = vld [vmem:[%s603 + $0x7e0] sm:$0xff]
                %858 = vst [vmem:[%s604 + $0x3f0] sm:$0xff] %v857
                %v859 = vld [vmem:[%s603 + $0x7e8] sm:$0xff]
                %860 = vst [vmem:[%s604 + $0x3f8] sm:$0xff] %v859
              $region60: #{bayesian_linear_forward.1} parent=54 // loop_footer
                %s602 = sadd.s32 1, %s598
              $region61: #{bayesian_linear_forward.1} parent=54 // loop_footer_branch
                %597 = sbr.rel target = $region57
              $region62: #{bayesian_linear_forward.1} parent=54 // loop_exit
                _
            $region55: #{bayesian_linear_forward.1} parent=50 // pred_fallthru
              _
            // Predicated region
            $region63: #{bayesian_linear_forward.1} parent=50 // pred_check
              _
            $region64: #{bayesian_linear_forward.1} parent=50 // pred_check_branch
              %862 = sbr.rel target = $region66
            $region65: #{bayesian_linear_forward.1} parent=50 // pred_region
              _
            $region66: #{bayesian_linear_forward.1} parent=50 // pred_fallthru
              _
          $region51: #{bayesian_linear_forward.1} parent=46 // pred_fallthru
            _
          %863 = vnop
        $region47: #{bayesian_linear_forward.1} parent=15 // pred_fallthru
          _
        // Predicated region
        $region67: #{bayesian_linear_forward.1} parent=15 // pred_check
          %p864 = pneg %p130
        $region68: #{bayesian_linear_forward.1} parent=15 // pred_check_branch
          %866 = sbr.rel (%p864) target = $region70
        $region69: #{bayesian_linear_forward.1} parent=15 // pred_region
          %s867 = sand.u32 %s120, 1
          %s868 = sand.u32 %s120, 1
          %s869 = smul.addr %s868, 1024
          %s870 = scalar_lea.vmem [#allocation5], %s869
          %s871 = smul.u32 64, %s22
          %s872 = smul.u32 2, %s21
          %s873 = smul.addr %s871, 4
          %s874 = sadd.s32 %s872, %s873
          %s875 = smul.addr %s874, 8
          %s876 = scalar_lea.vmem %s3, %s875
          // Predicated region
          $region71: #{bayesian_linear_forward.1} parent=69 // pred_check
            _
          $region72: #{bayesian_linear_forward.1} parent=69 // pred_check_branch
            %878 = sbr.rel (0) target = $region74
          $region73: #{bayesian_linear_forward.1} parent=69 // pred_region
            // Predicated region
            $region75: #{bayesian_linear_forward.1} parent=73 // pred_check
              _
            $region76: #{bayesian_linear_forward.1} parent=73 // pred_check_branch
              %880 = sbr.rel (0) target = $region78
            $region77: #{bayesian_linear_forward.1} parent=73 // pred_region
              loop: start=0, step=1, limit=1
              $region79: #{bayesian_linear_forward.1} parent=77 // loop_pre_header
                _
              $region80: #{bayesian_linear_forward.1} parent=77 // loop_header
                %s882 = sphi 0, %s886
                %p883 = scmp.ge.s32.totalorder %s882, 1
                %s887 = sphi %s876, %s876
                %s888 = sphi %s870, %s870
              $region81: #{bayesian_linear_forward.1} parent=77 // loop_header_branch
                %885 = sbr.rel (%p883) target = $region85
              $region82: #{bayesian_linear_forward.1} parent=77 // loop_body
                %v889 = vld [vmem:[%s887] sm:$0xff]
                %890 = vst [vmem:[%s888] sm:$0xff] %v889
                %v891 = vld [vmem:[%s887 + $0x8] sm:$0xff]
                %892 = vst [vmem:[%s888 + $0x8] sm:$0xff] %v891
                %v893 = vld [vmem:[%s887 + $0x20] sm:$0xff]
                %894 = vst [vmem:[%s888 + $0x10] sm:$0xff] %v893
                %v895 = vld [vmem:[%s887 + $0x28] sm:$0xff]
                %896 = vst [vmem:[%s888 + $0x18] sm:$0xff] %v895
                %v897 = vld [vmem:[%s887 + $0x40] sm:$0xff]
                %898 = vst [vmem:[%s888 + $0x20] sm:$0xff] %v897
                %v899 = vld [vmem:[%s887 + $0x48] sm:$0xff]
                %900 = vst [vmem:[%s888 + $0x28] sm:$0xff] %v899
                %v901 = vld [vmem:[%s887 + $0x60] sm:$0xff]
                %902 = vst [vmem:[%s888 + $0x30] sm:$0xff] %v901
                %v903 = vld [vmem:[%s887 + $0x68] sm:$0xff]
                %904 = vst [vmem:[%s888 + $0x38] sm:$0xff] %v903
                %v905 = vld [vmem:[%s887 + $0x80] sm:$0xff]
                %906 = vst [vmem:[%s888 + $0x40] sm:$0xff] %v905
                %v907 = vld [vmem:[%s887 + $0x88] sm:$0xff]
                %908 = vst [vmem:[%s888 + $0x48] sm:$0xff] %v907
                %v909 = vld [vmem:[%s887 + $0xa0] sm:$0xff]
                %910 = vst [vmem:[%s888 + $0x50] sm:$0xff] %v909
                %v911 = vld [vmem:[%s887 + $0xa8] sm:$0xff]
                %912 = vst [vmem:[%s888 + $0x58] sm:$0xff] %v911
                %v913 = vld [vmem:[%s887 + $0xc0] sm:$0xff]
                %914 = vst [vmem:[%s888 + $0x60] sm:$0xff] %v913
                %v915 = vld [vmem:[%s887 + $0xc8] sm:$0xff]
                %916 = vst [vmem:[%s888 + $0x68] sm:$0xff] %v915
                %v917 = vld [vmem:[%s887 + $0xe0] sm:$0xff]
                %918 = vst [vmem:[%s888 + $0x70] sm:$0xff] %v917
                %v919 = vld [vmem:[%s887 + $0xe8] sm:$0xff]
                %920 = vst [vmem:[%s888 + $0x78] sm:$0xff] %v919
                %v921 = vld [vmem:[%s887 + $0x100] sm:$0xff]
                %922 = vst [vmem:[%s888 + $0x80] sm:$0xff] %v921
                %v923 = vld [vmem:[%s887 + $0x108] sm:$0xff]
                %924 = vst [vmem:[%s888 + $0x88] sm:$0xff] %v923
                %v925 = vld [vmem:[%s887 + $0x120] sm:$0xff]
                %926 = vst [vmem:[%s888 + $0x90] sm:$0xff] %v925
                %v927 = vld [vmem:[%s887 + $0x128] sm:$0xff]
                %928 = vst [vmem:[%s888 + $0x98] sm:$0xff] %v927
                %v929 = vld [vmem:[%s887 + $0x140] sm:$0xff]
                %930 = vst [vmem:[%s888 + $0xa0] sm:$0xff] %v929
                %v931 = vld [vmem:[%s887 + $0x148] sm:$0xff]
                %932 = vst [vmem:[%s888 + $0xa8] sm:$0xff] %v931
                %v933 = vld [vmem:[%s887 + $0x160] sm:$0xff]
                %934 = vst [vmem:[%s888 + $0xb0] sm:$0xff] %v933
                %v935 = vld [vmem:[%s887 + $0x168] sm:$0xff]
                %936 = vst [vmem:[%s888 + $0xb8] sm:$0xff] %v935
                %v937 = vld [vmem:[%s887 + $0x180] sm:$0xff]
                %938 = vst [vmem:[%s888 + $0xc0] sm:$0xff] %v937
                %v939 = vld [vmem:[%s887 + $0x188] sm:$0xff]
                %940 = vst [vmem:[%s888 + $0xc8] sm:$0xff] %v939
                %v941 = vld [vmem:[%s887 + $0x1a0] sm:$0xff]
                %942 = vst [vmem:[%s888 + $0xd0] sm:$0xff] %v941
                %v943 = vld [vmem:[%s887 + $0x1a8] sm:$0xff]
                %944 = vst [vmem:[%s888 + $0xd8] sm:$0xff] %v943
                %v945 = vld [vmem:[%s887 + $0x1c0] sm:$0xff]
                %946 = vst [vmem:[%s888 + $0xe0] sm:$0xff] %v945
                %v947 = vld [vmem:[%s887 + $0x1c8] sm:$0xff]
                %948 = vst [vmem:[%s888 + $0xe8] sm:$0xff] %v947
                %v949 = vld [vmem:[%s887 + $0x1e0] sm:$0xff]
                %950 = vst [vmem:[%s888 + $0xf0] sm:$0xff] %v949
                %v951 = vld [vmem:[%s887 + $0x1e8] sm:$0xff]
                %952 = vst [vmem:[%s888 + $0xf8] sm:$0xff] %v951
                %v953 = vld [vmem:[%s887 + $0x200] sm:$0xff]
                %954 = vst [vmem:[%s888 + $0x100] sm:$0xff] %v953
                %v955 = vld [vmem:[%s887 + $0x208] sm:$0xff]
                %956 = vst [vmem:[%s888 + $0x108] sm:$0xff] %v955
                %v957 = vld [vmem:[%s887 + $0x220] sm:$0xff]
                %958 = vst [vmem:[%s888 + $0x110] sm:$0xff] %v957
                %v959 = vld [vmem:[%s887 + $0x228] sm:$0xff]
                %960 = vst [vmem:[%s888 + $0x118] sm:$0xff] %v959
                %v961 = vld [vmem:[%s887 + $0x240] sm:$0xff]
                %962 = vst [vmem:[%s888 + $0x120] sm:$0xff] %v961
                %v963 = vld [vmem:[%s887 + $0x248] sm:$0xff]
                %964 = vst [vmem:[%s888 + $0x128] sm:$0xff] %v963
                %v965 = vld [vmem:[%s887 + $0x260] sm:$0xff]
                %966 = vst [vmem:[%s888 + $0x130] sm:$0xff] %v965
                %v967 = vld [vmem:[%s887 + $0x268] sm:$0xff]
                %968 = vst [vmem:[%s888 + $0x138] sm:$0xff] %v967
                %v969 = vld [vmem:[%s887 + $0x280] sm:$0xff]
                %970 = vst [vmem:[%s888 + $0x140] sm:$0xff] %v969
                %v971 = vld [vmem:[%s887 + $0x288] sm:$0xff]
                %972 = vst [vmem:[%s888 + $0x148] sm:$0xff] %v971
                %v973 = vld [vmem:[%s887 + $0x2a0] sm:$0xff]
                %974 = vst [vmem:[%s888 + $0x150] sm:$0xff] %v973
                %v975 = vld [vmem:[%s887 + $0x2a8] sm:$0xff]
                %976 = vst [vmem:[%s888 + $0x158] sm:$0xff] %v975
                %v977 = vld [vmem:[%s887 + $0x2c0] sm:$0xff]
                %978 = vst [vmem:[%s888 + $0x160] sm:$0xff] %v977
                %v979 = vld [vmem:[%s887 + $0x2c8] sm:$0xff]
                %980 = vst [vmem:[%s888 + $0x168] sm:$0xff] %v979
                %v981 = vld [vmem:[%s887 + $0x2e0] sm:$0xff]
                %982 = vst [vmem:[%s888 + $0x170] sm:$0xff] %v981
                %v983 = vld [vmem:[%s887 + $0x2e8] sm:$0xff]
                %984 = vst [vmem:[%s888 + $0x178] sm:$0xff] %v983
                %v985 = vld [vmem:[%s887 + $0x300] sm:$0xff]
                %986 = vst [vmem:[%s888 + $0x180] sm:$0xff] %v985
                %v987 = vld [vmem:[%s887 + $0x308] sm:$0xff]
                %988 = vst [vmem:[%s888 + $0x188] sm:$0xff] %v987
                %v989 = vld [vmem:[%s887 + $0x320] sm:$0xff]
                %990 = vst [vmem:[%s888 + $0x190] sm:$0xff] %v989
                %v991 = vld [vmem:[%s887 + $0x328] sm:$0xff]
                %992 = vst [vmem:[%s888 + $0x198] sm:$0xff] %v991
                %v993 = vld [vmem:[%s887 + $0x340] sm:$0xff]
                %994 = vst [vmem:[%s888 + $0x1a0] sm:$0xff] %v993
                %v995 = vld [vmem:[%s887 + $0x348] sm:$0xff]
                %996 = vst [vmem:[%s888 + $0x1a8] sm:$0xff] %v995
                %v997 = vld [vmem:[%s887 + $0x360] sm:$0xff]
                %998 = vst [vmem:[%s888 + $0x1b0] sm:$0xff] %v997
                %v999 = vld [vmem:[%s887 + $0x368] sm:$0xff]
                %1000 = vst [vmem:[%s888 + $0x1b8] sm:$0xff] %v999
                %v1001 = vld [vmem:[%s887 + $0x380] sm:$0xff]
                %1002 = vst [vmem:[%s888 + $0x1c0] sm:$0xff] %v1001
                %v1003 = vld [vmem:[%s887 + $0x388] sm:$0xff]
                %1004 = vst [vmem:[%s888 + $0x1c8] sm:$0xff] %v1003
                %v1005 = vld [vmem:[%s887 + $0x3a0] sm:$0xff]
                %1006 = vst [vmem:[%s888 + $0x1d0] sm:$0xff] %v1005
                %v1007 = vld [vmem:[%s887 + $0x3a8] sm:$0xff]
                %1008 = vst [vmem:[%s888 + $0x1d8] sm:$0xff] %v1007
                %v1009 = vld [vmem:[%s887 + $0x3c0] sm:$0xff]
                %1010 = vst [vmem:[%s888 + $0x1e0] sm:$0xff] %v1009
                %v1011 = vld [vmem:[%s887 + $0x3c8] sm:$0xff]
                %1012 = vst [vmem:[%s888 + $0x1e8] sm:$0xff] %v1011
                %v1013 = vld [vmem:[%s887 + $0x3e0] sm:$0xff]
                %1014 = vst [vmem:[%s888 + $0x1f0] sm:$0xff] %v1013
                %v1015 = vld [vmem:[%s887 + $0x3e8] sm:$0xff]
                %1016 = vst [vmem:[%s888 + $0x1f8] sm:$0xff] %v1015
                %v1017 = vld [vmem:[%s887 + $0x400] sm:$0xff]
                %1018 = vst [vmem:[%s888 + $0x200] sm:$0xff] %v1017
                %v1019 = vld [vmem:[%s887 + $0x408] sm:$0xff]
                %1020 = vst [vmem:[%s888 + $0x208] sm:$0xff] %v1019
                %v1021 = vld [vmem:[%s887 + $0x420] sm:$0xff]
                %1022 = vst [vmem:[%s888 + $0x210] sm:$0xff] %v1021
                %v1023 = vld [vmem:[%s887 + $0x428] sm:$0xff]
                %1024 = vst [vmem:[%s888 + $0x218] sm:$0xff] %v1023
                %v1025 = vld [vmem:[%s887 + $0x440] sm:$0xff]
                %1026 = vst [vmem:[%s888 + $0x220] sm:$0xff] %v1025
                %v1027 = vld [vmem:[%s887 + $0x448] sm:$0xff]
                %1028 = vst [vmem:[%s888 + $0x228] sm:$0xff] %v1027
                %v1029 = vld [vmem:[%s887 + $0x460] sm:$0xff]
                %1030 = vst [vmem:[%s888 + $0x230] sm:$0xff] %v1029
                %v1031 = vld [vmem:[%s887 + $0x468] sm:$0xff]
                %1032 = vst [vmem:[%s888 + $0x238] sm:$0xff] %v1031
                %v1033 = vld [vmem:[%s887 + $0x480] sm:$0xff]
                %1034 = vst [vmem:[%s888 + $0x240] sm:$0xff] %v1033
                %v1035 = vld [vmem:[%s887 + $0x488] sm:$0xff]
                %1036 = vst [vmem:[%s888 + $0x248] sm:$0xff] %v1035
                %v1037 = vld [vmem:[%s887 + $0x4a0] sm:$0xff]
                %1038 = vst [vmem:[%s888 + $0x250] sm:$0xff] %v1037
                %v1039 = vld [vmem:[%s887 + $0x4a8] sm:$0xff]
                %1040 = vst [vmem:[%s888 + $0x258] sm:$0xff] %v1039
                %v1041 = vld [vmem:[%s887 + $0x4c0] sm:$0xff]
                %1042 = vst [vmem:[%s888 + $0x260] sm:$0xff] %v1041
                %v1043 = vld [vmem:[%s887 + $0x4c8] sm:$0xff]
                %1044 = vst [vmem:[%s888 + $0x268] sm:$0xff] %v1043
                %v1045 = vld [vmem:[%s887 + $0x4e0] sm:$0xff]
                %1046 = vst [vmem:[%s888 + $0x270] sm:$0xff] %v1045
                %v1047 = vld [vmem:[%s887 + $0x4e8] sm:$0xff]
                %1048 = vst [vmem:[%s888 + $0x278] sm:$0xff] %v1047
                %v1049 = vld [vmem:[%s887 + $0x500] sm:$0xff]
                %1050 = vst [vmem:[%s888 + $0x280] sm:$0xff] %v1049
                %v1051 = vld [vmem:[%s887 + $0x508] sm:$0xff]
                %1052 = vst [vmem:[%s888 + $0x288] sm:$0xff] %v1051
                %v1053 = vld [vmem:[%s887 + $0x520] sm:$0xff]
                %1054 = vst [vmem:[%s888 + $0x290] sm:$0xff] %v1053
                %v1055 = vld [vmem:[%s887 + $0x528] sm:$0xff]
                %1056 = vst [vmem:[%s888 + $0x298] sm:$0xff] %v1055
                %v1057 = vld [vmem:[%s887 + $0x540] sm:$0xff]
                %1058 = vst [vmem:[%s888 + $0x2a0] sm:$0xff] %v1057
                %v1059 = vld [vmem:[%s887 + $0x548] sm:$0xff]
                %1060 = vst [vmem:[%s888 + $0x2a8] sm:$0xff] %v1059
                %v1061 = vld [vmem:[%s887 + $0x560] sm:$0xff]
                %1062 = vst [vmem:[%s888 + $0x2b0] sm:$0xff] %v1061
                %v1063 = vld [vmem:[%s887 + $0x568] sm:$0xff]
                %1064 = vst [vmem:[%s888 + $0x2b8] sm:$0xff] %v1063
                %v1065 = vld [vmem:[%s887 + $0x580] sm:$0xff]
                %1066 = vst [vmem:[%s888 + $0x2c0] sm:$0xff] %v1065
                %v1067 = vld [vmem:[%s887 + $0x588] sm:$0xff]
                %1068 = vst [vmem:[%s888 + $0x2c8] sm:$0xff] %v1067
                %v1069 = vld [vmem:[%s887 + $0x5a0] sm:$0xff]
                %1070 = vst [vmem:[%s888 + $0x2d0] sm:$0xff] %v1069
                %v1071 = vld [vmem:[%s887 + $0x5a8] sm:$0xff]
                %1072 = vst [vmem:[%s888 + $0x2d8] sm:$0xff] %v1071
                %v1073 = vld [vmem:[%s887 + $0x5c0] sm:$0xff]
                %1074 = vst [vmem:[%s888 + $0x2e0] sm:$0xff] %v1073
                %v1075 = vld [vmem:[%s887 + $0x5c8] sm:$0xff]
                %1076 = vst [vmem:[%s888 + $0x2e8] sm:$0xff] %v1075
                %v1077 = vld [vmem:[%s887 + $0x5e0] sm:$0xff]
                %1078 = vst [vmem:[%s888 + $0x2f0] sm:$0xff] %v1077
                %v1079 = vld [vmem:[%s887 + $0x5e8] sm:$0xff]
                %1080 = vst [vmem:[%s888 + $0x2f8] sm:$0xff] %v1079
                %v1081 = vld [vmem:[%s887 + $0x600] sm:$0xff]
                %1082 = vst [vmem:[%s888 + $0x300] sm:$0xff] %v1081
                %v1083 = vld [vmem:[%s887 + $0x608] sm:$0xff]
                %1084 = vst [vmem:[%s888 + $0x308] sm:$0xff] %v1083
                %v1085 = vld [vmem:[%s887 + $0x620] sm:$0xff]
                %1086 = vst [vmem:[%s888 + $0x310] sm:$0xff] %v1085
                %v1087 = vld [vmem:[%s887 + $0x628] sm:$0xff]
                %1088 = vst [vmem:[%s888 + $0x318] sm:$0xff] %v1087
                %v1089 = vld [vmem:[%s887 + $0x640] sm:$0xff]
                %1090 = vst [vmem:[%s888 + $0x320] sm:$0xff] %v1089
                %v1091 = vld [vmem:[%s887 + $0x648] sm:$0xff]
                %1092 = vst [vmem:[%s888 + $0x328] sm:$0xff] %v1091
                %v1093 = vld [vmem:[%s887 + $0x660] sm:$0xff]
                %1094 = vst [vmem:[%s888 + $0x330] sm:$0xff] %v1093
                %v1095 = vld [vmem:[%s887 + $0x668] sm:$0xff]
                %1096 = vst [vmem:[%s888 + $0x338] sm:$0xff] %v1095
                %v1097 = vld [vmem:[%s887 + $0x680] sm:$0xff]
                %1098 = vst [vmem:[%s888 + $0x340] sm:$0xff] %v1097
                %v1099 = vld [vmem:[%s887 + $0x688] sm:$0xff]
                %1100 = vst [vmem:[%s888 + $0x348] sm:$0xff] %v1099
                %v1101 = vld [vmem:[%s887 + $0x6a0] sm:$0xff]
                %1102 = vst [vmem:[%s888 + $0x350] sm:$0xff] %v1101
                %v1103 = vld [vmem:[%s887 + $0x6a8] sm:$0xff]
                %1104 = vst [vmem:[%s888 + $0x358] sm:$0xff] %v1103
                %v1105 = vld [vmem:[%s887 + $0x6c0] sm:$0xff]
                %1106 = vst [vmem:[%s888 + $0x360] sm:$0xff] %v1105
                %v1107 = vld [vmem:[%s887 + $0x6c8] sm:$0xff]
                %1108 = vst [vmem:[%s888 + $0x368] sm:$0xff] %v1107
                %v1109 = vld [vmem:[%s887 + $0x6e0] sm:$0xff]
                %1110 = vst [vmem:[%s888 + $0x370] sm:$0xff] %v1109
                %v1111 = vld [vmem:[%s887 + $0x6e8] sm:$0xff]
                %1112 = vst [vmem:[%s888 + $0x378] sm:$0xff] %v1111
                %v1113 = vld [vmem:[%s887 + $0x700] sm:$0xff]
                %1114 = vst [vmem:[%s888 + $0x380] sm:$0xff] %v1113
                %v1115 = vld [vmem:[%s887 + $0x708] sm:$0xff]
                %1116 = vst [vmem:[%s888 + $0x388] sm:$0xff] %v1115
                %v1117 = vld [vmem:[%s887 + $0x720] sm:$0xff]
                %1118 = vst [vmem:[%s888 + $0x390] sm:$0xff] %v1117
                %v1119 = vld [vmem:[%s887 + $0x728] sm:$0xff]
                %1120 = vst [vmem:[%s888 + $0x398] sm:$0xff] %v1119
                %v1121 = vld [vmem:[%s887 + $0x740] sm:$0xff]
                %1122 = vst [vmem:[%s888 + $0x3a0] sm:$0xff] %v1121
                %v1123 = vld [vmem:[%s887 + $0x748] sm:$0xff]
                %1124 = vst [vmem:[%s888 + $0x3a8] sm:$0xff] %v1123
                %v1125 = vld [vmem:[%s887 + $0x760] sm:$0xff]
                %1126 = vst [vmem:[%s888 + $0x3b0] sm:$0xff] %v1125
                %v1127 = vld [vmem:[%s887 + $0x768] sm:$0xff]
                %1128 = vst [vmem:[%s888 + $0x3b8] sm:$0xff] %v1127
                %v1129 = vld [vmem:[%s887 + $0x780] sm:$0xff]
                %1130 = vst [vmem:[%s888 + $0x3c0] sm:$0xff] %v1129
                %v1131 = vld [vmem:[%s887 + $0x788] sm:$0xff]
                %1132 = vst [vmem:[%s888 + $0x3c8] sm:$0xff] %v1131
                %v1133 = vld [vmem:[%s887 + $0x7a0] sm:$0xff]
                %1134 = vst [vmem:[%s888 + $0x3d0] sm:$0xff] %v1133
                %v1135 = vld [vmem:[%s887 + $0x7a8] sm:$0xff]
                %1136 = vst [vmem:[%s888 + $0x3d8] sm:$0xff] %v1135
                %v1137 = vld [vmem:[%s887 + $0x7c0] sm:$0xff]
                %1138 = vst [vmem:[%s888 + $0x3e0] sm:$0xff] %v1137
                %v1139 = vld [vmem:[%s887 + $0x7c8] sm:$0xff]
                %1140 = vst [vmem:[%s888 + $0x3e8] sm:$0xff] %v1139
                %v1141 = vld [vmem:[%s887 + $0x7e0] sm:$0xff]
                %1142 = vst [vmem:[%s888 + $0x3f0] sm:$0xff] %v1141
                %v1143 = vld [vmem:[%s887 + $0x7e8] sm:$0xff]
                %1144 = vst [vmem:[%s888 + $0x3f8] sm:$0xff] %v1143
              $region83: #{bayesian_linear_forward.1} parent=77 // loop_footer
                %s886 = sadd.s32 1, %s882
              $region84: #{bayesian_linear_forward.1} parent=77 // loop_footer_branch
                %881 = sbr.rel target = $region80
              $region85: #{bayesian_linear_forward.1} parent=77 // loop_exit
                _
            $region78: #{bayesian_linear_forward.1} parent=73 // pred_fallthru
              _
            // Predicated region
            $region86: #{bayesian_linear_forward.1} parent=73 // pred_check
              _
            $region87: #{bayesian_linear_forward.1} parent=73 // pred_check_branch
              %1146 = sbr.rel target = $region89
            $region88: #{bayesian_linear_forward.1} parent=73 // pred_region
              _
            $region89: #{bayesian_linear_forward.1} parent=73 // pred_fallthru
              _
          $region74: #{bayesian_linear_forward.1} parent=69 // pred_fallthru
            _
          %1147 = vnop
        $region70: #{bayesian_linear_forward.1} parent=15 // pred_fallthru
          _
        // Predicated region
        $region90: #{bayesian_linear_forward.1} parent=15 // pred_check
          %p1148 = pneg %p158
        $region91: #{bayesian_linear_forward.1} parent=15 // pred_check_branch
          %1150 = sbr.rel (%p1148) target = $region93
        $region92: #{bayesian_linear_forward.1} parent=15 // pred_region
          %s1151 = sand.u32 %s148, 1
          %s1152 = sand.u32 %s148, 1
          %s1153 = smul.addr %s1152, 1024
          %s1154 = scalar_lea.vmem [#allocation6], %s1153
          %s1155 = smul.u32 64, %s22
          %s1156 = smul.u32 2, %s21
          %s1157 = smul.addr %s1155, 4
          %s1158 = sadd.s32 %s1156, %s1157
          %s1159 = smul.addr %s1158, 8
          %s1160 = scalar_lea.vmem %s4, %s1159
          // Predicated region
          $region94: #{bayesian_linear_forward.1} parent=92 // pred_check
            _
          $region95: #{bayesian_linear_forward.1} parent=92 // pred_check_branch
            %1162 = sbr.rel (0) target = $region97
          $region96: #{bayesian_linear_forward.1} parent=92 // pred_region
            // Predicated region
            $region98: #{bayesian_linear_forward.1} parent=96 // pred_check
              _
            $region99: #{bayesian_linear_forward.1} parent=96 // pred_check_branch
              %1164 = sbr.rel (0) target = $region101
            $region100: #{bayesian_linear_forward.1} parent=96 // pred_region
              loop: start=0, step=1, limit=1
              $region102: #{bayesian_linear_forward.1} parent=100 // loop_pre_header
                _
              $region103: #{bayesian_linear_forward.1} parent=100 // loop_header
                %s1166 = sphi 0, %s1170
                %p1167 = scmp.ge.s32.totalorder %s1166, 1
                %s1171 = sphi %s1160, %s1160
                %s1172 = sphi %s1154, %s1154
              $region104: #{bayesian_linear_forward.1} parent=100 // loop_header_branch
                %1169 = sbr.rel (%p1167) target = $region108
              $region105: #{bayesian_linear_forward.1} parent=100 // loop_body
                %v1173 = vld [vmem:[%s1171] sm:$0xff]
                %1174 = vst [vmem:[%s1172] sm:$0xff] %v1173
                %v1175 = vld [vmem:[%s1171 + $0x8] sm:$0xff]
                %1176 = vst [vmem:[%s1172 + $0x8] sm:$0xff] %v1175
                %v1177 = vld [vmem:[%s1171 + $0x20] sm:$0xff]
                %1178 = vst [vmem:[%s1172 + $0x10] sm:$0xff] %v1177
                %v1179 = vld [vmem:[%s1171 + $0x28] sm:$0xff]
                %1180 = vst [vmem:[%s1172 + $0x18] sm:$0xff] %v1179
                %v1181 = vld [vmem:[%s1171 + $0x40] sm:$0xff]
                %1182 = vst [vmem:[%s1172 + $0x20] sm:$0xff] %v1181
                %v1183 = vld [vmem:[%s1171 + $0x48] sm:$0xff]
                %1184 = vst [vmem:[%s1172 + $0x28] sm:$0xff] %v1183
                %v1185 = vld [vmem:[%s1171 + $0x60] sm:$0xff]
                %1186 = vst [vmem:[%s1172 + $0x30] sm:$0xff] %v1185
                %v1187 = vld [vmem:[%s1171 + $0x68] sm:$0xff]
                %1188 = vst [vmem:[%s1172 + $0x38] sm:$0xff] %v1187
                %v1189 = vld [vmem:[%s1171 + $0x80] sm:$0xff]
                %1190 = vst [vmem:[%s1172 + $0x40] sm:$0xff] %v1189
                %v1191 = vld [vmem:[%s1171 + $0x88] sm:$0xff]
                %1192 = vst [vmem:[%s1172 + $0x48] sm:$0xff] %v1191
                %v1193 = vld [vmem:[%s1171 + $0xa0] sm:$0xff]
                %1194 = vst [vmem:[%s1172 + $0x50] sm:$0xff] %v1193
                %v1195 = vld [vmem:[%s1171 + $0xa8] sm:$0xff]
                %1196 = vst [vmem:[%s1172 + $0x58] sm:$0xff] %v1195
                %v1197 = vld [vmem:[%s1171 + $0xc0] sm:$0xff]
                %1198 = vst [vmem:[%s1172 + $0x60] sm:$0xff] %v1197
                %v1199 = vld [vmem:[%s1171 + $0xc8] sm:$0xff]
                %1200 = vst [vmem:[%s1172 + $0x68] sm:$0xff] %v1199
                %v1201 = vld [vmem:[%s1171 + $0xe0] sm:$0xff]
                %1202 = vst [vmem:[%s1172 + $0x70] sm:$0xff] %v1201
                %v1203 = vld [vmem:[%s1171 + $0xe8] sm:$0xff]
                %1204 = vst [vmem:[%s1172 + $0x78] sm:$0xff] %v1203
                %v1205 = vld [vmem:[%s1171 + $0x100] sm:$0xff]
                %1206 = vst [vmem:[%s1172 + $0x80] sm:$0xff] %v1205
                %v1207 = vld [vmem:[%s1171 + $0x108] sm:$0xff]
                %1208 = vst [vmem:[%s1172 + $0x88] sm:$0xff] %v1207
                %v1209 = vld [vmem:[%s1171 + $0x120] sm:$0xff]
                %1210 = vst [vmem:[%s1172 + $0x90] sm:$0xff] %v1209
                %v1211 = vld [vmem:[%s1171 + $0x128] sm:$0xff]
                %1212 = vst [vmem:[%s1172 + $0x98] sm:$0xff] %v1211
                %v1213 = vld [vmem:[%s1171 + $0x140] sm:$0xff]
                %1214 = vst [vmem:[%s1172 + $0xa0] sm:$0xff] %v1213
                %v1215 = vld [vmem:[%s1171 + $0x148] sm:$0xff]
                %1216 = vst [vmem:[%s1172 + $0xa8] sm:$0xff] %v1215
                %v1217 = vld [vmem:[%s1171 + $0x160] sm:$0xff]
                %1218 = vst [vmem:[%s1172 + $0xb0] sm:$0xff] %v1217
                %v1219 = vld [vmem:[%s1171 + $0x168] sm:$0xff]
                %1220 = vst [vmem:[%s1172 + $0xb8] sm:$0xff] %v1219
                %v1221 = vld [vmem:[%s1171 + $0x180] sm:$0xff]
                %1222 = vst [vmem:[%s1172 + $0xc0] sm:$0xff] %v1221
                %v1223 = vld [vmem:[%s1171 + $0x188] sm:$0xff]
                %1224 = vst [vmem:[%s1172 + $0xc8] sm:$0xff] %v1223
                %v1225 = vld [vmem:[%s1171 + $0x1a0] sm:$0xff]
                %1226 = vst [vmem:[%s1172 + $0xd0] sm:$0xff] %v1225
                %v1227 = vld [vmem:[%s1171 + $0x1a8] sm:$0xff]
                %1228 = vst [vmem:[%s1172 + $0xd8] sm:$0xff] %v1227
                %v1229 = vld [vmem:[%s1171 + $0x1c0] sm:$0xff]
                %1230 = vst [vmem:[%s1172 + $0xe0] sm:$0xff] %v1229
                %v1231 = vld [vmem:[%s1171 + $0x1c8] sm:$0xff]
                %1232 = vst [vmem:[%s1172 + $0xe8] sm:$0xff] %v1231
                %v1233 = vld [vmem:[%s1171 + $0x1e0] sm:$0xff]
                %1234 = vst [vmem:[%s1172 + $0xf0] sm:$0xff] %v1233
                %v1235 = vld [vmem:[%s1171 + $0x1e8] sm:$0xff]
                %1236 = vst [vmem:[%s1172 + $0xf8] sm:$0xff] %v1235
                %v1237 = vld [vmem:[%s1171 + $0x200] sm:$0xff]
                %1238 = vst [vmem:[%s1172 + $0x100] sm:$0xff] %v1237
                %v1239 = vld [vmem:[%s1171 + $0x208] sm:$0xff]
                %1240 = vst [vmem:[%s1172 + $0x108] sm:$0xff] %v1239
                %v1241 = vld [vmem:[%s1171 + $0x220] sm:$0xff]
                %1242 = vst [vmem:[%s1172 + $0x110] sm:$0xff] %v1241
                %v1243 = vld [vmem:[%s1171 + $0x228] sm:$0xff]
                %1244 = vst [vmem:[%s1172 + $0x118] sm:$0xff] %v1243
                %v1245 = vld [vmem:[%s1171 + $0x240] sm:$0xff]
                %1246 = vst [vmem:[%s1172 + $0x120] sm:$0xff] %v1245
                %v1247 = vld [vmem:[%s1171 + $0x248] sm:$0xff]
                %1248 = vst [vmem:[%s1172 + $0x128] sm:$0xff] %v1247
                %v1249 = vld [vmem:[%s1171 + $0x260] sm:$0xff]
                %1250 = vst [vmem:[%s1172 + $0x130] sm:$0xff] %v1249
                %v1251 = vld [vmem:[%s1171 + $0x268] sm:$0xff]
                %1252 = vst [vmem:[%s1172 + $0x138] sm:$0xff] %v1251
                %v1253 = vld [vmem:[%s1171 + $0x280] sm:$0xff]
                %1254 = vst [vmem:[%s1172 + $0x140] sm:$0xff] %v1253
                %v1255 = vld [vmem:[%s1171 + $0x288] sm:$0xff]
                %1256 = vst [vmem:[%s1172 + $0x148] sm:$0xff] %v1255
                %v1257 = vld [vmem:[%s1171 + $0x2a0] sm:$0xff]
                %1258 = vst [vmem:[%s1172 + $0x150] sm:$0xff] %v1257
                %v1259 = vld [vmem:[%s1171 + $0x2a8] sm:$0xff]
                %1260 = vst [vmem:[%s1172 + $0x158] sm:$0xff] %v1259
                %v1261 = vld [vmem:[%s1171 + $0x2c0] sm:$0xff]
                %1262 = vst [vmem:[%s1172 + $0x160] sm:$0xff] %v1261
                %v1263 = vld [vmem:[%s1171 + $0x2c8] sm:$0xff]
                %1264 = vst [vmem:[%s1172 + $0x168] sm:$0xff] %v1263
                %v1265 = vld [vmem:[%s1171 + $0x2e0] sm:$0xff]
                %1266 = vst [vmem:[%s1172 + $0x170] sm:$0xff] %v1265
                %v1267 = vld [vmem:[%s1171 + $0x2e8] sm:$0xff]
                %1268 = vst [vmem:[%s1172 + $0x178] sm:$0xff] %v1267
                %v1269 = vld [vmem:[%s1171 + $0x300] sm:$0xff]
                %1270 = vst [vmem:[%s1172 + $0x180] sm:$0xff] %v1269
                %v1271 = vld [vmem:[%s1171 + $0x308] sm:$0xff]
                %1272 = vst [vmem:[%s1172 + $0x188] sm:$0xff] %v1271
                %v1273 = vld [vmem:[%s1171 + $0x320] sm:$0xff]
                %1274 = vst [vmem:[%s1172 + $0x190] sm:$0xff] %v1273
                %v1275 = vld [vmem:[%s1171 + $0x328] sm:$0xff]
                %1276 = vst [vmem:[%s1172 + $0x198] sm:$0xff] %v1275
                %v1277 = vld [vmem:[%s1171 + $0x340] sm:$0xff]
                %1278 = vst [vmem:[%s1172 + $0x1a0] sm:$0xff] %v1277
                %v1279 = vld [vmem:[%s1171 + $0x348] sm:$0xff]
                %1280 = vst [vmem:[%s1172 + $0x1a8] sm:$0xff] %v1279
                %v1281 = vld [vmem:[%s1171 + $0x360] sm:$0xff]
                %1282 = vst [vmem:[%s1172 + $0x1b0] sm:$0xff] %v1281
                %v1283 = vld [vmem:[%s1171 + $0x368] sm:$0xff]
                %1284 = vst [vmem:[%s1172 + $0x1b8] sm:$0xff] %v1283
                %v1285 = vld [vmem:[%s1171 + $0x380] sm:$0xff]
                %1286 = vst [vmem:[%s1172 + $0x1c0] sm:$0xff] %v1285
                %v1287 = vld [vmem:[%s1171 + $0x388] sm:$0xff]
                %1288 = vst [vmem:[%s1172 + $0x1c8] sm:$0xff] %v1287
                %v1289 = vld [vmem:[%s1171 + $0x3a0] sm:$0xff]
                %1290 = vst [vmem:[%s1172 + $0x1d0] sm:$0xff] %v1289
                %v1291 = vld [vmem:[%s1171 + $0x3a8] sm:$0xff]
                %1292 = vst [vmem:[%s1172 + $0x1d8] sm:$0xff] %v1291
                %v1293 = vld [vmem:[%s1171 + $0x3c0] sm:$0xff]
                %1294 = vst [vmem:[%s1172 + $0x1e0] sm:$0xff] %v1293
                %v1295 = vld [vmem:[%s1171 + $0x3c8] sm:$0xff]
                %1296 = vst [vmem:[%s1172 + $0x1e8] sm:$0xff] %v1295
                %v1297 = vld [vmem:[%s1171 + $0x3e0] sm:$0xff]
                %1298 = vst [vmem:[%s1172 + $0x1f0] sm:$0xff] %v1297
                %v1299 = vld [vmem:[%s1171 + $0x3e8] sm:$0xff]
                %1300 = vst [vmem:[%s1172 + $0x1f8] sm:$0xff] %v1299
                %v1301 = vld [vmem:[%s1171 + $0x400] sm:$0xff]
                %1302 = vst [vmem:[%s1172 + $0x200] sm:$0xff] %v1301
                %v1303 = vld [vmem:[%s1171 + $0x408] sm:$0xff]
                %1304 = vst [vmem:[%s1172 + $0x208] sm:$0xff] %v1303
                %v1305 = vld [vmem:[%s1171 + $0x420] sm:$0xff]
                %1306 = vst [vmem:[%s1172 + $0x210] sm:$0xff] %v1305
                %v1307 = vld [vmem:[%s1171 + $0x428] sm:$0xff]
                %1308 = vst [vmem:[%s1172 + $0x218] sm:$0xff] %v1307
                %v1309 = vld [vmem:[%s1171 + $0x440] sm:$0xff]
                %1310 = vst [vmem:[%s1172 + $0x220] sm:$0xff] %v1309
                %v1311 = vld [vmem:[%s1171 + $0x448] sm:$0xff]
                %1312 = vst [vmem:[%s1172 + $0x228] sm:$0xff] %v1311
                %v1313 = vld [vmem:[%s1171 + $0x460] sm:$0xff]
                %1314 = vst [vmem:[%s1172 + $0x230] sm:$0xff] %v1313
                %v1315 = vld [vmem:[%s1171 + $0x468] sm:$0xff]
                %1316 = vst [vmem:[%s1172 + $0x238] sm:$0xff] %v1315
                %v1317 = vld [vmem:[%s1171 + $0x480] sm:$0xff]
                %1318 = vst [vmem:[%s1172 + $0x240] sm:$0xff] %v1317
                %v1319 = vld [vmem:[%s1171 + $0x488] sm:$0xff]
                %1320 = vst [vmem:[%s1172 + $0x248] sm:$0xff] %v1319
                %v1321 = vld [vmem:[%s1171 + $0x4a0] sm:$0xff]
                %1322 = vst [vmem:[%s1172 + $0x250] sm:$0xff] %v1321
                %v1323 = vld [vmem:[%s1171 + $0x4a8] sm:$0xff]
                %1324 = vst [vmem:[%s1172 + $0x258] sm:$0xff] %v1323
                %v1325 = vld [vmem:[%s1171 + $0x4c0] sm:$0xff]
                %1326 = vst [vmem:[%s1172 + $0x260] sm:$0xff] %v1325
                %v1327 = vld [vmem:[%s1171 + $0x4c8] sm:$0xff]
                %1328 = vst [vmem:[%s1172 + $0x268] sm:$0xff] %v1327
                %v1329 = vld [vmem:[%s1171 + $0x4e0] sm:$0xff]
                %1330 = vst [vmem:[%s1172 + $0x270] sm:$0xff] %v1329
                %v1331 = vld [vmem:[%s1171 + $0x4e8] sm:$0xff]
                %1332 = vst [vmem:[%s1172 + $0x278] sm:$0xff] %v1331
                %v1333 = vld [vmem:[%s1171 + $0x500] sm:$0xff]
                %1334 = vst [vmem:[%s1172 + $0x280] sm:$0xff] %v1333
                %v1335 = vld [vmem:[%s1171 + $0x508] sm:$0xff]
                %1336 = vst [vmem:[%s1172 + $0x288] sm:$0xff] %v1335
                %v1337 = vld [vmem:[%s1171 + $0x520] sm:$0xff]
                %1338 = vst [vmem:[%s1172 + $0x290] sm:$0xff] %v1337
                %v1339 = vld [vmem:[%s1171 + $0x528] sm:$0xff]
                %1340 = vst [vmem:[%s1172 + $0x298] sm:$0xff] %v1339
                %v1341 = vld [vmem:[%s1171 + $0x540] sm:$0xff]
                %1342 = vst [vmem:[%s1172 + $0x2a0] sm:$0xff] %v1341
                %v1343 = vld [vmem:[%s1171 + $0x548] sm:$0xff]
                %1344 = vst [vmem:[%s1172 + $0x2a8] sm:$0xff] %v1343
                %v1345 = vld [vmem:[%s1171 + $0x560] sm:$0xff]
                %1346 = vst [vmem:[%s1172 + $0x2b0] sm:$0xff] %v1345
                %v1347 = vld [vmem:[%s1171 + $0x568] sm:$0xff]
                %1348 = vst [vmem:[%s1172 + $0x2b8] sm:$0xff] %v1347
                %v1349 = vld [vmem:[%s1171 + $0x580] sm:$0xff]
                %1350 = vst [vmem:[%s1172 + $0x2c0] sm:$0xff] %v1349
                %v1351 = vld [vmem:[%s1171 + $0x588] sm:$0xff]
                %1352 = vst [vmem:[%s1172 + $0x2c8] sm:$0xff] %v1351
                %v1353 = vld [vmem:[%s1171 + $0x5a0] sm:$0xff]
                %1354 = vst [vmem:[%s1172 + $0x2d0] sm:$0xff] %v1353
                %v1355 = vld [vmem:[%s1171 + $0x5a8] sm:$0xff]
                %1356 = vst [vmem:[%s1172 + $0x2d8] sm:$0xff] %v1355
                %v1357 = vld [vmem:[%s1171 + $0x5c0] sm:$0xff]
                %1358 = vst [vmem:[%s1172 + $0x2e0] sm:$0xff] %v1357
                %v1359 = vld [vmem:[%s1171 + $0x5c8] sm:$0xff]
                %1360 = vst [vmem:[%s1172 + $0x2e8] sm:$0xff] %v1359
                %v1361 = vld [vmem:[%s1171 + $0x5e0] sm:$0xff]
                %1362 = vst [vmem:[%s1172 + $0x2f0] sm:$0xff] %v1361
                %v1363 = vld [vmem:[%s1171 + $0x5e8] sm:$0xff]
                %1364 = vst [vmem:[%s1172 + $0x2f8] sm:$0xff] %v1363
                %v1365 = vld [vmem:[%s1171 + $0x600] sm:$0xff]
                %1366 = vst [vmem:[%s1172 + $0x300] sm:$0xff] %v1365
                %v1367 = vld [vmem:[%s1171 + $0x608] sm:$0xff]
                %1368 = vst [vmem:[%s1172 + $0x308] sm:$0xff] %v1367
                %v1369 = vld [vmem:[%s1171 + $0x620] sm:$0xff]
                %1370 = vst [vmem:[%s1172 + $0x310] sm:$0xff] %v1369
                %v1371 = vld [vmem:[%s1171 + $0x628] sm:$0xff]
                %1372 = vst [vmem:[%s1172 + $0x318] sm:$0xff] %v1371
                %v1373 = vld [vmem:[%s1171 + $0x640] sm:$0xff]
                %1374 = vst [vmem:[%s1172 + $0x320] sm:$0xff] %v1373
                %v1375 = vld [vmem:[%s1171 + $0x648] sm:$0xff]
                %1376 = vst [vmem:[%s1172 + $0x328] sm:$0xff] %v1375
                %v1377 = vld [vmem:[%s1171 + $0x660] sm:$0xff]
                %1378 = vst [vmem:[%s1172 + $0x330] sm:$0xff] %v1377
                %v1379 = vld [vmem:[%s1171 + $0x668] sm:$0xff]
                %1380 = vst [vmem:[%s1172 + $0x338] sm:$0xff] %v1379
                %v1381 = vld [vmem:[%s1171 + $0x680] sm:$0xff]
                %1382 = vst [vmem:[%s1172 + $0x340] sm:$0xff] %v1381
                %v1383 = vld [vmem:[%s1171 + $0x688] sm:$0xff]
                %1384 = vst [vmem:[%s1172 + $0x348] sm:$0xff] %v1383
                %v1385 = vld [vmem:[%s1171 + $0x6a0] sm:$0xff]
                %1386 = vst [vmem:[%s1172 + $0x350] sm:$0xff] %v1385
                %v1387 = vld [vmem:[%s1171 + $0x6a8] sm:$0xff]
                %1388 = vst [vmem:[%s1172 + $0x358] sm:$0xff] %v1387
                %v1389 = vld [vmem:[%s1171 + $0x6c0] sm:$0xff]
                %1390 = vst [vmem:[%s1172 + $0x360] sm:$0xff] %v1389
                %v1391 = vld [vmem:[%s1171 + $0x6c8] sm:$0xff]
                %1392 = vst [vmem:[%s1172 + $0x368] sm:$0xff] %v1391
                %v1393 = vld [vmem:[%s1171 + $0x6e0] sm:$0xff]
                %1394 = vst [vmem:[%s1172 + $0x370] sm:$0xff] %v1393
                %v1395 = vld [vmem:[%s1171 + $0x6e8] sm:$0xff]
                %1396 = vst [vmem:[%s1172 + $0x378] sm:$0xff] %v1395
                %v1397 = vld [vmem:[%s1171 + $0x700] sm:$0xff]
                %1398 = vst [vmem:[%s1172 + $0x380] sm:$0xff] %v1397
                %v1399 = vld [vmem:[%s1171 + $0x708] sm:$0xff]
                %1400 = vst [vmem:[%s1172 + $0x388] sm:$0xff] %v1399
                %v1401 = vld [vmem:[%s1171 + $0x720] sm:$0xff]
                %1402 = vst [vmem:[%s1172 + $0x390] sm:$0xff] %v1401
                %v1403 = vld [vmem:[%s1171 + $0x728] sm:$0xff]
                %1404 = vst [vmem:[%s1172 + $0x398] sm:$0xff] %v1403
                %v1405 = vld [vmem:[%s1171 + $0x740] sm:$0xff]
                %1406 = vst [vmem:[%s1172 + $0x3a0] sm:$0xff] %v1405
                %v1407 = vld [vmem:[%s1171 + $0x748] sm:$0xff]
                %1408 = vst [vmem:[%s1172 + $0x3a8] sm:$0xff] %v1407
                %v1409 = vld [vmem:[%s1171 + $0x760] sm:$0xff]
                %1410 = vst [vmem:[%s1172 + $0x3b0] sm:$0xff] %v1409
                %v1411 = vld [vmem:[%s1171 + $0x768] sm:$0xff]
                %1412 = vst [vmem:[%s1172 + $0x3b8] sm:$0xff] %v1411
                %v1413 = vld [vmem:[%s1171 + $0x780] sm:$0xff]
                %1414 = vst [vmem:[%s1172 + $0x3c0] sm:$0xff] %v1413
                %v1415 = vld [vmem:[%s1171 + $0x788] sm:$0xff]
                %1416 = vst [vmem:[%s1172 + $0x3c8] sm:$0xff] %v1415
                %v1417 = vld [vmem:[%s1171 + $0x7a0] sm:$0xff]
                %1418 = vst [vmem:[%s1172 + $0x3d0] sm:$0xff] %v1417
                %v1419 = vld [vmem:[%s1171 + $0x7a8] sm:$0xff]
                %1420 = vst [vmem:[%s1172 + $0x3d8] sm:$0xff] %v1419
                %v1421 = vld [vmem:[%s1171 + $0x7c0] sm:$0xff]
                %1422 = vst [vmem:[%s1172 + $0x3e0] sm:$0xff] %v1421
                %v1423 = vld [vmem:[%s1171 + $0x7c8] sm:$0xff]
                %1424 = vst [vmem:[%s1172 + $0x3e8] sm:$0xff] %v1423
                %v1425 = vld [vmem:[%s1171 + $0x7e0] sm:$0xff]
                %1426 = vst [vmem:[%s1172 + $0x3f0] sm:$0xff] %v1425
                %v1427 = vld [vmem:[%s1171 + $0x7e8] sm:$0xff]
                %1428 = vst [vmem:[%s1172 + $0x3f8] sm:$0xff] %v1427
              $region106: #{bayesian_linear_forward.1} parent=100 // loop_footer
                %s1170 = sadd.s32 1, %s1166
              $region107: #{bayesian_linear_forward.1} parent=100 // loop_footer_branch
                %1165 = sbr.rel target = $region103
              $region108: #{bayesian_linear_forward.1} parent=100 // loop_exit
                _
            $region101: #{bayesian_linear_forward.1} parent=96 // pred_fallthru
              _
            // Predicated region
            $region109: #{bayesian_linear_forward.1} parent=96 // pred_check
              _
            $region110: #{bayesian_linear_forward.1} parent=96 // pred_check_branch
              %1430 = sbr.rel target = $region112
            $region111: #{bayesian_linear_forward.1} parent=96 // pred_region
              _
            $region112: #{bayesian_linear_forward.1} parent=96 // pred_fallthru
              _
          $region97: #{bayesian_linear_forward.1} parent=92 // pred_fallthru
            _
          %1431 = vnop
        $region93: #{bayesian_linear_forward.1} parent=15 // pred_fallthru
          _
        // Predicated region
        $region113: #{bayesian_linear_forward.1} parent=15 // pred_check
          %p1432 = pneg %p184
        $region114: #{bayesian_linear_forward.1} parent=15 // pred_check_branch
          %1434 = sbr.rel (%p1432) target = $region116
        $region115: #{bayesian_linear_forward.1} parent=15 // pred_region
          %s1435 = smul.u32 2, %s21
          %p1436 = scmp.lt.s32.totalorder %s1435, 3
          %s1437 = scalar_select %p1436, %s1435, 3
          %s1438 = scalar_lea.vmem %s5, %s1437
          %s1439 = smul.u32 2, %s21
        $region116: #{bayesian_linear_forward.1} parent=15 // pred_fallthru
          _
        // Predicated region
        $region117: #{bayesian_linear_forward.1} parent=15 // pred_check
          %p1440 = pneg %p210
        $region118: #{bayesian_linear_forward.1} parent=15 // pred_check_branch
          %1442 = sbr.rel (%p1440) target = $region120
        $region119: #{bayesian_linear_forward.1} parent=15 // pred_region
          %s1443 = smul.u32 2, %s21
          %p1444 = scmp.lt.s32.totalorder %s1443, 3
          %s1445 = scalar_select %p1444, %s1443, 3
          %s1446 = scalar_lea.vmem %s6, %s1445
          %s1447 = smul.u32 2, %s21
        $region120: #{bayesian_linear_forward.1} parent=15 // pred_fallthru
          _
        // Predicated region
        $region121: #{bayesian_linear_forward.1} parent=15 // pred_check
          %p1448 = pneg %p236
        $region122: #{bayesian_linear_forward.1} parent=15 // pred_check_branch
          %1450 = sbr.rel (%p1448) target = $region124
        $region123: #{bayesian_linear_forward.1} parent=15 // pred_region
          %s1451 = smul.u32 2, %s21
          %p1452 = scmp.lt.s32.totalorder %s1451, 3
          %s1453 = scalar_select %p1452, %s1451, 3
          %s1454 = scalar_lea.vmem %s7, %s1453
          %s1455 = smul.u32 2, %s21
        $region124: #{bayesian_linear_forward.1} parent=15 // pred_fallthru
          _
      $region16: #{bayesian_linear_forward.1} parent=5 // pred_fallthru
        _
      %p1456 = scmp.le.s32.totalorder 1, %s14
      %p1457 = scmp.lt.s32.totalorder %s14, 5
      %p1458 = pnand %p1456, %p1457
      %p1459 = pneg %p1458
      // Predicated region
      $region125: #{bayesian_linear_forward.1} parent=5 // pred_check
        _
      $region126: #{bayesian_linear_forward.1} parent=5 // pred_check_branch
        %1461 = sbr.rel (%p1458) target = $region128
      $region127: #{bayesian_linear_forward.1} parent=5 // pred_region
        %s1462 = ssub.s32 %s14, 1
        %s1463 = sand.u32 %s67, 1
        %s1464 = sand.u32 %s67, 1
        %s1465 = smul.addr %s1464, 1024
        %s1466 = scalar_lea.vmem [#allocation3], %s1465
        // Predicated region
        $region129: #{bayesian_linear_forward.1} parent=127 // pred_check
          %p1467 = pneg %p80
        $region130: #{bayesian_linear_forward.1} parent=127 // pred_check_branch
          %1469 = sbr.rel (%p1467) target = $region132
        $region131: #{bayesian_linear_forward.1} parent=127 // pred_region
          _
        $region132: #{bayesian_linear_forward.1} parent=127 // pred_fallthru
          _
        %s1470 = sand.u32 %s95, 1
        %s1471 = sand.u32 %s95, 1
        %s1472 = smul.addr %s1471, 1024
        %s1473 = scalar_lea.vmem [#allocation4], %s1472
        // Predicated region
        $region133: #{bayesian_linear_forward.1} parent=127 // pred_check
          %p1474 = pneg %p108
        $region134: #{bayesian_linear_forward.1} parent=127 // pred_check_branch
          %1476 = sbr.rel (%p1474) target = $region136
        $region135: #{bayesian_linear_forward.1} parent=127 // pred_region
          _
        $region136: #{bayesian_linear_forward.1} parent=127 // pred_fallthru
          _
        %s1477 = sand.u32 %s123, 1
        %s1478 = sand.u32 %s123, 1
        %s1479 = smul.addr %s1478, 1024
        %s1480 = scalar_lea.vmem [#allocation5], %s1479
        // Predicated region
        $region137: #{bayesian_linear_forward.1} parent=127 // pred_check
          %p1481 = pneg %p136
        $region138: #{bayesian_linear_forward.1} parent=127 // pred_check_branch
          %1483 = sbr.rel (%p1481) target = $region140
        $region139: #{bayesian_linear_forward.1} parent=127 // pred_region
          _
        $region140: #{bayesian_linear_forward.1} parent=127 // pred_fallthru
          _
        %s1484 = sand.u32 %s151, 1
        %s1485 = sand.u32 %s151, 1
        %s1486 = smul.addr %s1485, 1024
        %s1487 = scalar_lea.vmem [#allocation6], %s1486
        // Predicated region
        $region141: #{bayesian_linear_forward.1} parent=127 // pred_check
          %p1488 = pneg %p164
        $region142: #{bayesian_linear_forward.1} parent=127 // pred_check_branch
          %1490 = sbr.rel (%p1488) target = $region144
        $region143: #{bayesian_linear_forward.1} parent=127 // pred_region
          _
        $region144: #{bayesian_linear_forward.1} parent=127 // pred_fallthru
          _
        %s1491 = smul.u32 4, %s24
        %p1492 = scmp.lt.s32.totalorder %s1491, 7
        %s1493 = scalar_select %p1492, %s1491, 7
        %s1494 = smul.addr %s1493, 8
        %s1495 = scalar_lea.vmem %s0, %s1494
        %p1496 = pneg %p52
        %p1497 = pneg %p49
        %s1498 = sand.u32 %s67, 1
        %s1499 = sand.u32 %s67, 1
        %s1500 = smul.addr %s1499, 1024
        %s1501 = scalar_lea.vmem [#allocation3], %s1500
        %p1502 = pneg %p80
        %p1503 = pneg %p77
        %s1504 = sand.u32 %s95, 1
        %s1505 = sand.u32 %s95, 1
        %s1506 = smul.addr %s1505, 1024
        %s1507 = scalar_lea.vmem [#allocation4], %s1506
        %p1508 = pneg %p108
        %p1509 = pneg %p105
        %s1510 = sand.u32 %s123, 1
        %s1511 = sand.u32 %s123, 1
        %s1512 = smul.addr %s1511, 1024
        %s1513 = scalar_lea.vmem [#allocation5], %s1512
        %p1514 = pneg %p136
        %p1515 = pneg %p133
        %s1516 = sand.u32 %s151, 1
        %s1517 = sand.u32 %s151, 1
        %s1518 = smul.addr %s1517, 1024
        %s1519 = scalar_lea.vmem [#allocation6], %s1518
        %p1520 = pneg %p164
        %p1521 = pneg %p161
        %s1522 = smul.u32 2, %s23
        %p1523 = scmp.lt.s32.totalorder %s1522, 3
        %s1524 = scalar_select %p1523, %s1522, 3
        %s1525 = scalar_lea.vmem %s5, %s1524
        %p1526 = pneg %p190
        %p1527 = pneg %p187
        %s1528 = smul.u32 2, %s23
        %p1529 = scmp.lt.s32.totalorder %s1528, 3
        %s1530 = scalar_select %p1529, %s1528, 3
        %s1531 = scalar_lea.vmem %s6, %s1530
        %p1532 = pneg %p216
        %p1533 = pneg %p213
        %s1534 = smul.u32 2, %s23
        %p1535 = scmp.lt.s32.totalorder %s1534, 3
        %s1536 = scalar_select %p1535, %s1534, 3
        %s1537 = scalar_lea.vmem %s7, %s1536
        %p1538 = pneg %p242
        %p1539 = pneg %p239
        %p1540 = pneg %p268
        %p1541 = pneg %p265
        %s1542 = smul.u32 2, %s23
        %p1543 = scmp.lt.s32.totalorder %s1542, 3
        %s1544 = scalar_select %p1543, %s1542, 3
        %s1545 = smul.addr %s1544, 8
        %s1546 = scalar_lea.vmem %s8, %s1545
        %s1547 = smul.u32 4, %s24
        %p1548 = scmp.lt.s32.totalorder %s1547, 7
        %s1549 = scalar_select %p1548, %s1547, 7
        %s1550 = smul.addr %s1549, 8
        %s1551 = scalar_lea.vmem %s0, %s1550
        %s1552 = smul.u32 4, %s24
        %s1553 = smul.u32 64, %s24
        %s1554 = smul.u32 2, %s23
        %s1555 = smul.u32 64, %s24
        %s1556 = smul.u32 2, %s23
        %s1557 = smul.u32 64, %s24
        %s1558 = smul.u32 2, %s23
        %s1559 = smul.u32 64, %s24
        %s1560 = smul.u32 2, %s23
        %s1561 = smul.u32 2, %s23
        %p1562 = scmp.lt.s32.totalorder %s1561, 3
        %s1563 = scalar_select %p1562, %s1561, 3
        %s1564 = scalar_lea.vmem %s5, %s1563
        %s1565 = smul.u32 2, %s23
        %s1566 = smul.u32 2, %s23
        %p1567 = scmp.lt.s32.totalorder %s1566, 3
        %s1568 = scalar_select %p1567, %s1566, 3
        %s1569 = scalar_lea.vmem %s6, %s1568
        %s1570 = smul.u32 2, %s23
        %s1571 = smul.u32 2, %s23
        %p1572 = scmp.lt.s32.totalorder %s1571, 3
        %s1573 = scalar_select %p1572, %s1571, 3
        %s1574 = scalar_lea.vmem %s7, %s1573
        %s1575 = smul.u32 2, %s23
        %s1576 = smul.u32 2, %s23
        %p1577 = scmp.lt.s32.totalorder %s1576, 3
        %s1578 = scalar_select %p1577, %s1576, 3
        %s1579 = smul.addr %s1578, 8
        %s1580 = scalar_lea.vmem %s8, %s1579
        %s1581 = smul.u32 2, %s23
        %p1582 = scmp.eq.s32.totalorder %s24, 0
        // Predicated region
        $region145: #{bayesian_linear_forward.1} parent=127 // pred_check
          %p1583 = pneg %p1582
        $region146: #{bayesian_linear_forward.1} parent=127 // pred_check_branch
          %1585 = sbr.rel (%p1583) target = $region148
        $region147: #{bayesian_linear_forward.1} parent=127 // pred_region
          %1586 = vst [vmem:[#allocation2] sm:$0xff] 0.0
          %1587 = vst [vmem:[#allocation2 + $0x8] sm:$0xff] 0.0
        $region148: #{bayesian_linear_forward.1} parent=127 // pred_fallthru
          _
        %v1588 = vld [vmem:[%s1473] sm:$0xff]
        %v1589 = vld [vmem:[%s1473 + $0x8] sm:$0xff]
        %v1590 = vld [vmem:[%s1473 + $0x10] sm:$0xff]
        %v1591 = vld [vmem:[%s1473 + $0x18] sm:$0xff]
        %v1592 = vld [vmem:[%s1473 + $0x20] sm:$0xff]
        %v1593 = vld [vmem:[%s1473 + $0x28] sm:$0xff]
        %v1594 = vld [vmem:[%s1473 + $0x30] sm:$0xff]
        %v1595 = vld [vmem:[%s1473 + $0x38] sm:$0xff]
        %v1596 = vld [vmem:[%s1473 + $0x40] sm:$0xff]
        %v1597 = vld [vmem:[%s1473 + $0x48] sm:$0xff]
        %v1598 = vld [vmem:[%s1473 + $0x50] sm:$0xff]
        %v1599 = vld [vmem:[%s1473 + $0x58] sm:$0xff]
        %v1600 = vld [vmem:[%s1473 + $0x60] sm:$0xff]
        %v1601 = vld [vmem:[%s1473 + $0x68] sm:$0xff]
        %v1602 = vld [vmem:[%s1473 + $0x70] sm:$0xff]
        %v1603 = vld [vmem:[%s1473 + $0x78] sm:$0xff]
        %v1604 = vld [vmem:[%s1473 + $0x80] sm:$0xff]
        %v1605 = vld [vmem:[%s1473 + $0x88] sm:$0xff]
        %v1606 = vld [vmem:[%s1473 + $0x90] sm:$0xff]
        %v1607 = vld [vmem:[%s1473 + $0x98] sm:$0xff]
        %v1608 = vld [vmem:[%s1473 + $0xa0] sm:$0xff]
        %v1609 = vld [vmem:[%s1473 + $0xa8] sm:$0xff]
        %v1610 = vld [vmem:[%s1473 + $0xb0] sm:$0xff]
        %v1611 = vld [vmem:[%s1473 + $0xb8] sm:$0xff]
        %v1612 = vld [vmem:[%s1473 + $0xc0] sm:$0xff]
        %v1613 = vld [vmem:[%s1473 + $0xc8] sm:$0xff]
        %v1614 = vld [vmem:[%s1473 + $0xd0] sm:$0xff]
        %v1615 = vld [vmem:[%s1473 + $0xd8] sm:$0xff]
        %v1616 = vld [vmem:[%s1473 + $0xe0] sm:$0xff]
        %v1617 = vld [vmem:[%s1473 + $0xe8] sm:$0xff]
        %v1618 = vld [vmem:[%s1473 + $0xf0] sm:$0xff]
        %v1619 = vld [vmem:[%s1473 + $0xf8] sm:$0xff]
        %v1620 = vld [vmem:[%s1473 + $0x100] sm:$0xff]
        %v1621 = vld [vmem:[%s1473 + $0x108] sm:$0xff]
        %v1622 = vld [vmem:[%s1473 + $0x110] sm:$0xff]
        %v1623 = vld [vmem:[%s1473 + $0x118] sm:$0xff]
        %v1624 = vld [vmem:[%s1473 + $0x120] sm:$0xff]
        %v1625 = vld [vmem:[%s1473 + $0x128] sm:$0xff]
        %v1626 = vld [vmem:[%s1473 + $0x130] sm:$0xff]
        %v1627 = vld [vmem:[%s1473 + $0x138] sm:$0xff]
        %v1628 = vld [vmem:[%s1473 + $0x140] sm:$0xff]
        %v1629 = vld [vmem:[%s1473 + $0x148] sm:$0xff]
        %v1630 = vld [vmem:[%s1473 + $0x150] sm:$0xff]
        %v1631 = vld [vmem:[%s1473 + $0x158] sm:$0xff]
        %v1632 = vld [vmem:[%s1473 + $0x160] sm:$0xff]
        %v1633 = vld [vmem:[%s1473 + $0x168] sm:$0xff]
        %v1634 = vld [vmem:[%s1473 + $0x170] sm:$0xff]
        %v1635 = vld [vmem:[%s1473 + $0x178] sm:$0xff]
        %v1636 = vld [vmem:[%s1473 + $0x180] sm:$0xff]
        %v1637 = vld [vmem:[%s1473 + $0x188] sm:$0xff]
        %v1638 = vld [vmem:[%s1473 + $0x190] sm:$0xff]
        %v1639 = vld [vmem:[%s1473 + $0x198] sm:$0xff]
        %v1640 = vld [vmem:[%s1473 + $0x1a0] sm:$0xff]
        %v1641 = vld [vmem:[%s1473 + $0x1a8] sm:$0xff]
        %v1642 = vld [vmem:[%s1473 + $0x1b0] sm:$0xff]
        %v1643 = vld [vmem:[%s1473 + $0x1b8] sm:$0xff]
        %v1644 = vld [vmem:[%s1473 + $0x1c0] sm:$0xff]
        %v1645 = vld [vmem:[%s1473 + $0x1c8] sm:$0xff]
        %v1646 = vld [vmem:[%s1473 + $0x1d0] sm:$0xff]
        %v1647 = vld [vmem:[%s1473 + $0x1d8] sm:$0xff]
        %v1648 = vld [vmem:[%s1473 + $0x1e0] sm:$0xff]
        %v1649 = vld [vmem:[%s1473 + $0x1e8] sm:$0xff]
        %v1650 = vld [vmem:[%s1473 + $0x1f0] sm:$0xff]
        %v1651 = vld [vmem:[%s1473 + $0x1f8] sm:$0xff]
        %v1652 = vld [vmem:[%s1473 + $0x200] sm:$0xff]
        %v1653 = vld [vmem:[%s1473 + $0x208] sm:$0xff]
        %v1654 = vld [vmem:[%s1473 + $0x210] sm:$0xff]
        %v1655 = vld [vmem:[%s1473 + $0x218] sm:$0xff]
        %v1656 = vld [vmem:[%s1473 + $0x220] sm:$0xff]
        %v1657 = vld [vmem:[%s1473 + $0x228] sm:$0xff]
        %v1658 = vld [vmem:[%s1473 + $0x230] sm:$0xff]
        %v1659 = vld [vmem:[%s1473 + $0x238] sm:$0xff]
        %v1660 = vld [vmem:[%s1473 + $0x240] sm:$0xff]
        %v1661 = vld [vmem:[%s1473 + $0x248] sm:$0xff]
        %v1662 = vld [vmem:[%s1473 + $0x250] sm:$0xff]
        %v1663 = vld [vmem:[%s1473 + $0x258] sm:$0xff]
        %v1664 = vld [vmem:[%s1473 + $0x260] sm:$0xff]
        %v1665 = vld [vmem:[%s1473 + $0x268] sm:$0xff]
        %v1666 = vld [vmem:[%s1473 + $0x270] sm:$0xff]
        %v1667 = vld [vmem:[%s1473 + $0x278] sm:$0xff]
        %v1668 = vld [vmem:[%s1473 + $0x280] sm:$0xff]
        %v1669 = vld [vmem:[%s1473 + $0x288] sm:$0xff]
        %v1670 = vld [vmem:[%s1473 + $0x290] sm:$0xff]
        %v1671 = vld [vmem:[%s1473 + $0x298] sm:$0xff]
        %v1672 = vld [vmem:[%s1473 + $0x2a0] sm:$0xff]
        %v1673 = vld [vmem:[%s1473 + $0x2a8] sm:$0xff]
        %v1674 = vld [vmem:[%s1473 + $0x2b0] sm:$0xff]
        %v1675 = vld [vmem:[%s1473 + $0x2b8] sm:$0xff]
        %v1676 = vld [vmem:[%s1473 + $0x2c0] sm:$0xff]
        %v1677 = vld [vmem:[%s1473 + $0x2c8] sm:$0xff]
        %v1678 = vld [vmem:[%s1473 + $0x2d0] sm:$0xff]
        %v1679 = vld [vmem:[%s1473 + $0x2d8] sm:$0xff]
        %v1680 = vld [vmem:[%s1473 + $0x2e0] sm:$0xff]
        %v1681 = vld [vmem:[%s1473 + $0x2e8] sm:$0xff]
        %v1682 = vld [vmem:[%s1473 + $0x2f0] sm:$0xff]
        %v1683 = vld [vmem:[%s1473 + $0x2f8] sm:$0xff]
        %v1684 = vld [vmem:[%s1473 + $0x300] sm:$0xff]
        %v1685 = vld [vmem:[%s1473 + $0x308] sm:$0xff]
        %v1686 = vld [vmem:[%s1473 + $0x310] sm:$0xff]
        %v1687 = vld [vmem:[%s1473 + $0x318] sm:$0xff]
        %v1688 = vld [vmem:[%s1473 + $0x320] sm:$0xff]
        %v1689 = vld [vmem:[%s1473 + $0x328] sm:$0xff]
        %v1690 = vld [vmem:[%s1473 + $0x330] sm:$0xff]
        %v1691 = vld [vmem:[%s1473 + $0x338] sm:$0xff]
        %v1692 = vld [vmem:[%s1473 + $0x340] sm:$0xff]
        %v1693 = vld [vmem:[%s1473 + $0x348] sm:$0xff]
        %v1694 = vld [vmem:[%s1473 + $0x350] sm:$0xff]
        %v1695 = vld [vmem:[%s1473 + $0x358] sm:$0xff]
        %v1696 = vld [vmem:[%s1473 + $0x360] sm:$0xff]
        %v1697 = vld [vmem:[%s1473 + $0x368] sm:$0xff]
        %v1698 = vld [vmem:[%s1473 + $0x370] sm:$0xff]
        %v1699 = vld [vmem:[%s1473 + $0x378] sm:$0xff]
        %v1700 = vld [vmem:[%s1473 + $0x380] sm:$0xff]
        %v1701 = vld [vmem:[%s1473 + $0x388] sm:$0xff]
        %v1702 = vld [vmem:[%s1473 + $0x390] sm:$0xff]
        %v1703 = vld [vmem:[%s1473 + $0x398] sm:$0xff]
        %v1704 = vld [vmem:[%s1473 + $0x3a0] sm:$0xff]
        %v1705 = vld [vmem:[%s1473 + $0x3a8] sm:$0xff]
        %v1706 = vld [vmem:[%s1473 + $0x3b0] sm:$0xff]
        %v1707 = vld [vmem:[%s1473 + $0x3b8] sm:$0xff]
        %v1708 = vld [vmem:[%s1473 + $0x3c0] sm:$0xff]
        %v1709 = vld [vmem:[%s1473 + $0x3c8] sm:$0xff]
        %v1710 = vld [vmem:[%s1473 + $0x3d0] sm:$0xff]
        %v1711 = vld [vmem:[%s1473 + $0x3d8] sm:$0xff]
        %v1712 = vld [vmem:[%s1473 + $0x3e0] sm:$0xff]
        %v1713 = vld [vmem:[%s1473 + $0x3e8] sm:$0xff]
        %v1714 = vld [vmem:[%s1473 + $0x3f0] sm:$0xff]
        %v1715 = vld [vmem:[%s1473 + $0x3f8] sm:$0xff]
        %vm1716 = vcmp.gt.f32.partialorder %v1588, 20.0
        %vm1717 = vcmp.gt.f32.partialorder %v1589, 20.0
        %vm1718 = vcmp.gt.f32.partialorder %v1590, 20.0
        %vm1719 = vcmp.gt.f32.partialorder %v1591, 20.0
        %vm1720 = vcmp.gt.f32.partialorder %v1592, 20.0
        %vm1721 = vcmp.gt.f32.partialorder %v1593, 20.0
        %vm1722 = vcmp.gt.f32.partialorder %v1594, 20.0
        %vm1723 = vcmp.gt.f32.partialorder %v1595, 20.0
        %vm1724 = vcmp.gt.f32.partialorder %v1596, 20.0
        %vm1725 = vcmp.gt.f32.partialorder %v1597, 20.0
        %vm1726 = vcmp.gt.f32.partialorder %v1598, 20.0
        %vm1727 = vcmp.gt.f32.partialorder %v1599, 20.0
        %vm1728 = vcmp.gt.f32.partialorder %v1600, 20.0
        %vm1729 = vcmp.gt.f32.partialorder %v1601, 20.0
        %vm1730 = vcmp.gt.f32.partialorder %v1602, 20.0
        %vm1731 = vcmp.gt.f32.partialorder %v1603, 20.0
        %vm1732 = vcmp.gt.f32.partialorder %v1604, 20.0
        %vm1733 = vcmp.gt.f32.partialorder %v1605, 20.0
        %vm1734 = vcmp.gt.f32.partialorder %v1606, 20.0
        %vm1735 = vcmp.gt.f32.partialorder %v1607, 20.0
        %vm1736 = vcmp.gt.f32.partialorder %v1608, 20.0
        %vm1737 = vcmp.gt.f32.partialorder %v1609, 20.0
        %vm1738 = vcmp.gt.f32.partialorder %v1610, 20.0
        %vm1739 = vcmp.gt.f32.partialorder %v1611, 20.0
        %vm1740 = vcmp.gt.f32.partialorder %v1612, 20.0
        %vm1741 = vcmp.gt.f32.partialorder %v1613, 20.0
        %vm1742 = vcmp.gt.f32.partialorder %v1614, 20.0
        %vm1743 = vcmp.gt.f32.partialorder %v1615, 20.0
        %vm1744 = vcmp.gt.f32.partialorder %v1616, 20.0
        %vm1745 = vcmp.gt.f32.partialorder %v1617, 20.0
        %vm1746 = vcmp.gt.f32.partialorder %v1618, 20.0
        %vm1747 = vcmp.gt.f32.partialorder %v1619, 20.0
        %vm1748 = vcmp.gt.f32.partialorder %v1620, 20.0
        %vm1749 = vcmp.gt.f32.partialorder %v1621, 20.0
        %vm1750 = vcmp.gt.f32.partialorder %v1622, 20.0
        %vm1751 = vcmp.gt.f32.partialorder %v1623, 20.0
        %vm1752 = vcmp.gt.f32.partialorder %v1624, 20.0
        %vm1753 = vcmp.gt.f32.partialorder %v1625, 20.0
        %vm1754 = vcmp.gt.f32.partialorder %v1626, 20.0
        %vm1755 = vcmp.gt.f32.partialorder %v1627, 20.0
        %vm1756 = vcmp.gt.f32.partialorder %v1628, 20.0
        %vm1757 = vcmp.gt.f32.partialorder %v1629, 20.0
        %vm1758 = vcmp.gt.f32.partialorder %v1630, 20.0
        %vm1759 = vcmp.gt.f32.partialorder %v1631, 20.0
        %vm1760 = vcmp.gt.f32.partialorder %v1632, 20.0
        %vm1761 = vcmp.gt.f32.partialorder %v1633, 20.0
        %vm1762 = vcmp.gt.f32.partialorder %v1634, 20.0
        %vm1763 = vcmp.gt.f32.partialorder %v1635, 20.0
        %vm1764 = vcmp.gt.f32.partialorder %v1636, 20.0
        %vm1765 = vcmp.gt.f32.partialorder %v1637, 20.0
        %vm1766 = vcmp.gt.f32.partialorder %v1638, 20.0
        %vm1767 = vcmp.gt.f32.partialorder %v1639, 20.0
        %vm1768 = vcmp.gt.f32.partialorder %v1640, 20.0
        %vm1769 = vcmp.gt.f32.partialorder %v1641, 20.0
        %vm1770 = vcmp.gt.f32.partialorder %v1642, 20.0
        %vm1771 = vcmp.gt.f32.partialorder %v1643, 20.0
        %vm1772 = vcmp.gt.f32.partialorder %v1644, 20.0
        %vm1773 = vcmp.gt.f32.partialorder %v1645, 20.0
        %vm1774 = vcmp.gt.f32.partialorder %v1646, 20.0
        %vm1775 = vcmp.gt.f32.partialorder %v1647, 20.0
        %vm1776 = vcmp.gt.f32.partialorder %v1648, 20.0
        %vm1777 = vcmp.gt.f32.partialorder %v1649, 20.0
        %vm1778 = vcmp.gt.f32.partialorder %v1650, 20.0
        %vm1779 = vcmp.gt.f32.partialorder %v1651, 20.0
        %vm1780 = vcmp.gt.f32.partialorder %v1652, 20.0
        %vm1781 = vcmp.gt.f32.partialorder %v1653, 20.0
        %vm1782 = vcmp.gt.f32.partialorder %v1654, 20.0
        %vm1783 = vcmp.gt.f32.partialorder %v1655, 20.0
        %vm1784 = vcmp.gt.f32.partialorder %v1656, 20.0
        %vm1785 = vcmp.gt.f32.partialorder %v1657, 20.0
        %vm1786 = vcmp.gt.f32.partialorder %v1658, 20.0
        %vm1787 = vcmp.gt.f32.partialorder %v1659, 20.0
        %vm1788 = vcmp.gt.f32.partialorder %v1660, 20.0
        %vm1789 = vcmp.gt.f32.partialorder %v1661, 20.0
        %vm1790 = vcmp.gt.f32.partialorder %v1662, 20.0
        %vm1791 = vcmp.gt.f32.partialorder %v1663, 20.0
        %vm1792 = vcmp.gt.f32.partialorder %v1664, 20.0
        %vm1793 = vcmp.gt.f32.partialorder %v1665, 20.0
        %vm1794 = vcmp.gt.f32.partialorder %v1666, 20.0
        %vm1795 = vcmp.gt.f32.partialorder %v1667, 20.0
        %vm1796 = vcmp.gt.f32.partialorder %v1668, 20.0
        %vm1797 = vcmp.gt.f32.partialorder %v1669, 20.0
        %vm1798 = vcmp.gt.f32.partialorder %v1670, 20.0
        %vm1799 = vcmp.gt.f32.partialorder %v1671, 20.0
        %vm1800 = vcmp.gt.f32.partialorder %v1672, 20.0
        %vm1801 = vcmp.gt.f32.partialorder %v1673, 20.0
        %vm1802 = vcmp.gt.f32.partialorder %v1674, 20.0
        %vm1803 = vcmp.gt.f32.partialorder %v1675, 20.0
        %vm1804 = vcmp.gt.f32.partialorder %v1676, 20.0
        %vm1805 = vcmp.gt.f32.partialorder %v1677, 20.0
        %vm1806 = vcmp.gt.f32.partialorder %v1678, 20.0
        %vm1807 = vcmp.gt.f32.partialorder %v1679, 20.0
        %vm1808 = vcmp.gt.f32.partialorder %v1680, 20.0
        %vm1809 = vcmp.gt.f32.partialorder %v1681, 20.0
        %vm1810 = vcmp.gt.f32.partialorder %v1682, 20.0
        %vm1811 = vcmp.gt.f32.partialorder %v1683, 20.0
        %vm1812 = vcmp.gt.f32.partialorder %v1684, 20.0
        %vm1813 = vcmp.gt.f32.partialorder %v1685, 20.0
        %vm1814 = vcmp.gt.f32.partialorder %v1686, 20.0
        %vm1815 = vcmp.gt.f32.partialorder %v1687, 20.0
        %vm1816 = vcmp.gt.f32.partialorder %v1688, 20.0
        %vm1817 = vcmp.gt.f32.partialorder %v1689, 20.0
        %vm1818 = vcmp.gt.f32.partialorder %v1690, 20.0
        %vm1819 = vcmp.gt.f32.partialorder %v1691, 20.0
        %vm1820 = vcmp.gt.f32.partialorder %v1692, 20.0
        %vm1821 = vcmp.gt.f32.partialorder %v1693, 20.0
        %vm1822 = vcmp.gt.f32.partialorder %v1694, 20.0
        %vm1823 = vcmp.gt.f32.partialorder %v1695, 20.0
        %vm1824 = vcmp.gt.f32.partialorder %v1696, 20.0
        %vm1825 = vcmp.gt.f32.partialorder %v1697, 20.0
        %vm1826 = vcmp.gt.f32.partialorder %v1698, 20.0
        %vm1827 = vcmp.gt.f32.partialorder %v1699, 20.0
        %vm1828 = vcmp.gt.f32.partialorder %v1700, 20.0
        %vm1829 = vcmp.gt.f32.partialorder %v1701, 20.0
        %vm1830 = vcmp.gt.f32.partialorder %v1702, 20.0
        %vm1831 = vcmp.gt.f32.partialorder %v1703, 20.0
        %vm1832 = vcmp.gt.f32.partialorder %v1704, 20.0
        %vm1833 = vcmp.gt.f32.partialorder %v1705, 20.0
        %vm1834 = vcmp.gt.f32.partialorder %v1706, 20.0
        %vm1835 = vcmp.gt.f32.partialorder %v1707, 20.0
        %vm1836 = vcmp.gt.f32.partialorder %v1708, 20.0
        %vm1837 = vcmp.gt.f32.partialorder %v1709, 20.0
        %vm1838 = vcmp.gt.f32.partialorder %v1710, 20.0
        %vm1839 = vcmp.gt.f32.partialorder %v1711, 20.0
        %vm1840 = vcmp.gt.f32.partialorder %v1712, 20.0
        %vm1841 = vcmp.gt.f32.partialorder %v1713, 20.0
        %vm1842 = vcmp.gt.f32.partialorder %v1714, 20.0
        %vm1843 = vcmp.gt.f32.partialorder %v1715, 20.0
        %v1844 = vmin.f32 %v1588, 20.0
        %v1845 = vmin.f32 %v1589, 20.0
        %v1846 = vmin.f32 %v1590, 20.0
        %v1847 = vmin.f32 %v1591, 20.0
        %v1848 = vmin.f32 %v1592, 20.0
        %v1849 = vmin.f32 %v1593, 20.0
        %v1850 = vmin.f32 %v1594, 20.0
        %v1851 = vmin.f32 %v1595, 20.0
        %v1852 = vmin.f32 %v1596, 20.0
        %v1853 = vmin.f32 %v1597, 20.0
        %v1854 = vmin.f32 %v1598, 20.0
        %v1855 = vmin.f32 %v1599, 20.0
        %v1856 = vmin.f32 %v1600, 20.0
        %v1857 = vmin.f32 %v1601, 20.0
        %v1858 = vmin.f32 %v1602, 20.0
        %v1859 = vmin.f32 %v1603, 20.0
        %v1860 = vmin.f32 %v1604, 20.0
        %v1861 = vmin.f32 %v1605, 20.0
        %v1862 = vmin.f32 %v1606, 20.0
        %v1863 = vmin.f32 %v1607, 20.0
        %v1864 = vmin.f32 %v1608, 20.0
        %v1865 = vmin.f32 %v1609, 20.0
        %v1866 = vmin.f32 %v1610, 20.0
        %v1867 = vmin.f32 %v1611, 20.0
        %v1868 = vmin.f32 %v1612, 20.0
        %v1869 = vmin.f32 %v1613, 20.0
        %v1870 = vmin.f32 %v1614, 20.0
        %v1871 = vmin.f32 %v1615, 20.0
        %v1872 = vmin.f32 %v1616, 20.0
        %v1873 = vmin.f32 %v1617, 20.0
        %v1874 = vmin.f32 %v1618, 20.0
        %v1875 = vmin.f32 %v1619, 20.0
        %v1876 = vmin.f32 %v1620, 20.0
        %v1877 = vmin.f32 %v1621, 20.0
        %v1878 = vmin.f32 %v1622, 20.0
        %v1879 = vmin.f32 %v1623, 20.0
        %v1880 = vmin.f32 %v1624, 20.0
        %v1881 = vmin.f32 %v1625, 20.0
        %v1882 = vmin.f32 %v1626, 20.0
        %v1883 = vmin.f32 %v1627, 20.0
        %v1884 = vmin.f32 %v1628, 20.0
        %v1885 = vmin.f32 %v1629, 20.0
        %v1886 = vmin.f32 %v1630, 20.0
        %v1887 = vmin.f32 %v1631, 20.0
        %v1888 = vmin.f32 %v1632, 20.0
        %v1889 = vmin.f32 %v1633, 20.0
        %v1890 = vmin.f32 %v1634, 20.0
        %v1891 = vmin.f32 %v1635, 20.0
        %v1892 = vmin.f32 %v1636, 20.0
        %v1893 = vmin.f32 %v1637, 20.0
        %v1894 = vmin.f32 %v1638, 20.0
        %v1895 = vmin.f32 %v1639, 20.0
        %v1896 = vmin.f32 %v1640, 20.0
        %v1897 = vmin.f32 %v1641, 20.0
        %v1898 = vmin.f32 %v1642, 20.0
        %v1899 = vmin.f32 %v1643, 20.0
        %v1900 = vmin.f32 %v1644, 20.0
        %v1901 = vmin.f32 %v1645, 20.0
        %v1902 = vmin.f32 %v1646, 20.0
        %v1903 = vmin.f32 %v1647, 20.0
        %v1904 = vmin.f32 %v1648, 20.0
        %v1905 = vmin.f32 %v1649, 20.0
        %v1906 = vmin.f32 %v1650, 20.0
        %v1907 = vmin.f32 %v1651, 20.0
        %v1908 = vmin.f32 %v1652, 20.0
        %v1909 = vmin.f32 %v1653, 20.0
        %v1910 = vmin.f32 %v1654, 20.0
        %v1911 = vmin.f32 %v1655, 20.0
        %v1912 = vmin.f32 %v1656, 20.0
        %v1913 = vmin.f32 %v1657, 20.0
        %v1914 = vmin.f32 %v1658, 20.0
        %v1915 = vmin.f32 %v1659, 20.0
        %v1916 = vmin.f32 %v1660, 20.0
        %v1917 = vmin.f32 %v1661, 20.0
        %v1918 = vmin.f32 %v1662, 20.0
        %v1919 = vmin.f32 %v1663, 20.0
        %v1920 = vmin.f32 %v1664, 20.0
        %v1921 = vmin.f32 %v1665, 20.0
        %v1922 = vmin.f32 %v1666, 20.0
        %v1923 = vmin.f32 %v1667, 20.0
        %v1924 = vmin.f32 %v1668, 20.0
        %v1925 = vmin.f32 %v1669, 20.0
        %v1926 = vmin.f32 %v1670, 20.0
        %v1927 = vmin.f32 %v1671, 20.0
        %v1928 = vmin.f32 %v1672, 20.0
        %v1929 = vmin.f32 %v1673, 20.0
        %v1930 = vmin.f32 %v1674, 20.0
        %v1931 = vmin.f32 %v1675, 20.0
        %v1932 = vmin.f32 %v1676, 20.0
        %v1933 = vmin.f32 %v1677, 20.0
        %v1934 = vmin.f32 %v1678, 20.0
        %v1935 = vmin.f32 %v1679, 20.0
        %v1936 = vmin.f32 %v1680, 20.0
        %v1937 = vmin.f32 %v1681, 20.0
        %v1938 = vmin.f32 %v1682, 20.0
        %v1939 = vmin.f32 %v1683, 20.0
        %v1940 = vmin.f32 %v1684, 20.0
        %v1941 = vmin.f32 %v1685, 20.0
        %v1942 = vmin.f32 %v1686, 20.0
        %v1943 = vmin.f32 %v1687, 20.0
        %v1944 = vmin.f32 %v1688, 20.0
        %v1945 = vmin.f32 %v1689, 20.0
        %v1946 = vmin.f32 %v1690, 20.0
        %v1947 = vmin.f32 %v1691, 20.0
        %v1948 = vmin.f32 %v1692, 20.0
        %v1949 = vmin.f32 %v1693, 20.0
        %v1950 = vmin.f32 %v1694, 20.0
        %v1951 = vmin.f32 %v1695, 20.0
        %v1952 = vmin.f32 %v1696, 20.0
        %v1953 = vmin.f32 %v1697, 20.0
        %v1954 = vmin.f32 %v1698, 20.0
        %v1955 = vmin.f32 %v1699, 20.0
        %v1956 = vmin.f32 %v1700, 20.0
        %v1957 = vmin.f32 %v1701, 20.0
        %v1958 = vmin.f32 %v1702, 20.0
        %v1959 = vmin.f32 %v1703, 20.0
        %v1960 = vmin.f32 %v1704, 20.0
        %v1961 = vmin.f32 %v1705, 20.0
        %v1962 = vmin.f32 %v1706, 20.0
        %v1963 = vmin.f32 %v1707, 20.0
        %v1964 = vmin.f32 %v1708, 20.0
        %v1965 = vmin.f32 %v1709, 20.0
        %v1966 = vmin.f32 %v1710, 20.0
        %v1967 = vmin.f32 %v1711, 20.0
        %v1968 = vmin.f32 %v1712, 20.0
        %v1969 = vmin.f32 %v1713, 20.0
        %v1970 = vmin.f32 %v1714, 20.0
        %v1971 = vmin.f32 %v1715, 20.0
        %v1972 = vmul.f32 %v1844, 1.442695
        %v1973 = vpow.pop %v1972
        %v1974 = vmul.f32 %v1845, 1.442695
        %v1975 = vpow.pop %v1974
        %v1976 = vmul.f32 %v1846, 1.442695
        %v1977 = vpow.pop %v1976
        %v1978 = vmul.f32 %v1847, 1.442695
        %v1979 = vpow.pop %v1978
        %v1980 = vmul.f32 %v1848, 1.442695
        %v1981 = vpow.pop %v1980
        %v1982 = vmul.f32 %v1849, 1.442695
        %v1983 = vpow.pop %v1982
        %v1984 = vmul.f32 %v1850, 1.442695
        %v1985 = vpow.pop %v1984
        %v1986 = vmul.f32 %v1851, 1.442695
        %v1987 = vpow.pop %v1986
        %v1988 = vmul.f32 %v1852, 1.442695
        %v1989 = vpow.pop %v1988
        %v1990 = vmul.f32 %v1853, 1.442695
        %v1991 = vpow.pop %v1990
        %v1992 = vmul.f32 %v1854, 1.442695
        %v1993 = vpow.pop %v1992
        %v1994 = vmul.f32 %v1855, 1.442695
        %v1995 = vpow.pop %v1994
        %v1996 = vmul.f32 %v1856, 1.442695
        %v1997 = vpow.pop %v1996
        %v1998 = vmul.f32 %v1857, 1.442695
        %v1999 = vpow.pop %v1998
        %v2000 = vmul.f32 %v1858, 1.442695
        %v2001 = vpow.pop %v2000
        %v2002 = vmul.f32 %v1859, 1.442695
        %v2003 = vpow.pop %v2002
        %v2004 = vmul.f32 %v1860, 1.442695
        %v2005 = vpow.pop %v2004
        %v2006 = vmul.f32 %v1861, 1.442695
        %v2007 = vpow.pop %v2006
        %v2008 = vmul.f32 %v1862, 1.442695
        %v2009 = vpow.pop %v2008
        %v2010 = vmul.f32 %v1863, 1.442695
        %v2011 = vpow.pop %v2010
        %v2012 = vmul.f32 %v1864, 1.442695
        %v2013 = vpow.pop %v2012
        %v2014 = vmul.f32 %v1865, 1.442695
        %v2015 = vpow.pop %v2014
        %v2016 = vmul.f32 %v1866, 1.442695
        %v2017 = vpow.pop %v2016
        %v2018 = vmul.f32 %v1867, 1.442695
        %v2019 = vpow.pop %v2018
        %v2020 = vmul.f32 %v1868, 1.442695
        %v2021 = vpow.pop %v2020
        %v2022 = vmul.f32 %v1869, 1.442695
        %v2023 = vpow.pop %v2022
        %v2024 = vmul.f32 %v1870, 1.442695
        %v2025 = vpow.pop %v2024
        %v2026 = vmul.f32 %v1871, 1.442695
        %v2027 = vpow.pop %v2026
        %v2028 = vmul.f32 %v1872, 1.442695
        %v2029 = vpow.pop %v2028
        %v2030 = vmul.f32 %v1873, 1.442695
        %v2031 = vpow.pop %v2030
        %v2032 = vmul.f32 %v1874, 1.442695
        %v2033 = vpow.pop %v2032
        %v2034 = vmul.f32 %v1875, 1.442695
        %v2035 = vpow.pop %v2034
        %v2036 = vmul.f32 %v1876, 1.442695
        %v2037 = vpow.pop %v2036
        %v2038 = vmul.f32 %v1877, 1.442695
        %v2039 = vpow.pop %v2038
        %v2040 = vmul.f32 %v1878, 1.442695
        %v2041 = vpow.pop %v2040
        %v2042 = vmul.f32 %v1879, 1.442695
        %v2043 = vpow.pop %v2042
        %v2044 = vmul.f32 %v1880, 1.442695
        %v2045 = vpow.pop %v2044
        %v2046 = vmul.f32 %v1881, 1.442695
        %v2047 = vpow.pop %v2046
        %v2048 = vmul.f32 %v1882, 1.442695
        %v2049 = vpow.pop %v2048
        %v2050 = vmul.f32 %v1883, 1.442695
        %v2051 = vpow.pop %v2050
        %v2052 = vmul.f32 %v1884, 1.442695
        %v2053 = vpow.pop %v2052
        %v2054 = vmul.f32 %v1885, 1.442695
        %v2055 = vpow.pop %v2054
        %v2056 = vmul.f32 %v1886, 1.442695
        %v2057 = vpow.pop %v2056
        %v2058 = vmul.f32 %v1887, 1.442695
        %v2059 = vpow.pop %v2058
        %v2060 = vmul.f32 %v1888, 1.442695
        %v2061 = vpow.pop %v2060
        %v2062 = vmul.f32 %v1889, 1.442695
        %v2063 = vpow.pop %v2062
        %v2064 = vmul.f32 %v1890, 1.442695
        %v2065 = vpow.pop %v2064
        %v2066 = vmul.f32 %v1891, 1.442695
        %v2067 = vpow.pop %v2066
        %v2068 = vmul.f32 %v1892, 1.442695
        %v2069 = vpow.pop %v2068
        %v2070 = vmul.f32 %v1893, 1.442695
        %v2071 = vpow.pop %v2070
        %v2072 = vmul.f32 %v1894, 1.442695
        %v2073 = vpow.pop %v2072
        %v2074 = vmul.f32 %v1895, 1.442695
        %v2075 = vpow.pop %v2074
        %v2076 = vmul.f32 %v1896, 1.442695
        %v2077 = vpow.pop %v2076
        %v2078 = vmul.f32 %v1897, 1.442695
        %v2079 = vpow.pop %v2078
        %v2080 = vmul.f32 %v1898, 1.442695
        %v2081 = vpow.pop %v2080
        %v2082 = vmul.f32 %v1899, 1.442695
        %v2083 = vpow.pop %v2082
        %v2084 = vmul.f32 %v1900, 1.442695
        %v2085 = vpow.pop %v2084
        %v2086 = vmul.f32 %v1901, 1.442695
        %v2087 = vpow.pop %v2086
        %v2088 = vmul.f32 %v1902, 1.442695
        %v2089 = vpow.pop %v2088
        %v2090 = vmul.f32 %v1903, 1.442695
        %v2091 = vpow.pop %v2090
        %v2092 = vmul.f32 %v1904, 1.442695
        %v2093 = vpow.pop %v2092
        %v2094 = vmul.f32 %v1905, 1.442695
        %v2095 = vpow.pop %v2094
        %v2096 = vmul.f32 %v1906, 1.442695
        %v2097 = vpow.pop %v2096
        %v2098 = vmul.f32 %v1907, 1.442695
        %v2099 = vpow.pop %v2098
        %v2100 = vmul.f32 %v1908, 1.442695
        %v2101 = vpow.pop %v2100
        %v2102 = vmul.f32 %v1909, 1.442695
        %v2103 = vpow.pop %v2102
        %v2104 = vmul.f32 %v1910, 1.442695
        %v2105 = vpow.pop %v2104
        %v2106 = vmul.f32 %v1911, 1.442695
        %v2107 = vpow.pop %v2106
        %v2108 = vmul.f32 %v1912, 1.442695
        %v2109 = vpow.pop %v2108
        %v2110 = vmul.f32 %v1913, 1.442695
        %v2111 = vpow.pop %v2110
        %v2112 = vmul.f32 %v1914, 1.442695
        %v2113 = vpow.pop %v2112
        %v2114 = vmul.f32 %v1915, 1.442695
        %v2115 = vpow.pop %v2114
        %v2116 = vmul.f32 %v1916, 1.442695
        %v2117 = vpow.pop %v2116
        %v2118 = vmul.f32 %v1917, 1.442695
        %v2119 = vpow.pop %v2118
        %v2120 = vmul.f32 %v1918, 1.442695
        %v2121 = vpow.pop %v2120
        %v2122 = vmul.f32 %v1919, 1.442695
        %v2123 = vpow.pop %v2122
        %v2124 = vmul.f32 %v1920, 1.442695
        %v2125 = vpow.pop %v2124
        %v2126 = vmul.f32 %v1921, 1.442695
        %v2127 = vpow.pop %v2126
        %v2128 = vmul.f32 %v1922, 1.442695
        %v2129 = vpow.pop %v2128
        %v2130 = vmul.f32 %v1923, 1.442695
        %v2131 = vpow.pop %v2130
        %v2132 = vmul.f32 %v1924, 1.442695
        %v2133 = vpow.pop %v2132
        %v2134 = vmul.f32 %v1925, 1.442695
        %v2135 = vpow.pop %v2134
        %v2136 = vmul.f32 %v1926, 1.442695
        %v2137 = vpow.pop %v2136
        %v2138 = vmul.f32 %v1927, 1.442695
        %v2139 = vpow.pop %v2138
        %v2140 = vmul.f32 %v1928, 1.442695
        %v2141 = vpow.pop %v2140
        %v2142 = vmul.f32 %v1929, 1.442695
        %v2143 = vpow.pop %v2142
        %v2144 = vmul.f32 %v1930, 1.442695
        %v2145 = vpow.pop %v2144
        %v2146 = vmul.f32 %v1931, 1.442695
        %v2147 = vpow.pop %v2146
        %v2148 = vmul.f32 %v1932, 1.442695
        %v2149 = vpow.pop %v2148
        %v2150 = vmul.f32 %v1933, 1.442695
        %v2151 = vpow.pop %v2150
        %v2152 = vmul.f32 %v1934, 1.442695
        %v2153 = vpow.pop %v2152
        %v2154 = vmul.f32 %v1935, 1.442695
        %v2155 = vpow.pop %v2154
        %v2156 = vmul.f32 %v1936, 1.442695
        %v2157 = vpow.pop %v2156
        %v2158 = vmul.f32 %v1937, 1.442695
        %v2159 = vpow.pop %v2158
        %v2160 = vmul.f32 %v1938, 1.442695
        %v2161 = vpow.pop %v2160
        %v2162 = vmul.f32 %v1939, 1.442695
        %v2163 = vpow.pop %v2162
        %v2164 = vmul.f32 %v1940, 1.442695
        %v2165 = vpow.pop %v2164
        %v2166 = vmul.f32 %v1941, 1.442695
        %v2167 = vpow.pop %v2166
        %v2168 = vmul.f32 %v1942, 1.442695
        %v2169 = vpow.pop %v2168
        %v2170 = vmul.f32 %v1943, 1.442695
        %v2171 = vpow.pop %v2170
        %v2172 = vmul.f32 %v1944, 1.442695
        %v2173 = vpow.pop %v2172
        %v2174 = vmul.f32 %v1945, 1.442695
        %v2175 = vpow.pop %v2174
        %v2176 = vmul.f32 %v1946, 1.442695
        %v2177 = vpow.pop %v2176
        %v2178 = vmul.f32 %v1947, 1.442695
        %v2179 = vpow.pop %v2178
        %v2180 = vmul.f32 %v1948, 1.442695
        %v2181 = vpow.pop %v2180
        %v2182 = vmul.f32 %v1949, 1.442695
        %v2183 = vpow.pop %v2182
        %v2184 = vmul.f32 %v1950, 1.442695
        %v2185 = vpow.pop %v2184
        %v2186 = vmul.f32 %v1951, 1.442695
        %v2187 = vpow.pop %v2186
        %v2188 = vmul.f32 %v1952, 1.442695
        %v2189 = vpow.pop %v2188
        %v2190 = vmul.f32 %v1953, 1.442695
        %v2191 = vpow.pop %v2190
        %v2192 = vmul.f32 %v1954, 1.442695
        %v2193 = vpow.pop %v2192
        %v2194 = vmul.f32 %v1955, 1.442695
        %v2195 = vpow.pop %v2194
        %v2196 = vmul.f32 %v1956, 1.442695
        %v2197 = vpow.pop %v2196
        %v2198 = vmul.f32 %v1957, 1.442695
        %v2199 = vpow.pop %v2198
        %v2200 = vmul.f32 %v1958, 1.442695
        %v2201 = vpow.pop %v2200
        %v2202 = vmul.f32 %v1959, 1.442695
        %v2203 = vpow.pop %v2202
        %v2204 = vmul.f32 %v1960, 1.442695
        %v2205 = vpow.pop %v2204
        %v2206 = vmul.f32 %v1961, 1.442695
        %v2207 = vpow.pop %v2206
        %v2208 = vmul.f32 %v1962, 1.442695
        %v2209 = vpow.pop %v2208
        %v2210 = vmul.f32 %v1963, 1.442695
        %v2211 = vpow.pop %v2210
        %v2212 = vmul.f32 %v1964, 1.442695
        %v2213 = vpow.pop %v2212
        %v2214 = vmul.f32 %v1965, 1.442695
        %v2215 = vpow.pop %v2214
        %v2216 = vmul.f32 %v1966, 1.442695
        %v2217 = vpow.pop %v2216
        %v2218 = vmul.f32 %v1967, 1.442695
        %v2219 = vpow.pop %v2218
        %v2220 = vmul.f32 %v1968, 1.442695
        %v2221 = vpow.pop %v2220
        %v2222 = vmul.f32 %v1969, 1.442695
        %v2223 = vpow.pop %v2222
        %v2224 = vmul.f32 %v1970, 1.442695
        %v2225 = vpow.pop %v2224
        %v2226 = vmul.f32 %v1971, 1.442695
        %v2227 = vpow.pop %v2226
        %v2228 = vadd.f32 %v1973, 1.0
        %v2229 = vlog2.pop %v2228
        %v2230 = vmul.f32 %v2229, 0.6931472
        %v2231 = vmul.f32 -0.5, %v1973
        %v2232 = vadd.f32 %v2231, 1.0
        %v2233 = vmul.f32 %v2232, %v1973
        %v2234 = vand.u32 2147483647, %v1973
        %vm2235 = vcmp.lt.f32.partialorder %v2234, 0.0004427343
        %v2236 = vsel %vm2235, %v2233, %v2230
        %v2237 = vadd.f32 %v1975, 1.0
        %v2238 = vlog2.pop %v2237
        %v2239 = vmul.f32 %v2238, 0.6931472
        %v2240 = vmul.f32 -0.5, %v1975
        %v2241 = vadd.f32 %v2240, 1.0
        %v2242 = vmul.f32 %v2241, %v1975
        %v2243 = vand.u32 2147483647, %v1975
        %vm2244 = vcmp.lt.f32.partialorder %v2243, 0.0004427343
        %v2245 = vsel %vm2244, %v2242, %v2239
        %v2246 = vadd.f32 %v1977, 1.0
        %v2247 = vlog2.pop %v2246
        %v2248 = vmul.f32 %v2247, 0.6931472
        %v2249 = vmul.f32 -0.5, %v1977
        %v2250 = vadd.f32 %v2249, 1.0
        %v2251 = vmul.f32 %v2250, %v1977
        %v2252 = vand.u32 2147483647, %v1977
        %vm2253 = vcmp.lt.f32.partialorder %v2252, 0.0004427343
        %v2254 = vsel %vm2253, %v2251, %v2248
        %v2255 = vadd.f32 %v1979, 1.0
        %v2256 = vlog2.pop %v2255
        %v2257 = vmul.f32 %v2256, 0.6931472
        %v2258 = vmul.f32 -0.5, %v1979
        %v2259 = vadd.f32 %v2258, 1.0
        %v2260 = vmul.f32 %v2259, %v1979
        %v2261 = vand.u32 2147483647, %v1979
        %vm2262 = vcmp.lt.f32.partialorder %v2261, 0.0004427343
        %v2263 = vsel %vm2262, %v2260, %v2257
        %v2264 = vadd.f32 %v1981, 1.0
        %v2265 = vlog2.pop %v2264
        %v2266 = vmul.f32 %v2265, 0.6931472
        %v2267 = vmul.f32 -0.5, %v1981
        %v2268 = vadd.f32 %v2267, 1.0
        %v2269 = vmul.f32 %v2268, %v1981
        %v2270 = vand.u32 2147483647, %v1981
        %vm2271 = vcmp.lt.f32.partialorder %v2270, 0.0004427343
        %v2272 = vsel %vm2271, %v2269, %v2266
        %v2273 = vadd.f32 %v1983, 1.0
        %v2274 = vlog2.pop %v2273
        %v2275 = vmul.f32 %v2274, 0.6931472
        %v2276 = vmul.f32 -0.5, %v1983
        %v2277 = vadd.f32 %v2276, 1.0
        %v2278 = vmul.f32 %v2277, %v1983
        %v2279 = vand.u32 2147483647, %v1983
        %vm2280 = vcmp.lt.f32.partialorder %v2279, 0.0004427343
        %v2281 = vsel %vm2280, %v2278, %v2275
        %v2282 = vadd.f32 %v1985, 1.0
        %v2283 = vlog2.pop %v2282
        %v2284 = vmul.f32 %v2283, 0.6931472
        %v2285 = vmul.f32 -0.5, %v1985
        %v2286 = vadd.f32 %v2285, 1.0
        %v2287 = vmul.f32 %v2286, %v1985
        %v2288 = vand.u32 2147483647, %v1985
        %vm2289 = vcmp.lt.f32.partialorder %v2288, 0.0004427343
        %v2290 = vsel %vm2289, %v2287, %v2284
        %v2291 = vadd.f32 %v1987, 1.0
        %v2292 = vlog2.pop %v2291
        %v2293 = vmul.f32 %v2292, 0.6931472
        %v2294 = vmul.f32 -0.5, %v1987
        %v2295 = vadd.f32 %v2294, 1.0
        %v2296 = vmul.f32 %v2295, %v1987
        %v2297 = vand.u32 2147483647, %v1987
        %vm2298 = vcmp.lt.f32.partialorder %v2297, 0.0004427343
        %v2299 = vsel %vm2298, %v2296, %v2293
        %v2300 = vadd.f32 %v1989, 1.0
        %v2301 = vlog2.pop %v2300
        %v2302 = vmul.f32 %v2301, 0.6931472
        %v2303 = vmul.f32 -0.5, %v1989
        %v2304 = vadd.f32 %v2303, 1.0
        %v2305 = vmul.f32 %v2304, %v1989
        %v2306 = vand.u32 2147483647, %v1989
        %vm2307 = vcmp.lt.f32.partialorder %v2306, 0.0004427343
        %v2308 = vsel %vm2307, %v2305, %v2302
        %v2309 = vadd.f32 %v1991, 1.0
        %v2310 = vlog2.pop %v2309
        %v2311 = vmul.f32 %v2310, 0.6931472
        %v2312 = vmul.f32 -0.5, %v1991
        %v2313 = vadd.f32 %v2312, 1.0
        %v2314 = vmul.f32 %v2313, %v1991
        %v2315 = vand.u32 2147483647, %v1991
        %vm2316 = vcmp.lt.f32.partialorder %v2315, 0.0004427343
        %v2317 = vsel %vm2316, %v2314, %v2311
        %v2318 = vadd.f32 %v1993, 1.0
        %v2319 = vlog2.pop %v2318
        %v2320 = vmul.f32 %v2319, 0.6931472
        %v2321 = vmul.f32 -0.5, %v1993
        %v2322 = vadd.f32 %v2321, 1.0
        %v2323 = vmul.f32 %v2322, %v1993
        %v2324 = vand.u32 2147483647, %v1993
        %vm2325 = vcmp.lt.f32.partialorder %v2324, 0.0004427343
        %v2326 = vsel %vm2325, %v2323, %v2320
        %v2327 = vadd.f32 %v1995, 1.0
        %v2328 = vlog2.pop %v2327
        %v2329 = vmul.f32 %v2328, 0.6931472
        %v2330 = vmul.f32 -0.5, %v1995
        %v2331 = vadd.f32 %v2330, 1.0
        %v2332 = vmul.f32 %v2331, %v1995
        %v2333 = vand.u32 2147483647, %v1995
        %vm2334 = vcmp.lt.f32.partialorder %v2333, 0.0004427343
        %v2335 = vsel %vm2334, %v2332, %v2329
        %v2336 = vadd.f32 %v1997, 1.0
        %v2337 = vlog2.pop %v2336
        %v2338 = vmul.f32 %v2337, 0.6931472
        %v2339 = vmul.f32 -0.5, %v1997
        %v2340 = vadd.f32 %v2339, 1.0
        %v2341 = vmul.f32 %v2340, %v1997
        %v2342 = vand.u32 2147483647, %v1997
        %vm2343 = vcmp.lt.f32.partialorder %v2342, 0.0004427343
        %v2344 = vsel %vm2343, %v2341, %v2338
        %v2345 = vadd.f32 %v1999, 1.0
        %v2346 = vlog2.pop %v2345
        %v2347 = vmul.f32 %v2346, 0.6931472
        %v2348 = vmul.f32 -0.5, %v1999
        %v2349 = vadd.f32 %v2348, 1.0
        %v2350 = vmul.f32 %v2349, %v1999
        %v2351 = vand.u32 2147483647, %v1999
        %vm2352 = vcmp.lt.f32.partialorder %v2351, 0.0004427343
        %v2353 = vsel %vm2352, %v2350, %v2347
        %v2354 = vadd.f32 %v2001, 1.0
        %v2355 = vlog2.pop %v2354
        %v2356 = vmul.f32 %v2355, 0.6931472
        %v2357 = vmul.f32 -0.5, %v2001
        %v2358 = vadd.f32 %v2357, 1.0
        %v2359 = vmul.f32 %v2358, %v2001
        %v2360 = vand.u32 2147483647, %v2001
        %vm2361 = vcmp.lt.f32.partialorder %v2360, 0.0004427343
        %v2362 = vsel %vm2361, %v2359, %v2356
        %v2363 = vadd.f32 %v2003, 1.0
        %v2364 = vlog2.pop %v2363
        %v2365 = vmul.f32 %v2364, 0.6931472
        %v2366 = vmul.f32 -0.5, %v2003
        %v2367 = vadd.f32 %v2366, 1.0
        %v2368 = vmul.f32 %v2367, %v2003
        %v2369 = vand.u32 2147483647, %v2003
        %vm2370 = vcmp.lt.f32.partialorder %v2369, 0.0004427343
        %v2371 = vsel %vm2370, %v2368, %v2365
        %v2372 = vadd.f32 %v2005, 1.0
        %v2373 = vlog2.pop %v2372
        %v2374 = vmul.f32 %v2373, 0.6931472
        %v2375 = vmul.f32 -0.5, %v2005
        %v2376 = vadd.f32 %v2375, 1.0
        %v2377 = vmul.f32 %v2376, %v2005
        %v2378 = vand.u32 2147483647, %v2005
        %vm2379 = vcmp.lt.f32.partialorder %v2378, 0.0004427343
        %v2380 = vsel %vm2379, %v2377, %v2374
        %v2381 = vadd.f32 %v2007, 1.0
        %v2382 = vlog2.pop %v2381
        %v2383 = vmul.f32 %v2382, 0.6931472
        %v2384 = vmul.f32 -0.5, %v2007
        %v2385 = vadd.f32 %v2384, 1.0
        %v2386 = vmul.f32 %v2385, %v2007
        %v2387 = vand.u32 2147483647, %v2007
        %vm2388 = vcmp.lt.f32.partialorder %v2387, 0.0004427343
        %v2389 = vsel %vm2388, %v2386, %v2383
        %v2390 = vadd.f32 %v2009, 1.0
        %v2391 = vlog2.pop %v2390
        %v2392 = vmul.f32 %v2391, 0.6931472
        %v2393 = vmul.f32 -0.5, %v2009
        %v2394 = vadd.f32 %v2393, 1.0
        %v2395 = vmul.f32 %v2394, %v2009
        %v2396 = vand.u32 2147483647, %v2009
        %vm2397 = vcmp.lt.f32.partialorder %v2396, 0.0004427343
        %v2398 = vsel %vm2397, %v2395, %v2392
        %v2399 = vadd.f32 %v2011, 1.0
        %v2400 = vlog2.pop %v2399
        %v2401 = vmul.f32 %v2400, 0.6931472
        %v2402 = vmul.f32 -0.5, %v2011
        %v2403 = vadd.f32 %v2402, 1.0
        %v2404 = vmul.f32 %v2403, %v2011
        %v2405 = vand.u32 2147483647, %v2011
        %vm2406 = vcmp.lt.f32.partialorder %v2405, 0.0004427343
        %v2407 = vsel %vm2406, %v2404, %v2401
        %v2408 = vadd.f32 %v2013, 1.0
        %v2409 = vlog2.pop %v2408
        %v2410 = vmul.f32 %v2409, 0.6931472
        %v2411 = vmul.f32 -0.5, %v2013
        %v2412 = vadd.f32 %v2411, 1.0
        %v2413 = vmul.f32 %v2412, %v2013
        %v2414 = vand.u32 2147483647, %v2013
        %vm2415 = vcmp.lt.f32.partialorder %v2414, 0.0004427343
        %v2416 = vsel %vm2415, %v2413, %v2410
        %v2417 = vadd.f32 %v2015, 1.0
        %v2418 = vlog2.pop %v2417
        %v2419 = vmul.f32 %v2418, 0.6931472
        %v2420 = vmul.f32 -0.5, %v2015
        %v2421 = vadd.f32 %v2420, 1.0
        %v2422 = vmul.f32 %v2421, %v2015
        %v2423 = vand.u32 2147483647, %v2015
        %vm2424 = vcmp.lt.f32.partialorder %v2423, 0.0004427343
        %v2425 = vsel %vm2424, %v2422, %v2419
        %v2426 = vadd.f32 %v2017, 1.0
        %v2427 = vlog2.pop %v2426
        %v2428 = vmul.f32 %v2427, 0.6931472
        %v2429 = vmul.f32 -0.5, %v2017
        %v2430 = vadd.f32 %v2429, 1.0
        %v2431 = vmul.f32 %v2430, %v2017
        %v2432 = vand.u32 2147483647, %v2017
        %vm2433 = vcmp.lt.f32.partialorder %v2432, 0.0004427343
        %v2434 = vsel %vm2433, %v2431, %v2428
        %v2435 = vadd.f32 %v2019, 1.0
        %v2436 = vlog2.pop %v2435
        %v2437 = vmul.f32 %v2436, 0.6931472
        %v2438 = vmul.f32 -0.5, %v2019
        %v2439 = vadd.f32 %v2438, 1.0
        %v2440 = vmul.f32 %v2439, %v2019
        %v2441 = vand.u32 2147483647, %v2019
        %vm2442 = vcmp.lt.f32.partialorder %v2441, 0.0004427343
        %v2443 = vsel %vm2442, %v2440, %v2437
        %v2444 = vadd.f32 %v2021, 1.0
        %v2445 = vlog2.pop %v2444
        %v2446 = vmul.f32 %v2445, 0.6931472
        %v2447 = vmul.f32 -0.5, %v2021
        %v2448 = vadd.f32 %v2447, 1.0
        %v2449 = vmul.f32 %v2448, %v2021
        %v2450 = vand.u32 2147483647, %v2021
        %vm2451 = vcmp.lt.f32.partialorder %v2450, 0.0004427343
        %v2452 = vsel %vm2451, %v2449, %v2446
        %v2453 = vadd.f32 %v2023, 1.0
        %v2454 = vlog2.pop %v2453
        %v2455 = vmul.f32 %v2454, 0.6931472
        %v2456 = vmul.f32 -0.5, %v2023
        %v2457 = vadd.f32 %v2456, 1.0
        %v2458 = vmul.f32 %v2457, %v2023
        %v2459 = vand.u32 2147483647, %v2023
        %vm2460 = vcmp.lt.f32.partialorder %v2459, 0.0004427343
        %v2461 = vsel %vm2460, %v2458, %v2455
        %v2462 = vadd.f32 %v2025, 1.0
        %v2463 = vlog2.pop %v2462
        %v2464 = vmul.f32 %v2463, 0.6931472
        %v2465 = vmul.f32 -0.5, %v2025
        %v2466 = vadd.f32 %v2465, 1.0
        %v2467 = vmul.f32 %v2466, %v2025
        %v2468 = vand.u32 2147483647, %v2025
        %vm2469 = vcmp.lt.f32.partialorder %v2468, 0.0004427343
        %v2470 = vsel %vm2469, %v2467, %v2464
        %v2471 = vadd.f32 %v2027, 1.0
        %v2472 = vlog2.pop %v2471
        %v2473 = vmul.f32 %v2472, 0.6931472
        %v2474 = vmul.f32 -0.5, %v2027
        %v2475 = vadd.f32 %v2474, 1.0
        %v2476 = vmul.f32 %v2475, %v2027
        %v2477 = vand.u32 2147483647, %v2027
        %vm2478 = vcmp.lt.f32.partialorder %v2477, 0.0004427343
        %v2479 = vsel %vm2478, %v2476, %v2473
        %v2480 = vadd.f32 %v2029, 1.0
        %v2481 = vlog2.pop %v2480
        %v2482 = vmul.f32 %v2481, 0.6931472
        %v2483 = vmul.f32 -0.5, %v2029
        %v2484 = vadd.f32 %v2483, 1.0
        %v2485 = vmul.f32 %v2484, %v2029
        %v2486 = vand.u32 2147483647, %v2029
        %vm2487 = vcmp.lt.f32.partialorder %v2486, 0.0004427343
        %v2488 = vsel %vm2487, %v2485, %v2482
        %v2489 = vadd.f32 %v2031, 1.0
        %v2490 = vlog2.pop %v2489
        %v2491 = vmul.f32 %v2490, 0.6931472
        %v2492 = vmul.f32 -0.5, %v2031
        %v2493 = vadd.f32 %v2492, 1.0
        %v2494 = vmul.f32 %v2493, %v2031
        %v2495 = vand.u32 2147483647, %v2031
        %vm2496 = vcmp.lt.f32.partialorder %v2495, 0.0004427343
        %v2497 = vsel %vm2496, %v2494, %v2491
        %v2498 = vadd.f32 %v2033, 1.0
        %v2499 = vlog2.pop %v2498
        %v2500 = vmul.f32 %v2499, 0.6931472
        %v2501 = vmul.f32 -0.5, %v2033
        %v2502 = vadd.f32 %v2501, 1.0
        %v2503 = vmul.f32 %v2502, %v2033
        %v2504 = vand.u32 2147483647, %v2033
        %vm2505 = vcmp.lt.f32.partialorder %v2504, 0.0004427343
        %v2506 = vsel %vm2505, %v2503, %v2500
        %v2507 = vadd.f32 %v2035, 1.0
        %v2508 = vlog2.pop %v2507
        %v2509 = vmul.f32 %v2508, 0.6931472
        %v2510 = vmul.f32 -0.5, %v2035
        %v2511 = vadd.f32 %v2510, 1.0
        %v2512 = vmul.f32 %v2511, %v2035
        %v2513 = vand.u32 2147483647, %v2035
        %vm2514 = vcmp.lt.f32.partialorder %v2513, 0.0004427343
        %v2515 = vsel %vm2514, %v2512, %v2509
        %v2516 = vadd.f32 %v2037, 1.0
        %v2517 = vlog2.pop %v2516
        %v2518 = vmul.f32 %v2517, 0.6931472
        %v2519 = vmul.f32 -0.5, %v2037
        %v2520 = vadd.f32 %v2519, 1.0
        %v2521 = vmul.f32 %v2520, %v2037
        %v2522 = vand.u32 2147483647, %v2037
        %vm2523 = vcmp.lt.f32.partialorder %v2522, 0.0004427343
        %v2524 = vsel %vm2523, %v2521, %v2518
        %v2525 = vadd.f32 %v2039, 1.0
        %v2526 = vlog2.pop %v2525
        %v2527 = vmul.f32 %v2526, 0.6931472
        %v2528 = vmul.f32 -0.5, %v2039
        %v2529 = vadd.f32 %v2528, 1.0
        %v2530 = vmul.f32 %v2529, %v2039
        %v2531 = vand.u32 2147483647, %v2039
        %vm2532 = vcmp.lt.f32.partialorder %v2531, 0.0004427343
        %v2533 = vsel %vm2532, %v2530, %v2527
        %v2534 = vadd.f32 %v2041, 1.0
        %v2535 = vlog2.pop %v2534
        %v2536 = vmul.f32 %v2535, 0.6931472
        %v2537 = vmul.f32 -0.5, %v2041
        %v2538 = vadd.f32 %v2537, 1.0
        %v2539 = vmul.f32 %v2538, %v2041
        %v2540 = vand.u32 2147483647, %v2041
        %vm2541 = vcmp.lt.f32.partialorder %v2540, 0.0004427343
        %v2542 = vsel %vm2541, %v2539, %v2536
        %v2543 = vadd.f32 %v2043, 1.0
        %v2544 = vlog2.pop %v2543
        %v2545 = vmul.f32 %v2544, 0.6931472
        %v2546 = vmul.f32 -0.5, %v2043
        %v2547 = vadd.f32 %v2546, 1.0
        %v2548 = vmul.f32 %v2547, %v2043
        %v2549 = vand.u32 2147483647, %v2043
        %vm2550 = vcmp.lt.f32.partialorder %v2549, 0.0004427343
        %v2551 = vsel %vm2550, %v2548, %v2545
        %v2552 = vadd.f32 %v2045, 1.0
        %v2553 = vlog2.pop %v2552
        %v2554 = vmul.f32 %v2553, 0.6931472
        %v2555 = vmul.f32 -0.5, %v2045
        %v2556 = vadd.f32 %v2555, 1.0
        %v2557 = vmul.f32 %v2556, %v2045
        %v2558 = vand.u32 2147483647, %v2045
        %vm2559 = vcmp.lt.f32.partialorder %v2558, 0.0004427343
        %v2560 = vsel %vm2559, %v2557, %v2554
        %v2561 = vadd.f32 %v2047, 1.0
        %v2562 = vlog2.pop %v2561
        %v2563 = vmul.f32 %v2562, 0.6931472
        %v2564 = vmul.f32 -0.5, %v2047
        %v2565 = vadd.f32 %v2564, 1.0
        %v2566 = vmul.f32 %v2565, %v2047
        %v2567 = vand.u32 2147483647, %v2047
        %vm2568 = vcmp.lt.f32.partialorder %v2567, 0.0004427343
        %v2569 = vsel %vm2568, %v2566, %v2563
        %v2570 = vadd.f32 %v2049, 1.0
        %v2571 = vlog2.pop %v2570
        %v2572 = vmul.f32 %v2571, 0.6931472
        %v2573 = vmul.f32 -0.5, %v2049
        %v2574 = vadd.f32 %v2573, 1.0
        %v2575 = vmul.f32 %v2574, %v2049
        %v2576 = vand.u32 2147483647, %v2049
        %vm2577 = vcmp.lt.f32.partialorder %v2576, 0.0004427343
        %v2578 = vsel %vm2577, %v2575, %v2572
        %v2579 = vadd.f32 %v2051, 1.0
        %v2580 = vlog2.pop %v2579
        %v2581 = vmul.f32 %v2580, 0.6931472
        %v2582 = vmul.f32 -0.5, %v2051
        %v2583 = vadd.f32 %v2582, 1.0
        %v2584 = vmul.f32 %v2583, %v2051
        %v2585 = vand.u32 2147483647, %v2051
        %vm2586 = vcmp.lt.f32.partialorder %v2585, 0.0004427343
        %v2587 = vsel %vm2586, %v2584, %v2581
        %v2588 = vadd.f32 %v2053, 1.0
        %v2589 = vlog2.pop %v2588
        %v2590 = vmul.f32 %v2589, 0.6931472
        %v2591 = vmul.f32 -0.5, %v2053
        %v2592 = vadd.f32 %v2591, 1.0
        %v2593 = vmul.f32 %v2592, %v2053
        %v2594 = vand.u32 2147483647, %v2053
        %vm2595 = vcmp.lt.f32.partialorder %v2594, 0.0004427343
        %v2596 = vsel %vm2595, %v2593, %v2590
        %v2597 = vadd.f32 %v2055, 1.0
        %v2598 = vlog2.pop %v2597
        %v2599 = vmul.f32 %v2598, 0.6931472
        %v2600 = vmul.f32 -0.5, %v2055
        %v2601 = vadd.f32 %v2600, 1.0
        %v2602 = vmul.f32 %v2601, %v2055
        %v2603 = vand.u32 2147483647, %v2055
        %vm2604 = vcmp.lt.f32.partialorder %v2603, 0.0004427343
        %v2605 = vsel %vm2604, %v2602, %v2599
        %v2606 = vadd.f32 %v2057, 1.0
        %v2607 = vlog2.pop %v2606
        %v2608 = vmul.f32 %v2607, 0.6931472
        %v2609 = vmul.f32 -0.5, %v2057
        %v2610 = vadd.f32 %v2609, 1.0
        %v2611 = vmul.f32 %v2610, %v2057
        %v2612 = vand.u32 2147483647, %v2057
        %vm2613 = vcmp.lt.f32.partialorder %v2612, 0.0004427343
        %v2614 = vsel %vm2613, %v2611, %v2608
        %v2615 = vadd.f32 %v2059, 1.0
        %v2616 = vlog2.pop %v2615
        %v2617 = vmul.f32 %v2616, 0.6931472
        %v2618 = vmul.f32 -0.5, %v2059
        %v2619 = vadd.f32 %v2618, 1.0
        %v2620 = vmul.f32 %v2619, %v2059
        %v2621 = vand.u32 2147483647, %v2059
        %vm2622 = vcmp.lt.f32.partialorder %v2621, 0.0004427343
        %v2623 = vsel %vm2622, %v2620, %v2617
        %v2624 = vadd.f32 %v2061, 1.0
        %v2625 = vlog2.pop %v2624
        %v2626 = vmul.f32 %v2625, 0.6931472
        %v2627 = vmul.f32 -0.5, %v2061
        %v2628 = vadd.f32 %v2627, 1.0
        %v2629 = vmul.f32 %v2628, %v2061
        %v2630 = vand.u32 2147483647, %v2061
        %vm2631 = vcmp.lt.f32.partialorder %v2630, 0.0004427343
        %v2632 = vsel %vm2631, %v2629, %v2626
        %v2633 = vadd.f32 %v2063, 1.0
        %v2634 = vlog2.pop %v2633
        %v2635 = vmul.f32 %v2634, 0.6931472
        %v2636 = vmul.f32 -0.5, %v2063
        %v2637 = vadd.f32 %v2636, 1.0
        %v2638 = vmul.f32 %v2637, %v2063
        %v2639 = vand.u32 2147483647, %v2063
        %vm2640 = vcmp.lt.f32.partialorder %v2639, 0.0004427343
        %v2641 = vsel %vm2640, %v2638, %v2635
        %v2642 = vadd.f32 %v2065, 1.0
        %v2643 = vlog2.pop %v2642
        %v2644 = vmul.f32 %v2643, 0.6931472
        %v2645 = vmul.f32 -0.5, %v2065
        %v2646 = vadd.f32 %v2645, 1.0
        %v2647 = vmul.f32 %v2646, %v2065
        %v2648 = vand.u32 2147483647, %v2065
        %vm2649 = vcmp.lt.f32.partialorder %v2648, 0.0004427343
        %v2650 = vsel %vm2649, %v2647, %v2644
        %v2651 = vadd.f32 %v2067, 1.0
        %v2652 = vlog2.pop %v2651
        %v2653 = vmul.f32 %v2652, 0.6931472
        %v2654 = vmul.f32 -0.5, %v2067
        %v2655 = vadd.f32 %v2654, 1.0
        %v2656 = vmul.f32 %v2655, %v2067
        %v2657 = vand.u32 2147483647, %v2067
        %vm2658 = vcmp.lt.f32.partialorder %v2657, 0.0004427343
        %v2659 = vsel %vm2658, %v2656, %v2653
        %v2660 = vadd.f32 %v2069, 1.0
        %v2661 = vlog2.pop %v2660
        %v2662 = vmul.f32 %v2661, 0.6931472
        %v2663 = vmul.f32 -0.5, %v2069
        %v2664 = vadd.f32 %v2663, 1.0
        %v2665 = vmul.f32 %v2664, %v2069
        %v2666 = vand.u32 2147483647, %v2069
        %vm2667 = vcmp.lt.f32.partialorder %v2666, 0.0004427343
        %v2668 = vsel %vm2667, %v2665, %v2662
        %v2669 = vadd.f32 %v2071, 1.0
        %v2670 = vlog2.pop %v2669
        %v2671 = vmul.f32 %v2670, 0.6931472
        %v2672 = vmul.f32 -0.5, %v2071
        %v2673 = vadd.f32 %v2672, 1.0
        %v2674 = vmul.f32 %v2673, %v2071
        %v2675 = vand.u32 2147483647, %v2071
        %vm2676 = vcmp.lt.f32.partialorder %v2675, 0.0004427343
        %v2677 = vsel %vm2676, %v2674, %v2671
        %v2678 = vadd.f32 %v2073, 1.0
        %v2679 = vlog2.pop %v2678
        %v2680 = vmul.f32 %v2679, 0.6931472
        %v2681 = vmul.f32 -0.5, %v2073
        %v2682 = vadd.f32 %v2681, 1.0
        %v2683 = vmul.f32 %v2682, %v2073
        %v2684 = vand.u32 2147483647, %v2073
        %vm2685 = vcmp.lt.f32.partialorder %v2684, 0.0004427343
        %v2686 = vsel %vm2685, %v2683, %v2680
        %v2687 = vadd.f32 %v2075, 1.0
        %v2688 = vlog2.pop %v2687
        %v2689 = vmul.f32 %v2688, 0.6931472
        %v2690 = vmul.f32 -0.5, %v2075
        %v2691 = vadd.f32 %v2690, 1.0
        %v2692 = vmul.f32 %v2691, %v2075
        %v2693 = vand.u32 2147483647, %v2075
        %vm2694 = vcmp.lt.f32.partialorder %v2693, 0.0004427343
        %v2695 = vsel %vm2694, %v2692, %v2689
        %v2696 = vadd.f32 %v2077, 1.0
        %v2697 = vlog2.pop %v2696
        %v2698 = vmul.f32 %v2697, 0.6931472
        %v2699 = vmul.f32 -0.5, %v2077
        %v2700 = vadd.f32 %v2699, 1.0
        %v2701 = vmul.f32 %v2700, %v2077
        %v2702 = vand.u32 2147483647, %v2077
        %vm2703 = vcmp.lt.f32.partialorder %v2702, 0.0004427343
        %v2704 = vsel %vm2703, %v2701, %v2698
        %v2705 = vadd.f32 %v2079, 1.0
        %v2706 = vlog2.pop %v2705
        %v2707 = vmul.f32 %v2706, 0.6931472
        %v2708 = vmul.f32 -0.5, %v2079
        %v2709 = vadd.f32 %v2708, 1.0
        %v2710 = vmul.f32 %v2709, %v2079
        %v2711 = vand.u32 2147483647, %v2079
        %vm2712 = vcmp.lt.f32.partialorder %v2711, 0.0004427343
        %v2713 = vsel %vm2712, %v2710, %v2707
        %v2714 = vadd.f32 %v2081, 1.0
        %v2715 = vlog2.pop %v2714
        %v2716 = vmul.f32 %v2715, 0.6931472
        %v2717 = vmul.f32 -0.5, %v2081
        %v2718 = vadd.f32 %v2717, 1.0
        %v2719 = vmul.f32 %v2718, %v2081
        %v2720 = vand.u32 2147483647, %v2081
        %vm2721 = vcmp.lt.f32.partialorder %v2720, 0.0004427343
        %v2722 = vsel %vm2721, %v2719, %v2716
        %v2723 = vadd.f32 %v2083, 1.0
        %v2724 = vlog2.pop %v2723
        %v2725 = vmul.f32 %v2724, 0.6931472
        %v2726 = vmul.f32 -0.5, %v2083
        %v2727 = vadd.f32 %v2726, 1.0
        %v2728 = vmul.f32 %v2727, %v2083
        %v2729 = vand.u32 2147483647, %v2083
        %vm2730 = vcmp.lt.f32.partialorder %v2729, 0.0004427343
        %v2731 = vsel %vm2730, %v2728, %v2725
        %v2732 = vadd.f32 %v2085, 1.0
        %v2733 = vlog2.pop %v2732
        %v2734 = vmul.f32 %v2733, 0.6931472
        %v2735 = vmul.f32 -0.5, %v2085
        %v2736 = vadd.f32 %v2735, 1.0
        %v2737 = vmul.f32 %v2736, %v2085
        %v2738 = vand.u32 2147483647, %v2085
        %vm2739 = vcmp.lt.f32.partialorder %v2738, 0.0004427343
        %v2740 = vsel %vm2739, %v2737, %v2734
        %v2741 = vadd.f32 %v2087, 1.0
        %v2742 = vlog2.pop %v2741
        %v2743 = vmul.f32 %v2742, 0.6931472
        %v2744 = vmul.f32 -0.5, %v2087
        %v2745 = vadd.f32 %v2744, 1.0
        %v2746 = vmul.f32 %v2745, %v2087
        %v2747 = vand.u32 2147483647, %v2087
        %vm2748 = vcmp.lt.f32.partialorder %v2747, 0.0004427343
        %v2749 = vsel %vm2748, %v2746, %v2743
        %v2750 = vadd.f32 %v2089, 1.0
        %v2751 = vlog2.pop %v2750
        %v2752 = vmul.f32 %v2751, 0.6931472
        %v2753 = vmul.f32 -0.5, %v2089
        %v2754 = vadd.f32 %v2753, 1.0
        %v2755 = vmul.f32 %v2754, %v2089
        %v2756 = vand.u32 2147483647, %v2089
        %vm2757 = vcmp.lt.f32.partialorder %v2756, 0.0004427343
        %v2758 = vsel %vm2757, %v2755, %v2752
        %v2759 = vadd.f32 %v2091, 1.0
        %v2760 = vlog2.pop %v2759
        %v2761 = vmul.f32 %v2760, 0.6931472
        %v2762 = vmul.f32 -0.5, %v2091
        %v2763 = vadd.f32 %v2762, 1.0
        %v2764 = vmul.f32 %v2763, %v2091
        %v2765 = vand.u32 2147483647, %v2091
        %vm2766 = vcmp.lt.f32.partialorder %v2765, 0.0004427343
        %v2767 = vsel %vm2766, %v2764, %v2761
        %v2768 = vadd.f32 %v2093, 1.0
        %v2769 = vlog2.pop %v2768
        %v2770 = vmul.f32 %v2769, 0.6931472
        %v2771 = vmul.f32 -0.5, %v2093
        %v2772 = vadd.f32 %v2771, 1.0
        %v2773 = vmul.f32 %v2772, %v2093
        %v2774 = vand.u32 2147483647, %v2093
        %vm2775 = vcmp.lt.f32.partialorder %v2774, 0.0004427343
        %v2776 = vsel %vm2775, %v2773, %v2770
        %v2777 = vadd.f32 %v2095, 1.0
        %v2778 = vlog2.pop %v2777
        %v2779 = vmul.f32 %v2778, 0.6931472
        %v2780 = vmul.f32 -0.5, %v2095
        %v2781 = vadd.f32 %v2780, 1.0
        %v2782 = vmul.f32 %v2781, %v2095
        %v2783 = vand.u32 2147483647, %v2095
        %vm2784 = vcmp.lt.f32.partialorder %v2783, 0.0004427343
        %v2785 = vsel %vm2784, %v2782, %v2779
        %v2786 = vadd.f32 %v2097, 1.0
        %v2787 = vlog2.pop %v2786
        %v2788 = vmul.f32 %v2787, 0.6931472
        %v2789 = vmul.f32 -0.5, %v2097
        %v2790 = vadd.f32 %v2789, 1.0
        %v2791 = vmul.f32 %v2790, %v2097
        %v2792 = vand.u32 2147483647, %v2097
        %vm2793 = vcmp.lt.f32.partialorder %v2792, 0.0004427343
        %v2794 = vsel %vm2793, %v2791, %v2788
        %v2795 = vadd.f32 %v2099, 1.0
        %v2796 = vlog2.pop %v2795
        %v2797 = vmul.f32 %v2796, 0.6931472
        %v2798 = vmul.f32 -0.5, %v2099
        %v2799 = vadd.f32 %v2798, 1.0
        %v2800 = vmul.f32 %v2799, %v2099
        %v2801 = vand.u32 2147483647, %v2099
        %vm2802 = vcmp.lt.f32.partialorder %v2801, 0.0004427343
        %v2803 = vsel %vm2802, %v2800, %v2797
        %v2804 = vadd.f32 %v2101, 1.0
        %v2805 = vlog2.pop %v2804
        %v2806 = vmul.f32 %v2805, 0.6931472
        %v2807 = vmul.f32 -0.5, %v2101
        %v2808 = vadd.f32 %v2807, 1.0
        %v2809 = vmul.f32 %v2808, %v2101
        %v2810 = vand.u32 2147483647, %v2101
        %vm2811 = vcmp.lt.f32.partialorder %v2810, 0.0004427343
        %v2812 = vsel %vm2811, %v2809, %v2806
        %v2813 = vadd.f32 %v2103, 1.0
        %v2814 = vlog2.pop %v2813
        %v2815 = vmul.f32 %v2814, 0.6931472
        %v2816 = vmul.f32 -0.5, %v2103
        %v2817 = vadd.f32 %v2816, 1.0
        %v2818 = vmul.f32 %v2817, %v2103
        %v2819 = vand.u32 2147483647, %v2103
        %vm2820 = vcmp.lt.f32.partialorder %v2819, 0.0004427343
        %v2821 = vsel %vm2820, %v2818, %v2815
        %v2822 = vadd.f32 %v2105, 1.0
        %v2823 = vlog2.pop %v2822
        %v2824 = vmul.f32 %v2823, 0.6931472
        %v2825 = vmul.f32 -0.5, %v2105
        %v2826 = vadd.f32 %v2825, 1.0
        %v2827 = vmul.f32 %v2826, %v2105
        %v2828 = vand.u32 2147483647, %v2105
        %vm2829 = vcmp.lt.f32.partialorder %v2828, 0.0004427343
        %v2830 = vsel %vm2829, %v2827, %v2824
        %v2831 = vadd.f32 %v2107, 1.0
        %v2832 = vlog2.pop %v2831
        %v2833 = vmul.f32 %v2832, 0.6931472
        %v2834 = vmul.f32 -0.5, %v2107
        %v2835 = vadd.f32 %v2834, 1.0
        %v2836 = vmul.f32 %v2835, %v2107
        %v2837 = vand.u32 2147483647, %v2107
        %vm2838 = vcmp.lt.f32.partialorder %v2837, 0.0004427343
        %v2839 = vsel %vm2838, %v2836, %v2833
        %v2840 = vadd.f32 %v2109, 1.0
        %v2841 = vlog2.pop %v2840
        %v2842 = vmul.f32 %v2841, 0.6931472
        %v2843 = vmul.f32 -0.5, %v2109
        %v2844 = vadd.f32 %v2843, 1.0
        %v2845 = vmul.f32 %v2844, %v2109
        %v2846 = vand.u32 2147483647, %v2109
        %vm2847 = vcmp.lt.f32.partialorder %v2846, 0.0004427343
        %v2848 = vsel %vm2847, %v2845, %v2842
        %v2849 = vadd.f32 %v2111, 1.0
        %v2850 = vlog2.pop %v2849
        %v2851 = vmul.f32 %v2850, 0.6931472
        %v2852 = vmul.f32 -0.5, %v2111
        %v2853 = vadd.f32 %v2852, 1.0
        %v2854 = vmul.f32 %v2853, %v2111
        %v2855 = vand.u32 2147483647, %v2111
        %vm2856 = vcmp.lt.f32.partialorder %v2855, 0.0004427343
        %v2857 = vsel %vm2856, %v2854, %v2851
        %v2858 = vadd.f32 %v2113, 1.0
        %v2859 = vlog2.pop %v2858
        %v2860 = vmul.f32 %v2859, 0.6931472
        %v2861 = vmul.f32 -0.5, %v2113
        %v2862 = vadd.f32 %v2861, 1.0
        %v2863 = vmul.f32 %v2862, %v2113
        %v2864 = vand.u32 2147483647, %v2113
        %vm2865 = vcmp.lt.f32.partialorder %v2864, 0.0004427343
        %v2866 = vsel %vm2865, %v2863, %v2860
        %v2867 = vadd.f32 %v2115, 1.0
        %v2868 = vlog2.pop %v2867
        %v2869 = vmul.f32 %v2868, 0.6931472
        %v2870 = vmul.f32 -0.5, %v2115
        %v2871 = vadd.f32 %v2870, 1.0
        %v2872 = vmul.f32 %v2871, %v2115
        %v2873 = vand.u32 2147483647, %v2115
        %vm2874 = vcmp.lt.f32.partialorder %v2873, 0.0004427343
        %v2875 = vsel %vm2874, %v2872, %v2869
        %v2876 = vadd.f32 %v2117, 1.0
        %v2877 = vlog2.pop %v2876
        %v2878 = vmul.f32 %v2877, 0.6931472
        %v2879 = vmul.f32 -0.5, %v2117
        %v2880 = vadd.f32 %v2879, 1.0
        %v2881 = vmul.f32 %v2880, %v2117
        %v2882 = vand.u32 2147483647, %v2117
        %vm2883 = vcmp.lt.f32.partialorder %v2882, 0.0004427343
        %v2884 = vsel %vm2883, %v2881, %v2878
        %v2885 = vadd.f32 %v2119, 1.0
        %v2886 = vlog2.pop %v2885
        %v2887 = vmul.f32 %v2886, 0.6931472
        %v2888 = vmul.f32 -0.5, %v2119
        %v2889 = vadd.f32 %v2888, 1.0
        %v2890 = vmul.f32 %v2889, %v2119
        %v2891 = vand.u32 2147483647, %v2119
        %vm2892 = vcmp.lt.f32.partialorder %v2891, 0.0004427343
        %v2893 = vsel %vm2892, %v2890, %v2887
        %v2894 = vadd.f32 %v2121, 1.0
        %v2895 = vlog2.pop %v2894
        %v2896 = vmul.f32 %v2895, 0.6931472
        %v2897 = vmul.f32 -0.5, %v2121
        %v2898 = vadd.f32 %v2897, 1.0
        %v2899 = vmul.f32 %v2898, %v2121
        %v2900 = vand.u32 2147483647, %v2121
        %vm2901 = vcmp.lt.f32.partialorder %v2900, 0.0004427343
        %v2902 = vsel %vm2901, %v2899, %v2896
        %v2903 = vadd.f32 %v2123, 1.0
        %v2904 = vlog2.pop %v2903
        %v2905 = vmul.f32 %v2904, 0.6931472
        %v2906 = vmul.f32 -0.5, %v2123
        %v2907 = vadd.f32 %v2906, 1.0
        %v2908 = vmul.f32 %v2907, %v2123
        %v2909 = vand.u32 2147483647, %v2123
        %vm2910 = vcmp.lt.f32.partialorder %v2909, 0.0004427343
        %v2911 = vsel %vm2910, %v2908, %v2905
        %v2912 = vadd.f32 %v2125, 1.0
        %v2913 = vlog2.pop %v2912
        %v2914 = vmul.f32 %v2913, 0.6931472
        %v2915 = vmul.f32 -0.5, %v2125
        %v2916 = vadd.f32 %v2915, 1.0
        %v2917 = vmul.f32 %v2916, %v2125
        %v2918 = vand.u32 2147483647, %v2125
        %vm2919 = vcmp.lt.f32.partialorder %v2918, 0.0004427343
        %v2920 = vsel %vm2919, %v2917, %v2914
        %v2921 = vadd.f32 %v2127, 1.0
        %v2922 = vlog2.pop %v2921
        %v2923 = vmul.f32 %v2922, 0.6931472
        %v2924 = vmul.f32 -0.5, %v2127
        %v2925 = vadd.f32 %v2924, 1.0
        %v2926 = vmul.f32 %v2925, %v2127
        %v2927 = vand.u32 2147483647, %v2127
        %vm2928 = vcmp.lt.f32.partialorder %v2927, 0.0004427343
        %v2929 = vsel %vm2928, %v2926, %v2923
        %v2930 = vadd.f32 %v2129, 1.0
        %v2931 = vlog2.pop %v2930
        %v2932 = vmul.f32 %v2931, 0.6931472
        %v2933 = vmul.f32 -0.5, %v2129
        %v2934 = vadd.f32 %v2933, 1.0
        %v2935 = vmul.f32 %v2934, %v2129
        %v2936 = vand.u32 2147483647, %v2129
        %vm2937 = vcmp.lt.f32.partialorder %v2936, 0.0004427343
        %v2938 = vsel %vm2937, %v2935, %v2932
        %v2939 = vadd.f32 %v2131, 1.0
        %v2940 = vlog2.pop %v2939
        %v2941 = vmul.f32 %v2940, 0.6931472
        %v2942 = vmul.f32 -0.5, %v2131
        %v2943 = vadd.f32 %v2942, 1.0
        %v2944 = vmul.f32 %v2943, %v2131
        %v2945 = vand.u32 2147483647, %v2131
        %vm2946 = vcmp.lt.f32.partialorder %v2945, 0.0004427343
        %v2947 = vsel %vm2946, %v2944, %v2941
        %v2948 = vadd.f32 %v2133, 1.0
        %v2949 = vlog2.pop %v2948
        %v2950 = vmul.f32 %v2949, 0.6931472
        %v2951 = vmul.f32 -0.5, %v2133
        %v2952 = vadd.f32 %v2951, 1.0
        %v2953 = vmul.f32 %v2952, %v2133
        %v2954 = vand.u32 2147483647, %v2133
        %vm2955 = vcmp.lt.f32.partialorder %v2954, 0.0004427343
        %v2956 = vsel %vm2955, %v2953, %v2950
        %v2957 = vadd.f32 %v2135, 1.0
        %v2958 = vlog2.pop %v2957
        %v2959 = vmul.f32 %v2958, 0.6931472
        %v2960 = vmul.f32 -0.5, %v2135
        %v2961 = vadd.f32 %v2960, 1.0
        %v2962 = vmul.f32 %v2961, %v2135
        %v2963 = vand.u32 2147483647, %v2135
        %vm2964 = vcmp.lt.f32.partialorder %v2963, 0.0004427343
        %v2965 = vsel %vm2964, %v2962, %v2959
        %v2966 = vadd.f32 %v2137, 1.0
        %v2967 = vlog2.pop %v2966
        %v2968 = vmul.f32 %v2967, 0.6931472
        %v2969 = vmul.f32 -0.5, %v2137
        %v2970 = vadd.f32 %v2969, 1.0
        %v2971 = vmul.f32 %v2970, %v2137
        %v2972 = vand.u32 2147483647, %v2137
        %vm2973 = vcmp.lt.f32.partialorder %v2972, 0.0004427343
        %v2974 = vsel %vm2973, %v2971, %v2968
        %v2975 = vadd.f32 %v2139, 1.0
        %v2976 = vlog2.pop %v2975
        %v2977 = vmul.f32 %v2976, 0.6931472
        %v2978 = vmul.f32 -0.5, %v2139
        %v2979 = vadd.f32 %v2978, 1.0
        %v2980 = vmul.f32 %v2979, %v2139
        %v2981 = vand.u32 2147483647, %v2139
        %vm2982 = vcmp.lt.f32.partialorder %v2981, 0.0004427343
        %v2983 = vsel %vm2982, %v2980, %v2977
        %v2984 = vadd.f32 %v2141, 1.0
        %v2985 = vlog2.pop %v2984
        %v2986 = vmul.f32 %v2985, 0.6931472
        %v2987 = vmul.f32 -0.5, %v2141
        %v2988 = vadd.f32 %v2987, 1.0
        %v2989 = vmul.f32 %v2988, %v2141
        %v2990 = vand.u32 2147483647, %v2141
        %vm2991 = vcmp.lt.f32.partialorder %v2990, 0.0004427343
        %v2992 = vsel %vm2991, %v2989, %v2986
        %v2993 = vadd.f32 %v2143, 1.0
        %v2994 = vlog2.pop %v2993
        %v2995 = vmul.f32 %v2994, 0.6931472
        %v2996 = vmul.f32 -0.5, %v2143
        %v2997 = vadd.f32 %v2996, 1.0
        %v2998 = vmul.f32 %v2997, %v2143
        %v2999 = vand.u32 2147483647, %v2143
        %vm3000 = vcmp.lt.f32.partialorder %v2999, 0.0004427343
        %v3001 = vsel %vm3000, %v2998, %v2995
        %v3002 = vadd.f32 %v2145, 1.0
        %v3003 = vlog2.pop %v3002
        %v3004 = vmul.f32 %v3003, 0.6931472
        %v3005 = vmul.f32 -0.5, %v2145
        %v3006 = vadd.f32 %v3005, 1.0
        %v3007 = vmul.f32 %v3006, %v2145
        %v3008 = vand.u32 2147483647, %v2145
        %vm3009 = vcmp.lt.f32.partialorder %v3008, 0.0004427343
        %v3010 = vsel %vm3009, %v3007, %v3004
        %v3011 = vadd.f32 %v2147, 1.0
        %v3012 = vlog2.pop %v3011
        %v3013 = vmul.f32 %v3012, 0.6931472
        %v3014 = vmul.f32 -0.5, %v2147
        %v3015 = vadd.f32 %v3014, 1.0
        %v3016 = vmul.f32 %v3015, %v2147
        %v3017 = vand.u32 2147483647, %v2147
        %vm3018 = vcmp.lt.f32.partialorder %v3017, 0.0004427343
        %v3019 = vsel %vm3018, %v3016, %v3013
        %v3020 = vadd.f32 %v2149, 1.0
        %v3021 = vlog2.pop %v3020
        %v3022 = vmul.f32 %v3021, 0.6931472
        %v3023 = vmul.f32 -0.5, %v2149
        %v3024 = vadd.f32 %v3023, 1.0
        %v3025 = vmul.f32 %v3024, %v2149
        %v3026 = vand.u32 2147483647, %v2149
        %vm3027 = vcmp.lt.f32.partialorder %v3026, 0.0004427343
        %v3028 = vsel %vm3027, %v3025, %v3022
        %v3029 = vadd.f32 %v2151, 1.0
        %v3030 = vlog2.pop %v3029
        %v3031 = vmul.f32 %v3030, 0.6931472
        %v3032 = vmul.f32 -0.5, %v2151
        %v3033 = vadd.f32 %v3032, 1.0
        %v3034 = vmul.f32 %v3033, %v2151
        %v3035 = vand.u32 2147483647, %v2151
        %vm3036 = vcmp.lt.f32.partialorder %v3035, 0.0004427343
        %v3037 = vsel %vm3036, %v3034, %v3031
        %v3038 = vadd.f32 %v2153, 1.0
        %v3039 = vlog2.pop %v3038
        %v3040 = vmul.f32 %v3039, 0.6931472
        %v3041 = vmul.f32 -0.5, %v2153
        %v3042 = vadd.f32 %v3041, 1.0
        %v3043 = vmul.f32 %v3042, %v2153
        %v3044 = vand.u32 2147483647, %v2153
        %vm3045 = vcmp.lt.f32.partialorder %v3044, 0.0004427343
        %v3046 = vsel %vm3045, %v3043, %v3040
        %v3047 = vadd.f32 %v2155, 1.0
        %v3048 = vlog2.pop %v3047
        %v3049 = vmul.f32 %v3048, 0.6931472
        %v3050 = vmul.f32 -0.5, %v2155
        %v3051 = vadd.f32 %v3050, 1.0
        %v3052 = vmul.f32 %v3051, %v2155
        %v3053 = vand.u32 2147483647, %v2155
        %vm3054 = vcmp.lt.f32.partialorder %v3053, 0.0004427343
        %v3055 = vsel %vm3054, %v3052, %v3049
        %v3056 = vadd.f32 %v2157, 1.0
        %v3057 = vlog2.pop %v3056
        %v3058 = vmul.f32 %v3057, 0.6931472
        %v3059 = vmul.f32 -0.5, %v2157
        %v3060 = vadd.f32 %v3059, 1.0
        %v3061 = vmul.f32 %v3060, %v2157
        %v3062 = vand.u32 2147483647, %v2157
        %vm3063 = vcmp.lt.f32.partialorder %v3062, 0.0004427343
        %v3064 = vsel %vm3063, %v3061, %v3058
        %v3065 = vadd.f32 %v2159, 1.0
        %v3066 = vlog2.pop %v3065
        %v3067 = vmul.f32 %v3066, 0.6931472
        %v3068 = vmul.f32 -0.5, %v2159
        %v3069 = vadd.f32 %v3068, 1.0
        %v3070 = vmul.f32 %v3069, %v2159
        %v3071 = vand.u32 2147483647, %v2159
        %vm3072 = vcmp.lt.f32.partialorder %v3071, 0.0004427343
        %v3073 = vsel %vm3072, %v3070, %v3067
        %v3074 = vadd.f32 %v2161, 1.0
        %v3075 = vlog2.pop %v3074
        %v3076 = vmul.f32 %v3075, 0.6931472
        %v3077 = vmul.f32 -0.5, %v2161
        %v3078 = vadd.f32 %v3077, 1.0
        %v3079 = vmul.f32 %v3078, %v2161
        %v3080 = vand.u32 2147483647, %v2161
        %vm3081 = vcmp.lt.f32.partialorder %v3080, 0.0004427343
        %v3082 = vsel %vm3081, %v3079, %v3076
        %v3083 = vadd.f32 %v2163, 1.0
        %v3084 = vlog2.pop %v3083
        %v3085 = vmul.f32 %v3084, 0.6931472
        %v3086 = vmul.f32 -0.5, %v2163
        %v3087 = vadd.f32 %v3086, 1.0
        %v3088 = vmul.f32 %v3087, %v2163
        %v3089 = vand.u32 2147483647, %v2163
        %vm3090 = vcmp.lt.f32.partialorder %v3089, 0.0004427343
        %v3091 = vsel %vm3090, %v3088, %v3085
        %v3092 = vadd.f32 %v2165, 1.0
        %v3093 = vlog2.pop %v3092
        %v3094 = vmul.f32 %v3093, 0.6931472
        %v3095 = vmul.f32 -0.5, %v2165
        %v3096 = vadd.f32 %v3095, 1.0
        %v3097 = vmul.f32 %v3096, %v2165
        %v3098 = vand.u32 2147483647, %v2165
        %vm3099 = vcmp.lt.f32.partialorder %v3098, 0.0004427343
        %v3100 = vsel %vm3099, %v3097, %v3094
        %v3101 = vadd.f32 %v2167, 1.0
        %v3102 = vlog2.pop %v3101
        %v3103 = vmul.f32 %v3102, 0.6931472
        %v3104 = vmul.f32 -0.5, %v2167
        %v3105 = vadd.f32 %v3104, 1.0
        %v3106 = vmul.f32 %v3105, %v2167
        %v3107 = vand.u32 2147483647, %v2167
        %vm3108 = vcmp.lt.f32.partialorder %v3107, 0.0004427343
        %v3109 = vsel %vm3108, %v3106, %v3103
        %v3110 = vadd.f32 %v2169, 1.0
        %v3111 = vlog2.pop %v3110
        %v3112 = vmul.f32 %v3111, 0.6931472
        %v3113 = vmul.f32 -0.5, %v2169
        %v3114 = vadd.f32 %v3113, 1.0
        %v3115 = vmul.f32 %v3114, %v2169
        %v3116 = vand.u32 2147483647, %v2169
        %vm3117 = vcmp.lt.f32.partialorder %v3116, 0.0004427343
        %v3118 = vsel %vm3117, %v3115, %v3112
        %v3119 = vadd.f32 %v2171, 1.0
        %v3120 = vlog2.pop %v3119
        %v3121 = vmul.f32 %v3120, 0.6931472
        %v3122 = vmul.f32 -0.5, %v2171
        %v3123 = vadd.f32 %v3122, 1.0
        %v3124 = vmul.f32 %v3123, %v2171
        %v3125 = vand.u32 2147483647, %v2171
        %vm3126 = vcmp.lt.f32.partialorder %v3125, 0.0004427343
        %v3127 = vsel %vm3126, %v3124, %v3121
        %v3128 = vadd.f32 %v2173, 1.0
        %v3129 = vlog2.pop %v3128
        %v3130 = vmul.f32 %v3129, 0.6931472
        %v3131 = vmul.f32 -0.5, %v2173
        %v3132 = vadd.f32 %v3131, 1.0
        %v3133 = vmul.f32 %v3132, %v2173
        %v3134 = vand.u32 2147483647, %v2173
        %vm3135 = vcmp.lt.f32.partialorder %v3134, 0.0004427343
        %v3136 = vsel %vm3135, %v3133, %v3130
        %v3137 = vadd.f32 %v2175, 1.0
        %v3138 = vlog2.pop %v3137
        %v3139 = vmul.f32 %v3138, 0.6931472
        %v3140 = vmul.f32 -0.5, %v2175
        %v3141 = vadd.f32 %v3140, 1.0
        %v3142 = vmul.f32 %v3141, %v2175
        %v3143 = vand.u32 2147483647, %v2175
        %vm3144 = vcmp.lt.f32.partialorder %v3143, 0.0004427343
        %v3145 = vsel %vm3144, %v3142, %v3139
        %v3146 = vadd.f32 %v2177, 1.0
        %v3147 = vlog2.pop %v3146
        %v3148 = vmul.f32 %v3147, 0.6931472
        %v3149 = vmul.f32 -0.5, %v2177
        %v3150 = vadd.f32 %v3149, 1.0
        %v3151 = vmul.f32 %v3150, %v2177
        %v3152 = vand.u32 2147483647, %v2177
        %vm3153 = vcmp.lt.f32.partialorder %v3152, 0.0004427343
        %v3154 = vsel %vm3153, %v3151, %v3148
        %v3155 = vadd.f32 %v2179, 1.0
        %v3156 = vlog2.pop %v3155
        %v3157 = vmul.f32 %v3156, 0.6931472
        %v3158 = vmul.f32 -0.5, %v2179
        %v3159 = vadd.f32 %v3158, 1.0
        %v3160 = vmul.f32 %v3159, %v2179
        %v3161 = vand.u32 2147483647, %v2179
        %vm3162 = vcmp.lt.f32.partialorder %v3161, 0.0004427343
        %v3163 = vsel %vm3162, %v3160, %v3157
        %v3164 = vadd.f32 %v2181, 1.0
        %v3165 = vlog2.pop %v3164
        %v3166 = vmul.f32 %v3165, 0.6931472
        %v3167 = vmul.f32 -0.5, %v2181
        %v3168 = vadd.f32 %v3167, 1.0
        %v3169 = vmul.f32 %v3168, %v2181
        %v3170 = vand.u32 2147483647, %v2181
        %vm3171 = vcmp.lt.f32.partialorder %v3170, 0.0004427343
        %v3172 = vsel %vm3171, %v3169, %v3166
        %v3173 = vadd.f32 %v2183, 1.0
        %v3174 = vlog2.pop %v3173
        %v3175 = vmul.f32 %v3174, 0.6931472
        %v3176 = vmul.f32 -0.5, %v2183
        %v3177 = vadd.f32 %v3176, 1.0
        %v3178 = vmul.f32 %v3177, %v2183
        %v3179 = vand.u32 2147483647, %v2183
        %vm3180 = vcmp.lt.f32.partialorder %v3179, 0.0004427343
        %v3181 = vsel %vm3180, %v3178, %v3175
        %v3182 = vadd.f32 %v2185, 1.0
        %v3183 = vlog2.pop %v3182
        %v3184 = vmul.f32 %v3183, 0.6931472
        %v3185 = vmul.f32 -0.5, %v2185
        %v3186 = vadd.f32 %v3185, 1.0
        %v3187 = vmul.f32 %v3186, %v2185
        %v3188 = vand.u32 2147483647, %v2185
        %vm3189 = vcmp.lt.f32.partialorder %v3188, 0.0004427343
        %v3190 = vsel %vm3189, %v3187, %v3184
        %v3191 = vadd.f32 %v2187, 1.0
        %v3192 = vlog2.pop %v3191
        %v3193 = vmul.f32 %v3192, 0.6931472
        %v3194 = vmul.f32 -0.5, %v2187
        %v3195 = vadd.f32 %v3194, 1.0
        %v3196 = vmul.f32 %v3195, %v2187
        %v3197 = vand.u32 2147483647, %v2187
        %vm3198 = vcmp.lt.f32.partialorder %v3197, 0.0004427343
        %v3199 = vsel %vm3198, %v3196, %v3193
        %v3200 = vadd.f32 %v2189, 1.0
        %v3201 = vlog2.pop %v3200
        %v3202 = vmul.f32 %v3201, 0.6931472
        %v3203 = vmul.f32 -0.5, %v2189
        %v3204 = vadd.f32 %v3203, 1.0
        %v3205 = vmul.f32 %v3204, %v2189
        %v3206 = vand.u32 2147483647, %v2189
        %vm3207 = vcmp.lt.f32.partialorder %v3206, 0.0004427343
        %v3208 = vsel %vm3207, %v3205, %v3202
        %v3209 = vadd.f32 %v2191, 1.0
        %v3210 = vlog2.pop %v3209
        %v3211 = vmul.f32 %v3210, 0.6931472
        %v3212 = vmul.f32 -0.5, %v2191
        %v3213 = vadd.f32 %v3212, 1.0
        %v3214 = vmul.f32 %v3213, %v2191
        %v3215 = vand.u32 2147483647, %v2191
        %vm3216 = vcmp.lt.f32.partialorder %v3215, 0.0004427343
        %v3217 = vsel %vm3216, %v3214, %v3211
        %v3218 = vadd.f32 %v2193, 1.0
        %v3219 = vlog2.pop %v3218
        %v3220 = vmul.f32 %v3219, 0.6931472
        %v3221 = vmul.f32 -0.5, %v2193
        %v3222 = vadd.f32 %v3221, 1.0
        %v3223 = vmul.f32 %v3222, %v2193
        %v3224 = vand.u32 2147483647, %v2193
        %vm3225 = vcmp.lt.f32.partialorder %v3224, 0.0004427343
        %v3226 = vsel %vm3225, %v3223, %v3220
        %v3227 = vadd.f32 %v2195, 1.0
        %v3228 = vlog2.pop %v3227
        %v3229 = vmul.f32 %v3228, 0.6931472
        %v3230 = vmul.f32 -0.5, %v2195
        %v3231 = vadd.f32 %v3230, 1.0
        %v3232 = vmul.f32 %v3231, %v2195
        %v3233 = vand.u32 2147483647, %v2195
        %vm3234 = vcmp.lt.f32.partialorder %v3233, 0.0004427343
        %v3235 = vsel %vm3234, %v3232, %v3229
        %v3236 = vadd.f32 %v2197, 1.0
        %v3237 = vlog2.pop %v3236
        %v3238 = vmul.f32 %v3237, 0.6931472
        %v3239 = vmul.f32 -0.5, %v2197
        %v3240 = vadd.f32 %v3239, 1.0
        %v3241 = vmul.f32 %v3240, %v2197
        %v3242 = vand.u32 2147483647, %v2197
        %vm3243 = vcmp.lt.f32.partialorder %v3242, 0.0004427343
        %v3244 = vsel %vm3243, %v3241, %v3238
        %v3245 = vadd.f32 %v2199, 1.0
        %v3246 = vlog2.pop %v3245
        %v3247 = vmul.f32 %v3246, 0.6931472
        %v3248 = vmul.f32 -0.5, %v2199
        %v3249 = vadd.f32 %v3248, 1.0
        %v3250 = vmul.f32 %v3249, %v2199
        %v3251 = vand.u32 2147483647, %v2199
        %vm3252 = vcmp.lt.f32.partialorder %v3251, 0.0004427343
        %v3253 = vsel %vm3252, %v3250, %v3247
        %v3254 = vadd.f32 %v2201, 1.0
        %v3255 = vlog2.pop %v3254
        %v3256 = vmul.f32 %v3255, 0.6931472
        %v3257 = vmul.f32 -0.5, %v2201
        %v3258 = vadd.f32 %v3257, 1.0
        %v3259 = vmul.f32 %v3258, %v2201
        %v3260 = vand.u32 2147483647, %v2201
        %vm3261 = vcmp.lt.f32.partialorder %v3260, 0.0004427343
        %v3262 = vsel %vm3261, %v3259, %v3256
        %v3263 = vadd.f32 %v2203, 1.0
        %v3264 = vlog2.pop %v3263
        %v3265 = vmul.f32 %v3264, 0.6931472
        %v3266 = vmul.f32 -0.5, %v2203
        %v3267 = vadd.f32 %v3266, 1.0
        %v3268 = vmul.f32 %v3267, %v2203
        %v3269 = vand.u32 2147483647, %v2203
        %vm3270 = vcmp.lt.f32.partialorder %v3269, 0.0004427343
        %v3271 = vsel %vm3270, %v3268, %v3265
        %v3272 = vadd.f32 %v2205, 1.0
        %v3273 = vlog2.pop %v3272
        %v3274 = vmul.f32 %v3273, 0.6931472
        %v3275 = vmul.f32 -0.5, %v2205
        %v3276 = vadd.f32 %v3275, 1.0
        %v3277 = vmul.f32 %v3276, %v2205
        %v3278 = vand.u32 2147483647, %v2205
        %vm3279 = vcmp.lt.f32.partialorder %v3278, 0.0004427343
        %v3280 = vsel %vm3279, %v3277, %v3274
        %v3281 = vadd.f32 %v2207, 1.0
        %v3282 = vlog2.pop %v3281
        %v3283 = vmul.f32 %v3282, 0.6931472
        %v3284 = vmul.f32 -0.5, %v2207
        %v3285 = vadd.f32 %v3284, 1.0
        %v3286 = vmul.f32 %v3285, %v2207
        %v3287 = vand.u32 2147483647, %v2207
        %vm3288 = vcmp.lt.f32.partialorder %v3287, 0.0004427343
        %v3289 = vsel %vm3288, %v3286, %v3283
        %v3290 = vadd.f32 %v2209, 1.0
        %v3291 = vlog2.pop %v3290
        %v3292 = vmul.f32 %v3291, 0.6931472
        %v3293 = vmul.f32 -0.5, %v2209
        %v3294 = vadd.f32 %v3293, 1.0
        %v3295 = vmul.f32 %v3294, %v2209
        %v3296 = vand.u32 2147483647, %v2209
        %vm3297 = vcmp.lt.f32.partialorder %v3296, 0.0004427343
        %v3298 = vsel %vm3297, %v3295, %v3292
        %v3299 = vadd.f32 %v2211, 1.0
        %v3300 = vlog2.pop %v3299
        %v3301 = vmul.f32 %v3300, 0.6931472
        %v3302 = vmul.f32 -0.5, %v2211
        %v3303 = vadd.f32 %v3302, 1.0
        %v3304 = vmul.f32 %v3303, %v2211
        %v3305 = vand.u32 2147483647, %v2211
        %vm3306 = vcmp.lt.f32.partialorder %v3305, 0.0004427343
        %v3307 = vsel %vm3306, %v3304, %v3301
        %v3308 = vadd.f32 %v2213, 1.0
        %v3309 = vlog2.pop %v3308
        %v3310 = vmul.f32 %v3309, 0.6931472
        %v3311 = vmul.f32 -0.5, %v2213
        %v3312 = vadd.f32 %v3311, 1.0
        %v3313 = vmul.f32 %v3312, %v2213
        %v3314 = vand.u32 2147483647, %v2213
        %vm3315 = vcmp.lt.f32.partialorder %v3314, 0.0004427343
        %v3316 = vsel %vm3315, %v3313, %v3310
        %v3317 = vadd.f32 %v2215, 1.0
        %v3318 = vlog2.pop %v3317
        %v3319 = vmul.f32 %v3318, 0.6931472
        %v3320 = vmul.f32 -0.5, %v2215
        %v3321 = vadd.f32 %v3320, 1.0
        %v3322 = vmul.f32 %v3321, %v2215
        %v3323 = vand.u32 2147483647, %v2215
        %vm3324 = vcmp.lt.f32.partialorder %v3323, 0.0004427343
        %v3325 = vsel %vm3324, %v3322, %v3319
        %v3326 = vadd.f32 %v2217, 1.0
        %v3327 = vlog2.pop %v3326
        %v3328 = vmul.f32 %v3327, 0.6931472
        %v3329 = vmul.f32 -0.5, %v2217
        %v3330 = vadd.f32 %v3329, 1.0
        %v3331 = vmul.f32 %v3330, %v2217
        %v3332 = vand.u32 2147483647, %v2217
        %vm3333 = vcmp.lt.f32.partialorder %v3332, 0.0004427343
        %v3334 = vsel %vm3333, %v3331, %v3328
        %v3335 = vadd.f32 %v2219, 1.0
        %v3336 = vlog2.pop %v3335
        %v3337 = vmul.f32 %v3336, 0.6931472
        %v3338 = vmul.f32 -0.5, %v2219
        %v3339 = vadd.f32 %v3338, 1.0
        %v3340 = vmul.f32 %v3339, %v2219
        %v3341 = vand.u32 2147483647, %v2219
        %vm3342 = vcmp.lt.f32.partialorder %v3341, 0.0004427343
        %v3343 = vsel %vm3342, %v3340, %v3337
        %v3344 = vadd.f32 %v2221, 1.0
        %v3345 = vlog2.pop %v3344
        %v3346 = vmul.f32 %v3345, 0.6931472
        %v3347 = vmul.f32 -0.5, %v2221
        %v3348 = vadd.f32 %v3347, 1.0
        %v3349 = vmul.f32 %v3348, %v2221
        %v3350 = vand.u32 2147483647, %v2221
        %vm3351 = vcmp.lt.f32.partialorder %v3350, 0.0004427343
        %v3352 = vsel %vm3351, %v3349, %v3346
        %v3353 = vadd.f32 %v2223, 1.0
        %v3354 = vlog2.pop %v3353
        %v3355 = vmul.f32 %v3354, 0.6931472
        %v3356 = vmul.f32 -0.5, %v2223
        %v3357 = vadd.f32 %v3356, 1.0
        %v3358 = vmul.f32 %v3357, %v2223
        %v3359 = vand.u32 2147483647, %v2223
        %vm3360 = vcmp.lt.f32.partialorder %v3359, 0.0004427343
        %v3361 = vsel %vm3360, %v3358, %v3355
        %v3362 = vadd.f32 %v2225, 1.0
        %v3363 = vlog2.pop %v3362
        %v3364 = vmul.f32 %v3363, 0.6931472
        %v3365 = vmul.f32 -0.5, %v2225
        %v3366 = vadd.f32 %v3365, 1.0
        %v3367 = vmul.f32 %v3366, %v2225
        %v3368 = vand.u32 2147483647, %v2225
        %vm3369 = vcmp.lt.f32.partialorder %v3368, 0.0004427343
        %v3370 = vsel %vm3369, %v3367, %v3364
        %v3371 = vadd.f32 %v2227, 1.0
        %v3372 = vlog2.pop %v3371
        %v3373 = vmul.f32 %v3372, 0.6931472
        %v3374 = vmul.f32 -0.5, %v2227
        %v3375 = vadd.f32 %v3374, 1.0
        %v3376 = vmul.f32 %v3375, %v2227
        %v3377 = vand.u32 2147483647, %v2227
        %vm3378 = vcmp.lt.f32.partialorder %v3377, 0.0004427343
        %v3379 = vsel %vm3378, %v3376, %v3373
        %v3380 = vsel %vm1716, %v1588, %v2236
        %v3381 = vsel %vm1717, %v1589, %v2245
        %v3382 = vsel %vm1718, %v1590, %v2254
        %v3383 = vsel %vm1719, %v1591, %v2263
        %v3384 = vsel %vm1720, %v1592, %v2272
        %v3385 = vsel %vm1721, %v1593, %v2281
        %v3386 = vsel %vm1722, %v1594, %v2290
        %v3387 = vsel %vm1723, %v1595, %v2299
        %v3388 = vsel %vm1724, %v1596, %v2308
        %v3389 = vsel %vm1725, %v1597, %v2317
        %v3390 = vsel %vm1726, %v1598, %v2326
        %v3391 = vsel %vm1727, %v1599, %v2335
        %v3392 = vsel %vm1728, %v1600, %v2344
        %v3393 = vsel %vm1729, %v1601, %v2353
        %v3394 = vsel %vm1730, %v1602, %v2362
        %v3395 = vsel %vm1731, %v1603, %v2371
        %v3396 = vsel %vm1732, %v1604, %v2380
        %v3397 = vsel %vm1733, %v1605, %v2389
        %v3398 = vsel %vm1734, %v1606, %v2398
        %v3399 = vsel %vm1735, %v1607, %v2407
        %v3400 = vsel %vm1736, %v1608, %v2416
        %v3401 = vsel %vm1737, %v1609, %v2425
        %v3402 = vsel %vm1738, %v1610, %v2434
        %v3403 = vsel %vm1739, %v1611, %v2443
        %v3404 = vsel %vm1740, %v1612, %v2452
        %v3405 = vsel %vm1741, %v1613, %v2461
        %v3406 = vsel %vm1742, %v1614, %v2470
        %v3407 = vsel %vm1743, %v1615, %v2479
        %v3408 = vsel %vm1744, %v1616, %v2488
        %v3409 = vsel %vm1745, %v1617, %v2497
        %v3410 = vsel %vm1746, %v1618, %v2506
        %v3411 = vsel %vm1747, %v1619, %v2515
        %v3412 = vsel %vm1748, %v1620, %v2524
        %v3413 = vsel %vm1749, %v1621, %v2533
        %v3414 = vsel %vm1750, %v1622, %v2542
        %v3415 = vsel %vm1751, %v1623, %v2551
        %v3416 = vsel %vm1752, %v1624, %v2560
        %v3417 = vsel %vm1753, %v1625, %v2569
        %v3418 = vsel %vm1754, %v1626, %v2578
        %v3419 = vsel %vm1755, %v1627, %v2587
        %v3420 = vsel %vm1756, %v1628, %v2596
        %v3421 = vsel %vm1757, %v1629, %v2605
        %v3422 = vsel %vm1758, %v1630, %v2614
        %v3423 = vsel %vm1759, %v1631, %v2623
        %v3424 = vsel %vm1760, %v1632, %v2632
        %v3425 = vsel %vm1761, %v1633, %v2641
        %v3426 = vsel %vm1762, %v1634, %v2650
        %v3427 = vsel %vm1763, %v1635, %v2659
        %v3428 = vsel %vm1764, %v1636, %v2668
        %v3429 = vsel %vm1765, %v1637, %v2677
        %v3430 = vsel %vm1766, %v1638, %v2686
        %v3431 = vsel %vm1767, %v1639, %v2695
        %v3432 = vsel %vm1768, %v1640, %v2704
        %v3433 = vsel %vm1769, %v1641, %v2713
        %v3434 = vsel %vm1770, %v1642, %v2722
        %v3435 = vsel %vm1771, %v1643, %v2731
        %v3436 = vsel %vm1772, %v1644, %v2740
        %v3437 = vsel %vm1773, %v1645, %v2749
        %v3438 = vsel %vm1774, %v1646, %v2758
        %v3439 = vsel %vm1775, %v1647, %v2767
        %v3440 = vsel %vm1776, %v1648, %v2776
        %v3441 = vsel %vm1777, %v1649, %v2785
        %v3442 = vsel %vm1778, %v1650, %v2794
        %v3443 = vsel %vm1779, %v1651, %v2803
        %v3444 = vsel %vm1780, %v1652, %v2812
        %v3445 = vsel %vm1781, %v1653, %v2821
        %v3446 = vsel %vm1782, %v1654, %v2830
        %v3447 = vsel %vm1783, %v1655, %v2839
        %v3448 = vsel %vm1784, %v1656, %v2848
        %v3449 = vsel %vm1785, %v1657, %v2857
        %v3450 = vsel %vm1786, %v1658, %v2866
        %v3451 = vsel %vm1787, %v1659, %v2875
        %v3452 = vsel %vm1788, %v1660, %v2884
        %v3453 = vsel %vm1789, %v1661, %v2893
        %v3454 = vsel %vm1790, %v1662, %v2902
        %v3455 = vsel %vm1791, %v1663, %v2911
        %v3456 = vsel %vm1792, %v1664, %v2920
        %v3457 = vsel %vm1793, %v1665, %v2929
        %v3458 = vsel %vm1794, %v1666, %v2938
        %v3459 = vsel %vm1795, %v1667, %v2947
        %v3460 = vsel %vm1796, %v1668, %v2956
        %v3461 = vsel %vm1797, %v1669, %v2965
        %v3462 = vsel %vm1798, %v1670, %v2974
        %v3463 = vsel %vm1799, %v1671, %v2983
        %v3464 = vsel %vm1800, %v1672, %v2992
        %v3465 = vsel %vm1801, %v1673, %v3001
        %v3466 = vsel %vm1802, %v1674, %v3010
        %v3467 = vsel %vm1803, %v1675, %v3019
        %v3468 = vsel %vm1804, %v1676, %v3028
        %v3469 = vsel %vm1805, %v1677, %v3037
        %v3470 = vsel %vm1806, %v1678, %v3046
        %v3471 = vsel %vm1807, %v1679, %v3055
        %v3472 = vsel %vm1808, %v1680, %v3064
        %v3473 = vsel %vm1809, %v1681, %v3073
        %v3474 = vsel %vm1810, %v1682, %v3082
        %v3475 = vsel %vm1811, %v1683, %v3091
        %v3476 = vsel %vm1812, %v1684, %v3100
        %v3477 = vsel %vm1813, %v1685, %v3109
        %v3478 = vsel %vm1814, %v1686, %v3118
        %v3479 = vsel %vm1815, %v1687, %v3127
        %v3480 = vsel %vm1816, %v1688, %v3136
        %v3481 = vsel %vm1817, %v1689, %v3145
        %v3482 = vsel %vm1818, %v1690, %v3154
        %v3483 = vsel %vm1819, %v1691, %v3163
        %v3484 = vsel %vm1820, %v1692, %v3172
        %v3485 = vsel %vm1821, %v1693, %v3181
        %v3486 = vsel %vm1822, %v1694, %v3190
        %v3487 = vsel %vm1823, %v1695, %v3199
        %v3488 = vsel %vm1824, %v1696, %v3208
        %v3489 = vsel %vm1825, %v1697, %v3217
        %v3490 = vsel %vm1826, %v1698, %v3226
        %v3491 = vsel %vm1827, %v1699, %v3235
        %v3492 = vsel %vm1828, %v1700, %v3244
        %v3493 = vsel %vm1829, %v1701, %v3253
        %v3494 = vsel %vm1830, %v1702, %v3262
        %v3495 = vsel %vm1831, %v1703, %v3271
        %v3496 = vsel %vm1832, %v1704, %v3280
        %v3497 = vsel %vm1833, %v1705, %v3289
        %v3498 = vsel %vm1834, %v1706, %v3298
        %v3499 = vsel %vm1835, %v1707, %v3307
        %v3500 = vsel %vm1836, %v1708, %v3316
        %v3501 = vsel %vm1837, %v1709, %v3325
        %v3502 = vsel %vm1838, %v1710, %v3334
        %v3503 = vsel %vm1839, %v1711, %v3343
        %v3504 = vsel %vm1840, %v1712, %v3352
        %v3505 = vsel %vm1841, %v1713, %v3361
        %v3506 = vsel %vm1842, %v1714, %v3370
        %v3507 = vsel %vm1843, %v1715, %v3379
        %v3508 = vld [vmem:[%s1487] sm:$0xff]
        %v3509 = vld [vmem:[%s1487 + $0x8] sm:$0xff]
        %v3510 = vld [vmem:[%s1487 + $0x10] sm:$0xff]
        %v3511 = vld [vmem:[%s1487 + $0x18] sm:$0xff]
        %v3512 = vld [vmem:[%s1487 + $0x20] sm:$0xff]
        %v3513 = vld [vmem:[%s1487 + $0x28] sm:$0xff]
        %v3514 = vld [vmem:[%s1487 + $0x30] sm:$0xff]
        %v3515 = vld [vmem:[%s1487 + $0x38] sm:$0xff]
        %v3516 = vld [vmem:[%s1487 + $0x40] sm:$0xff]
        %v3517 = vld [vmem:[%s1487 + $0x48] sm:$0xff]
        %v3518 = vld [vmem:[%s1487 + $0x50] sm:$0xff]
        %v3519 = vld [vmem:[%s1487 + $0x58] sm:$0xff]
        %v3520 = vld [vmem:[%s1487 + $0x60] sm:$0xff]
        %v3521 = vld [vmem:[%s1487 + $0x68] sm:$0xff]
        %v3522 = vld [vmem:[%s1487 + $0x70] sm:$0xff]
        %v3523 = vld [vmem:[%s1487 + $0x78] sm:$0xff]
        %v3524 = vld [vmem:[%s1487 + $0x80] sm:$0xff]
        %v3525 = vld [vmem:[%s1487 + $0x88] sm:$0xff]
        %v3526 = vld [vmem:[%s1487 + $0x90] sm:$0xff]
        %v3527 = vld [vmem:[%s1487 + $0x98] sm:$0xff]
        %v3528 = vld [vmem:[%s1487 + $0xa0] sm:$0xff]
        %v3529 = vld [vmem:[%s1487 + $0xa8] sm:$0xff]
        %v3530 = vld [vmem:[%s1487 + $0xb0] sm:$0xff]
        %v3531 = vld [vmem:[%s1487 + $0xb8] sm:$0xff]
        %v3532 = vld [vmem:[%s1487 + $0xc0] sm:$0xff]
        %v3533 = vld [vmem:[%s1487 + $0xc8] sm:$0xff]
        %v3534 = vld [vmem:[%s1487 + $0xd0] sm:$0xff]
        %v3535 = vld [vmem:[%s1487 + $0xd8] sm:$0xff]
        %v3536 = vld [vmem:[%s1487 + $0xe0] sm:$0xff]
        %v3537 = vld [vmem:[%s1487 + $0xe8] sm:$0xff]
        %v3538 = vld [vmem:[%s1487 + $0xf0] sm:$0xff]
        %v3539 = vld [vmem:[%s1487 + $0xf8] sm:$0xff]
        %v3540 = vld [vmem:[%s1487 + $0x100] sm:$0xff]
        %v3541 = vld [vmem:[%s1487 + $0x108] sm:$0xff]
        %v3542 = vld [vmem:[%s1487 + $0x110] sm:$0xff]
        %v3543 = vld [vmem:[%s1487 + $0x118] sm:$0xff]
        %v3544 = vld [vmem:[%s1487 + $0x120] sm:$0xff]
        %v3545 = vld [vmem:[%s1487 + $0x128] sm:$0xff]
        %v3546 = vld [vmem:[%s1487 + $0x130] sm:$0xff]
        %v3547 = vld [vmem:[%s1487 + $0x138] sm:$0xff]
        %v3548 = vld [vmem:[%s1487 + $0x140] sm:$0xff]
        %v3549 = vld [vmem:[%s1487 + $0x148] sm:$0xff]
        %v3550 = vld [vmem:[%s1487 + $0x150] sm:$0xff]
        %v3551 = vld [vmem:[%s1487 + $0x158] sm:$0xff]
        %v3552 = vld [vmem:[%s1487 + $0x160] sm:$0xff]
        %v3553 = vld [vmem:[%s1487 + $0x168] sm:$0xff]
        %v3554 = vld [vmem:[%s1487 + $0x170] sm:$0xff]
        %v3555 = vld [vmem:[%s1487 + $0x178] sm:$0xff]
        %v3556 = vld [vmem:[%s1487 + $0x180] sm:$0xff]
        %v3557 = vld [vmem:[%s1487 + $0x188] sm:$0xff]
        %v3558 = vld [vmem:[%s1487 + $0x190] sm:$0xff]
        %v3559 = vld [vmem:[%s1487 + $0x198] sm:$0xff]
        %v3560 = vld [vmem:[%s1487 + $0x1a0] sm:$0xff]
        %v3561 = vld [vmem:[%s1487 + $0x1a8] sm:$0xff]
        %v3562 = vld [vmem:[%s1487 + $0x1b0] sm:$0xff]
        %v3563 = vld [vmem:[%s1487 + $0x1b8] sm:$0xff]
        %v3564 = vld [vmem:[%s1487 + $0x1c0] sm:$0xff]
        %v3565 = vld [vmem:[%s1487 + $0x1c8] sm:$0xff]
        %v3566 = vld [vmem:[%s1487 + $0x1d0] sm:$0xff]
        %v3567 = vld [vmem:[%s1487 + $0x1d8] sm:$0xff]
        %v3568 = vld [vmem:[%s1487 + $0x1e0] sm:$0xff]
        %v3569 = vld [vmem:[%s1487 + $0x1e8] sm:$0xff]
        %v3570 = vld [vmem:[%s1487 + $0x1f0] sm:$0xff]
        %v3571 = vld [vmem:[%s1487 + $0x1f8] sm:$0xff]
        %v3572 = vld [vmem:[%s1487 + $0x200] sm:$0xff]
        %v3573 = vld [vmem:[%s1487 + $0x208] sm:$0xff]
        %v3574 = vld [vmem:[%s1487 + $0x210] sm:$0xff]
        %v3575 = vld [vmem:[%s1487 + $0x218] sm:$0xff]
        %v3576 = vld [vmem:[%s1487 + $0x220] sm:$0xff]
        %v3577 = vld [vmem:[%s1487 + $0x228] sm:$0xff]
        %v3578 = vld [vmem:[%s1487 + $0x230] sm:$0xff]
        %v3579 = vld [vmem:[%s1487 + $0x238] sm:$0xff]
        %v3580 = vld [vmem:[%s1487 + $0x240] sm:$0xff]
        %v3581 = vld [vmem:[%s1487 + $0x248] sm:$0xff]
        %v3582 = vld [vmem:[%s1487 + $0x250] sm:$0xff]
        %v3583 = vld [vmem:[%s1487 + $0x258] sm:$0xff]
        %v3584 = vld [vmem:[%s1487 + $0x260] sm:$0xff]
        %v3585 = vld [vmem:[%s1487 + $0x268] sm:$0xff]
        %v3586 = vld [vmem:[%s1487 + $0x270] sm:$0xff]
        %v3587 = vld [vmem:[%s1487 + $0x278] sm:$0xff]
        %v3588 = vld [vmem:[%s1487 + $0x280] sm:$0xff]
        %v3589 = vld [vmem:[%s1487 + $0x288] sm:$0xff]
        %v3590 = vld [vmem:[%s1487 + $0x290] sm:$0xff]
        %v3591 = vld [vmem:[%s1487 + $0x298] sm:$0xff]
        %v3592 = vld [vmem:[%s1487 + $0x2a0] sm:$0xff]
        %v3593 = vld [vmem:[%s1487 + $0x2a8] sm:$0xff]
        %v3594 = vld [vmem:[%s1487 + $0x2b0] sm:$0xff]
        %v3595 = vld [vmem:[%s1487 + $0x2b8] sm:$0xff]
        %v3596 = vld [vmem:[%s1487 + $0x2c0] sm:$0xff]
        %v3597 = vld [vmem:[%s1487 + $0x2c8] sm:$0xff]
        %v3598 = vld [vmem:[%s1487 + $0x2d0] sm:$0xff]
        %v3599 = vld [vmem:[%s1487 + $0x2d8] sm:$0xff]
        %v3600 = vld [vmem:[%s1487 + $0x2e0] sm:$0xff]
        %v3601 = vld [vmem:[%s1487 + $0x2e8] sm:$0xff]
        %v3602 = vld [vmem:[%s1487 + $0x2f0] sm:$0xff]
        %v3603 = vld [vmem:[%s1487 + $0x2f8] sm:$0xff]
        %v3604 = vld [vmem:[%s1487 + $0x300] sm:$0xff]
        %v3605 = vld [vmem:[%s1487 + $0x308] sm:$0xff]
        %v3606 = vld [vmem:[%s1487 + $0x310] sm:$0xff]
        %v3607 = vld [vmem:[%s1487 + $0x318] sm:$0xff]
        %v3608 = vld [vmem:[%s1487 + $0x320] sm:$0xff]
        %v3609 = vld [vmem:[%s1487 + $0x328] sm:$0xff]
        %v3610 = vld [vmem:[%s1487 + $0x330] sm:$0xff]
        %v3611 = vld [vmem:[%s1487 + $0x338] sm:$0xff]
        %v3612 = vld [vmem:[%s1487 + $0x340] sm:$0xff]
        %v3613 = vld [vmem:[%s1487 + $0x348] sm:$0xff]
        %v3614 = vld [vmem:[%s1487 + $0x350] sm:$0xff]
        %v3615 = vld [vmem:[%s1487 + $0x358] sm:$0xff]
        %v3616 = vld [vmem:[%s1487 + $0x360] sm:$0xff]
        %v3617 = vld [vmem:[%s1487 + $0x368] sm:$0xff]
        %v3618 = vld [vmem:[%s1487 + $0x370] sm:$0xff]
        %v3619 = vld [vmem:[%s1487 + $0x378] sm:$0xff]
        %v3620 = vld [vmem:[%s1487 + $0x380] sm:$0xff]
        %v3621 = vld [vmem:[%s1487 + $0x388] sm:$0xff]
        %v3622 = vld [vmem:[%s1487 + $0x390] sm:$0xff]
        %v3623 = vld [vmem:[%s1487 + $0x398] sm:$0xff]
        %v3624 = vld [vmem:[%s1487 + $0x3a0] sm:$0xff]
        %v3625 = vld [vmem:[%s1487 + $0x3a8] sm:$0xff]
        %v3626 = vld [vmem:[%s1487 + $0x3b0] sm:$0xff]
        %v3627 = vld [vmem:[%s1487 + $0x3b8] sm:$0xff]
        %v3628 = vld [vmem:[%s1487 + $0x3c0] sm:$0xff]
        %v3629 = vld [vmem:[%s1487 + $0x3c8] sm:$0xff]
        %v3630 = vld [vmem:[%s1487 + $0x3d0] sm:$0xff]
        %v3631 = vld [vmem:[%s1487 + $0x3d8] sm:$0xff]
        %v3632 = vld [vmem:[%s1487 + $0x3e0] sm:$0xff]
        %v3633 = vld [vmem:[%s1487 + $0x3e8] sm:$0xff]
        %v3634 = vld [vmem:[%s1487 + $0x3f0] sm:$0xff]
        %v3635 = vld [vmem:[%s1487 + $0x3f8] sm:$0xff]
        %v3636 = vld [vmem:[%s1466] sm:$0xff]
        %v3637 = vld [vmem:[%s1466 + $0x8] sm:$0xff]
        %v3638 = vld [vmem:[%s1466 + $0x10] sm:$0xff]
        %v3639 = vld [vmem:[%s1466 + $0x18] sm:$0xff]
        %v3640 = vld [vmem:[%s1466 + $0x20] sm:$0xff]
        %v3641 = vld [vmem:[%s1466 + $0x28] sm:$0xff]
        %v3642 = vld [vmem:[%s1466 + $0x30] sm:$0xff]
        %v3643 = vld [vmem:[%s1466 + $0x38] sm:$0xff]
        %v3644 = vld [vmem:[%s1466 + $0x40] sm:$0xff]
        %v3645 = vld [vmem:[%s1466 + $0x48] sm:$0xff]
        %v3646 = vld [vmem:[%s1466 + $0x50] sm:$0xff]
        %v3647 = vld [vmem:[%s1466 + $0x58] sm:$0xff]
        %v3648 = vld [vmem:[%s1466 + $0x60] sm:$0xff]
        %v3649 = vld [vmem:[%s1466 + $0x68] sm:$0xff]
        %v3650 = vld [vmem:[%s1466 + $0x70] sm:$0xff]
        %v3651 = vld [vmem:[%s1466 + $0x78] sm:$0xff]
        %v3652 = vld [vmem:[%s1466 + $0x80] sm:$0xff]
        %v3653 = vld [vmem:[%s1466 + $0x88] sm:$0xff]
        %v3654 = vld [vmem:[%s1466 + $0x90] sm:$0xff]
        %v3655 = vld [vmem:[%s1466 + $0x98] sm:$0xff]
        %v3656 = vld [vmem:[%s1466 + $0xa0] sm:$0xff]
        %v3657 = vld [vmem:[%s1466 + $0xa8] sm:$0xff]
        %v3658 = vld [vmem:[%s1466 + $0xb0] sm:$0xff]
        %v3659 = vld [vmem:[%s1466 + $0xb8] sm:$0xff]
        %v3660 = vld [vmem:[%s1466 + $0xc0] sm:$0xff]
        %v3661 = vld [vmem:[%s1466 + $0xc8] sm:$0xff]
        %v3662 = vld [vmem:[%s1466 + $0xd0] sm:$0xff]
        %v3663 = vld [vmem:[%s1466 + $0xd8] sm:$0xff]
        %v3664 = vld [vmem:[%s1466 + $0xe0] sm:$0xff]
        %v3665 = vld [vmem:[%s1466 + $0xe8] sm:$0xff]
        %v3666 = vld [vmem:[%s1466 + $0xf0] sm:$0xff]
        %v3667 = vld [vmem:[%s1466 + $0xf8] sm:$0xff]
        %v3668 = vld [vmem:[%s1466 + $0x100] sm:$0xff]
        %v3669 = vld [vmem:[%s1466 + $0x108] sm:$0xff]
        %v3670 = vld [vmem:[%s1466 + $0x110] sm:$0xff]
        %v3671 = vld [vmem:[%s1466 + $0x118] sm:$0xff]
        %v3672 = vld [vmem:[%s1466 + $0x120] sm:$0xff]
        %v3673 = vld [vmem:[%s1466 + $0x128] sm:$0xff]
        %v3674 = vld [vmem:[%s1466 + $0x130] sm:$0xff]
        %v3675 = vld [vmem:[%s1466 + $0x138] sm:$0xff]
        %v3676 = vld [vmem:[%s1466 + $0x140] sm:$0xff]
        %v3677 = vld [vmem:[%s1466 + $0x148] sm:$0xff]
        %v3678 = vld [vmem:[%s1466 + $0x150] sm:$0xff]
        %v3679 = vld [vmem:[%s1466 + $0x158] sm:$0xff]
        %v3680 = vld [vmem:[%s1466 + $0x160] sm:$0xff]
        %v3681 = vld [vmem:[%s1466 + $0x168] sm:$0xff]
        %v3682 = vld [vmem:[%s1466 + $0x170] sm:$0xff]
        %v3683 = vld [vmem:[%s1466 + $0x178] sm:$0xff]
        %v3684 = vld [vmem:[%s1466 + $0x180] sm:$0xff]
        %v3685 = vld [vmem:[%s1466 + $0x188] sm:$0xff]
        %v3686 = vld [vmem:[%s1466 + $0x190] sm:$0xff]
        %v3687 = vld [vmem:[%s1466 + $0x198] sm:$0xff]
        %v3688 = vld [vmem:[%s1466 + $0x1a0] sm:$0xff]
        %v3689 = vld [vmem:[%s1466 + $0x1a8] sm:$0xff]
        %v3690 = vld [vmem:[%s1466 + $0x1b0] sm:$0xff]
        %v3691 = vld [vmem:[%s1466 + $0x1b8] sm:$0xff]
        %v3692 = vld [vmem:[%s1466 + $0x1c0] sm:$0xff]
        %v3693 = vld [vmem:[%s1466 + $0x1c8] sm:$0xff]
        %v3694 = vld [vmem:[%s1466 + $0x1d0] sm:$0xff]
        %v3695 = vld [vmem:[%s1466 + $0x1d8] sm:$0xff]
        %v3696 = vld [vmem:[%s1466 + $0x1e0] sm:$0xff]
        %v3697 = vld [vmem:[%s1466 + $0x1e8] sm:$0xff]
        %v3698 = vld [vmem:[%s1466 + $0x1f0] sm:$0xff]
        %v3699 = vld [vmem:[%s1466 + $0x1f8] sm:$0xff]
        %v3700 = vld [vmem:[%s1466 + $0x200] sm:$0xff]
        %v3701 = vld [vmem:[%s1466 + $0x208] sm:$0xff]
        %v3702 = vld [vmem:[%s1466 + $0x210] sm:$0xff]
        %v3703 = vld [vmem:[%s1466 + $0x218] sm:$0xff]
        %v3704 = vld [vmem:[%s1466 + $0x220] sm:$0xff]
        %v3705 = vld [vmem:[%s1466 + $0x228] sm:$0xff]
        %v3706 = vld [vmem:[%s1466 + $0x230] sm:$0xff]
        %v3707 = vld [vmem:[%s1466 + $0x238] sm:$0xff]
        %v3708 = vld [vmem:[%s1466 + $0x240] sm:$0xff]
        %v3709 = vld [vmem:[%s1466 + $0x248] sm:$0xff]
        %v3710 = vld [vmem:[%s1466 + $0x250] sm:$0xff]
        %v3711 = vld [vmem:[%s1466 + $0x258] sm:$0xff]
        %v3712 = vld [vmem:[%s1466 + $0x260] sm:$0xff]
        %v3713 = vld [vmem:[%s1466 + $0x268] sm:$0xff]
        %v3714 = vld [vmem:[%s1466 + $0x270] sm:$0xff]
        %v3715 = vld [vmem:[%s1466 + $0x278] sm:$0xff]
        %v3716 = vld [vmem:[%s1466 + $0x280] sm:$0xff]
        %v3717 = vld [vmem:[%s1466 + $0x288] sm:$0xff]
        %v3718 = vld [vmem:[%s1466 + $0x290] sm:$0xff]
        %v3719 = vld [vmem:[%s1466 + $0x298] sm:$0xff]
        %v3720 = vld [vmem:[%s1466 + $0x2a0] sm:$0xff]
        %v3721 = vld [vmem:[%s1466 + $0x2a8] sm:$0xff]
        %v3722 = vld [vmem:[%s1466 + $0x2b0] sm:$0xff]
        %v3723 = vld [vmem:[%s1466 + $0x2b8] sm:$0xff]
        %v3724 = vld [vmem:[%s1466 + $0x2c0] sm:$0xff]
        %v3725 = vld [vmem:[%s1466 + $0x2c8] sm:$0xff]
        %v3726 = vld [vmem:[%s1466 + $0x2d0] sm:$0xff]
        %v3727 = vld [vmem:[%s1466 + $0x2d8] sm:$0xff]
        %v3728 = vld [vmem:[%s1466 + $0x2e0] sm:$0xff]
        %v3729 = vld [vmem:[%s1466 + $0x2e8] sm:$0xff]
        %v3730 = vld [vmem:[%s1466 + $0x2f0] sm:$0xff]
        %v3731 = vld [vmem:[%s1466 + $0x2f8] sm:$0xff]
        %v3732 = vld [vmem:[%s1466 + $0x300] sm:$0xff]
        %v3733 = vld [vmem:[%s1466 + $0x308] sm:$0xff]
        %v3734 = vld [vmem:[%s1466 + $0x310] sm:$0xff]
        %v3735 = vld [vmem:[%s1466 + $0x318] sm:$0xff]
        %v3736 = vld [vmem:[%s1466 + $0x320] sm:$0xff]
        %v3737 = vld [vmem:[%s1466 + $0x328] sm:$0xff]
        %v3738 = vld [vmem:[%s1466 + $0x330] sm:$0xff]
        %v3739 = vld [vmem:[%s1466 + $0x338] sm:$0xff]
        %v3740 = vld [vmem:[%s1466 + $0x340] sm:$0xff]
        %v3741 = vld [vmem:[%s1466 + $0x348] sm:$0xff]
        %v3742 = vld [vmem:[%s1466 + $0x350] sm:$0xff]
        %v3743 = vld [vmem:[%s1466 + $0x358] sm:$0xff]
        %v3744 = vld [vmem:[%s1466 + $0x360] sm:$0xff]
        %v3745 = vld [vmem:[%s1466 + $0x368] sm:$0xff]
        %v3746 = vld [vmem:[%s1466 + $0x370] sm:$0xff]
        %v3747 = vld [vmem:[%s1466 + $0x378] sm:$0xff]
        %v3748 = vld [vmem:[%s1466 + $0x380] sm:$0xff]
        %v3749 = vld [vmem:[%s1466 + $0x388] sm:$0xff]
        %v3750 = vld [vmem:[%s1466 + $0x390] sm:$0xff]
        %v3751 = vld [vmem:[%s1466 + $0x398] sm:$0xff]
        %v3752 = vld [vmem:[%s1466 + $0x3a0] sm:$0xff]
        %v3753 = vld [vmem:[%s1466 + $0x3a8] sm:$0xff]
        %v3754 = vld [vmem:[%s1466 + $0x3b0] sm:$0xff]
        %v3755 = vld [vmem:[%s1466 + $0x3b8] sm:$0xff]
        %v3756 = vld [vmem:[%s1466 + $0x3c0] sm:$0xff]
        %v3757 = vld [vmem:[%s1466 + $0x3c8] sm:$0xff]
        %v3758 = vld [vmem:[%s1466 + $0x3d0] sm:$0xff]
        %v3759 = vld [vmem:[%s1466 + $0x3d8] sm:$0xff]
        %v3760 = vld [vmem:[%s1466 + $0x3e0] sm:$0xff]
        %v3761 = vld [vmem:[%s1466 + $0x3e8] sm:$0xff]
        %v3762 = vld [vmem:[%s1466 + $0x3f0] sm:$0xff]
        %v3763 = vld [vmem:[%s1466 + $0x3f8] sm:$0xff]
        %v3764 = vld [vmem:[%s1480] sm:$0xff]
        %v3765 = vld [vmem:[%s1480 + $0x8] sm:$0xff]
        %v3766 = vld [vmem:[%s1480 + $0x10] sm:$0xff]
        %v3767 = vld [vmem:[%s1480 + $0x18] sm:$0xff]
        %v3768 = vld [vmem:[%s1480 + $0x20] sm:$0xff]
        %v3769 = vld [vmem:[%s1480 + $0x28] sm:$0xff]
        %v3770 = vld [vmem:[%s1480 + $0x30] sm:$0xff]
        %v3771 = vld [vmem:[%s1480 + $0x38] sm:$0xff]
        %v3772 = vld [vmem:[%s1480 + $0x40] sm:$0xff]
        %v3773 = vld [vmem:[%s1480 + $0x48] sm:$0xff]
        %v3774 = vld [vmem:[%s1480 + $0x50] sm:$0xff]
        %v3775 = vld [vmem:[%s1480 + $0x58] sm:$0xff]
        %v3776 = vld [vmem:[%s1480 + $0x60] sm:$0xff]
        %v3777 = vld [vmem:[%s1480 + $0x68] sm:$0xff]
        %v3778 = vld [vmem:[%s1480 + $0x70] sm:$0xff]
        %v3779 = vld [vmem:[%s1480 + $0x78] sm:$0xff]
        %v3780 = vld [vmem:[%s1480 + $0x80] sm:$0xff]
        %v3781 = vld [vmem:[%s1480 + $0x88] sm:$0xff]
        %v3782 = vld [vmem:[%s1480 + $0x90] sm:$0xff]
        %v3783 = vld [vmem:[%s1480 + $0x98] sm:$0xff]
        %v3784 = vld [vmem:[%s1480 + $0xa0] sm:$0xff]
        %v3785 = vld [vmem:[%s1480 + $0xa8] sm:$0xff]
        %v3786 = vld [vmem:[%s1480 + $0xb0] sm:$0xff]
        %v3787 = vld [vmem:[%s1480 + $0xb8] sm:$0xff]
        %v3788 = vld [vmem:[%s1480 + $0xc0] sm:$0xff]
        %v3789 = vld [vmem:[%s1480 + $0xc8] sm:$0xff]
        %v3790 = vld [vmem:[%s1480 + $0xd0] sm:$0xff]
        %v3791 = vld [vmem:[%s1480 + $0xd8] sm:$0xff]
        %v3792 = vld [vmem:[%s1480 + $0xe0] sm:$0xff]
        %v3793 = vld [vmem:[%s1480 + $0xe8] sm:$0xff]
        %v3794 = vld [vmem:[%s1480 + $0xf0] sm:$0xff]
        %v3795 = vld [vmem:[%s1480 + $0xf8] sm:$0xff]
        %v3796 = vld [vmem:[%s1480 + $0x100] sm:$0xff]
        %v3797 = vld [vmem:[%s1480 + $0x108] sm:$0xff]
        %v3798 = vld [vmem:[%s1480 + $0x110] sm:$0xff]
        %v3799 = vld [vmem:[%s1480 + $0x118] sm:$0xff]
        %v3800 = vld [vmem:[%s1480 + $0x120] sm:$0xff]
        %v3801 = vld [vmem:[%s1480 + $0x128] sm:$0xff]
        %v3802 = vld [vmem:[%s1480 + $0x130] sm:$0xff]
        %v3803 = vld [vmem:[%s1480 + $0x138] sm:$0xff]
        %v3804 = vld [vmem:[%s1480 + $0x140] sm:$0xff]
        %v3805 = vld [vmem:[%s1480 + $0x148] sm:$0xff]
        %v3806 = vld [vmem:[%s1480 + $0x150] sm:$0xff]
        %v3807 = vld [vmem:[%s1480 + $0x158] sm:$0xff]
        %v3808 = vld [vmem:[%s1480 + $0x160] sm:$0xff]
        %v3809 = vld [vmem:[%s1480 + $0x168] sm:$0xff]
        %v3810 = vld [vmem:[%s1480 + $0x170] sm:$0xff]
        %v3811 = vld [vmem:[%s1480 + $0x178] sm:$0xff]
        %v3812 = vld [vmem:[%s1480 + $0x180] sm:$0xff]
        %v3813 = vld [vmem:[%s1480 + $0x188] sm:$0xff]
        %v3814 = vld [vmem:[%s1480 + $0x190] sm:$0xff]
        %v3815 = vld [vmem:[%s1480 + $0x198] sm:$0xff]
        %v3816 = vld [vmem:[%s1480 + $0x1a0] sm:$0xff]
        %v3817 = vld [vmem:[%s1480 + $0x1a8] sm:$0xff]
        %v3818 = vld [vmem:[%s1480 + $0x1b0] sm:$0xff]
        %v3819 = vld [vmem:[%s1480 + $0x1b8] sm:$0xff]
        %v3820 = vld [vmem:[%s1480 + $0x1c0] sm:$0xff]
        %v3821 = vld [vmem:[%s1480 + $0x1c8] sm:$0xff]
        %v3822 = vld [vmem:[%s1480 + $0x1d0] sm:$0xff]
        %v3823 = vld [vmem:[%s1480 + $0x1d8] sm:$0xff]
        %v3824 = vld [vmem:[%s1480 + $0x1e0] sm:$0xff]
        %v3825 = vld [vmem:[%s1480 + $0x1e8] sm:$0xff]
        %v3826 = vld [vmem:[%s1480 + $0x1f0] sm:$0xff]
        %v3827 = vld [vmem:[%s1480 + $0x1f8] sm:$0xff]
        %v3828 = vld [vmem:[%s1480 + $0x200] sm:$0xff]
        %v3829 = vld [vmem:[%s1480 + $0x208] sm:$0xff]
        %v3830 = vld [vmem:[%s1480 + $0x210] sm:$0xff]
        %v3831 = vld [vmem:[%s1480 + $0x218] sm:$0xff]
        %v3832 = vld [vmem:[%s1480 + $0x220] sm:$0xff]
        %v3833 = vld [vmem:[%s1480 + $0x228] sm:$0xff]
        %v3834 = vld [vmem:[%s1480 + $0x230] sm:$0xff]
        %v3835 = vld [vmem:[%s1480 + $0x238] sm:$0xff]
        %v3836 = vld [vmem:[%s1480 + $0x240] sm:$0xff]
        %v3837 = vld [vmem:[%s1480 + $0x248] sm:$0xff]
        %v3838 = vld [vmem:[%s1480 + $0x250] sm:$0xff]
        %v3839 = vld [vmem:[%s1480 + $0x258] sm:$0xff]
        %v3840 = vld [vmem:[%s1480 + $0x260] sm:$0xff]
        %v3841 = vld [vmem:[%s1480 + $0x268] sm:$0xff]
        %v3842 = vld [vmem:[%s1480 + $0x270] sm:$0xff]
        %v3843 = vld [vmem:[%s1480 + $0x278] sm:$0xff]
        %v3844 = vld [vmem:[%s1480 + $0x280] sm:$0xff]
        %v3845 = vld [vmem:[%s1480 + $0x288] sm:$0xff]
        %v3846 = vld [vmem:[%s1480 + $0x290] sm:$0xff]
        %v3847 = vld [vmem:[%s1480 + $0x298] sm:$0xff]
        %v3848 = vld [vmem:[%s1480 + $0x2a0] sm:$0xff]
        %v3849 = vld [vmem:[%s1480 + $0x2a8] sm:$0xff]
        %v3850 = vld [vmem:[%s1480 + $0x2b0] sm:$0xff]
        %v3851 = vld [vmem:[%s1480 + $0x2b8] sm:$0xff]
        %v3852 = vld [vmem:[%s1480 + $0x2c0] sm:$0xff]
        %v3853 = vld [vmem:[%s1480 + $0x2c8] sm:$0xff]
        %v3854 = vld [vmem:[%s1480 + $0x2d0] sm:$0xff]
        %v3855 = vld [vmem:[%s1480 + $0x2d8] sm:$0xff]
        %v3856 = vld [vmem:[%s1480 + $0x2e0] sm:$0xff]
        %v3857 = vld [vmem:[%s1480 + $0x2e8] sm:$0xff]
        %v3858 = vld [vmem:[%s1480 + $0x2f0] sm:$0xff]
        %v3859 = vld [vmem:[%s1480 + $0x2f8] sm:$0xff]
        %v3860 = vld [vmem:[%s1480 + $0x300] sm:$0xff]
        %v3861 = vld [vmem:[%s1480 + $0x308] sm:$0xff]
        %v3862 = vld [vmem:[%s1480 + $0x310] sm:$0xff]
        %v3863 = vld [vmem:[%s1480 + $0x318] sm:$0xff]
        %v3864 = vld [vmem:[%s1480 + $0x320] sm:$0xff]
        %v3865 = vld [vmem:[%s1480 + $0x328] sm:$0xff]
        %v3866 = vld [vmem:[%s1480 + $0x330] sm:$0xff]
        %v3867 = vld [vmem:[%s1480 + $0x338] sm:$0xff]
        %v3868 = vld [vmem:[%s1480 + $0x340] sm:$0xff]
        %v3869 = vld [vmem:[%s1480 + $0x348] sm:$0xff]
        %v3870 = vld [vmem:[%s1480 + $0x350] sm:$0xff]
        %v3871 = vld [vmem:[%s1480 + $0x358] sm:$0xff]
        %v3872 = vld [vmem:[%s1480 + $0x360] sm:$0xff]
        %v3873 = vld [vmem:[%s1480 + $0x368] sm:$0xff]
        %v3874 = vld [vmem:[%s1480 + $0x370] sm:$0xff]
        %v3875 = vld [vmem:[%s1480 + $0x378] sm:$0xff]
        %v3876 = vld [vmem:[%s1480 + $0x380] sm:$0xff]
        %v3877 = vld [vmem:[%s1480 + $0x388] sm:$0xff]
        %v3878 = vld [vmem:[%s1480 + $0x390] sm:$0xff]
        %v3879 = vld [vmem:[%s1480 + $0x398] sm:$0xff]
        %v3880 = vld [vmem:[%s1480 + $0x3a0] sm:$0xff]
        %v3881 = vld [vmem:[%s1480 + $0x3a8] sm:$0xff]
        %v3882 = vld [vmem:[%s1480 + $0x3b0] sm:$0xff]
        %v3883 = vld [vmem:[%s1480 + $0x3b8] sm:$0xff]
        %v3884 = vld [vmem:[%s1480 + $0x3c0] sm:$0xff]
        %v3885 = vld [vmem:[%s1480 + $0x3c8] sm:$0xff]
        %v3886 = vld [vmem:[%s1480 + $0x3d0] sm:$0xff]
        %v3887 = vld [vmem:[%s1480 + $0x3d8] sm:$0xff]
        %v3888 = vld [vmem:[%s1480 + $0x3e0] sm:$0xff]
        %v3889 = vld [vmem:[%s1480 + $0x3e8] sm:$0xff]
        %v3890 = vld [vmem:[%s1480 + $0x3f0] sm:$0xff]
        %v3891 = vld [vmem:[%s1480 + $0x3f8] sm:$0xff]
        %v3892 = vmul.f32 %v3380, %v3764
        %v3893 = vmul.f32 %v3381, %v3765
        %v3894 = vmul.f32 %v3382, %v3766
        %v3895 = vmul.f32 %v3383, %v3767
        %v3896 = vmul.f32 %v3384, %v3768
        %v3897 = vmul.f32 %v3385, %v3769
        %v3898 = vmul.f32 %v3386, %v3770
        %v3899 = vmul.f32 %v3387, %v3771
        %v3900 = vmul.f32 %v3388, %v3772
        %v3901 = vmul.f32 %v3389, %v3773
        %v3902 = vmul.f32 %v3390, %v3774
        %v3903 = vmul.f32 %v3391, %v3775
        %v3904 = vmul.f32 %v3392, %v3776
        %v3905 = vmul.f32 %v3393, %v3777
        %v3906 = vmul.f32 %v3394, %v3778
        %v3907 = vmul.f32 %v3395, %v3779
        %v3908 = vmul.f32 %v3396, %v3780
        %v3909 = vmul.f32 %v3397, %v3781
        %v3910 = vmul.f32 %v3398, %v3782
        %v3911 = vmul.f32 %v3399, %v3783
        %v3912 = vmul.f32 %v3400, %v3784
        %v3913 = vmul.f32 %v3401, %v3785
        %v3914 = vmul.f32 %v3402, %v3786
        %v3915 = vmul.f32 %v3403, %v3787
        %v3916 = vmul.f32 %v3404, %v3788
        %v3917 = vmul.f32 %v3405, %v3789
        %v3918 = vmul.f32 %v3406, %v3790
        %v3919 = vmul.f32 %v3407, %v3791
        %v3920 = vmul.f32 %v3408, %v3792
        %v3921 = vmul.f32 %v3409, %v3793
        %v3922 = vmul.f32 %v3410, %v3794
        %v3923 = vmul.f32 %v3411, %v3795
        %v3924 = vmul.f32 %v3412, %v3796
        %v3925 = vmul.f32 %v3413, %v3797
        %v3926 = vmul.f32 %v3414, %v3798
        %v3927 = vmul.f32 %v3415, %v3799
        %v3928 = vmul.f32 %v3416, %v3800
        %v3929 = vmul.f32 %v3417, %v3801
        %v3930 = vmul.f32 %v3418, %v3802
        %v3931 = vmul.f32 %v3419, %v3803
        %v3932 = vmul.f32 %v3420, %v3804
        %v3933 = vmul.f32 %v3421, %v3805
        %v3934 = vmul.f32 %v3422, %v3806
        %v3935 = vmul.f32 %v3423, %v3807
        %v3936 = vmul.f32 %v3424, %v3808
        %v3937 = vmul.f32 %v3425, %v3809
        %v3938 = vmul.f32 %v3426, %v3810
        %v3939 = vmul.f32 %v3427, %v3811
        %v3940 = vmul.f32 %v3428, %v3812
        %v3941 = vmul.f32 %v3429, %v3813
        %v3942 = vmul.f32 %v3430, %v3814
        %v3943 = vmul.f32 %v3431, %v3815
        %v3944 = vmul.f32 %v3432, %v3816
        %v3945 = vmul.f32 %v3433, %v3817
        %v3946 = vmul.f32 %v3434, %v3818
        %v3947 = vmul.f32 %v3435, %v3819
        %v3948 = vmul.f32 %v3436, %v3820
        %v3949 = vmul.f32 %v3437, %v3821
        %v3950 = vmul.f32 %v3438, %v3822
        %v3951 = vmul.f32 %v3439, %v3823
        %v3952 = vmul.f32 %v3440, %v3824
        %v3953 = vmul.f32 %v3441, %v3825
        %v3954 = vmul.f32 %v3442, %v3826
        %v3955 = vmul.f32 %v3443, %v3827
        %v3956 = vmul.f32 %v3444, %v3828
        %v3957 = vmul.f32 %v3445, %v3829
        %v3958 = vmul.f32 %v3446, %v3830
        %v3959 = vmul.f32 %v3447, %v3831
        %v3960 = vmul.f32 %v3448, %v3832
        %v3961 = vmul.f32 %v3449, %v3833
        %v3962 = vmul.f32 %v3450, %v3834
        %v3963 = vmul.f32 %v3451, %v3835
        %v3964 = vmul.f32 %v3452, %v3836
        %v3965 = vmul.f32 %v3453, %v3837
        %v3966 = vmul.f32 %v3454, %v3838
        %v3967 = vmul.f32 %v3455, %v3839
        %v3968 = vmul.f32 %v3456, %v3840
        %v3969 = vmul.f32 %v3457, %v3841
        %v3970 = vmul.f32 %v3458, %v3842
        %v3971 = vmul.f32 %v3459, %v3843
        %v3972 = vmul.f32 %v3460, %v3844
        %v3973 = vmul.f32 %v3461, %v3845
        %v3974 = vmul.f32 %v3462, %v3846
        %v3975 = vmul.f32 %v3463, %v3847
        %v3976 = vmul.f32 %v3464, %v3848
        %v3977 = vmul.f32 %v3465, %v3849
        %v3978 = vmul.f32 %v3466, %v3850
        %v3979 = vmul.f32 %v3467, %v3851
        %v3980 = vmul.f32 %v3468, %v3852
        %v3981 = vmul.f32 %v3469, %v3853
        %v3982 = vmul.f32 %v3470, %v3854
        %v3983 = vmul.f32 %v3471, %v3855
        %v3984 = vmul.f32 %v3472, %v3856
        %v3985 = vmul.f32 %v3473, %v3857
        %v3986 = vmul.f32 %v3474, %v3858
        %v3987 = vmul.f32 %v3475, %v3859
        %v3988 = vmul.f32 %v3476, %v3860
        %v3989 = vmul.f32 %v3477, %v3861
        %v3990 = vmul.f32 %v3478, %v3862
        %v3991 = vmul.f32 %v3479, %v3863
        %v3992 = vmul.f32 %v3480, %v3864
        %v3993 = vmul.f32 %v3481, %v3865
        %v3994 = vmul.f32 %v3482, %v3866
        %v3995 = vmul.f32 %v3483, %v3867
        %v3996 = vmul.f32 %v3484, %v3868
        %v3997 = vmul.f32 %v3485, %v3869
        %v3998 = vmul.f32 %v3486, %v3870
        %v3999 = vmul.f32 %v3487, %v3871
        %v4000 = vmul.f32 %v3488, %v3872
        %v4001 = vmul.f32 %v3489, %v3873
        %v4002 = vmul.f32 %v3490, %v3874
        %v4003 = vmul.f32 %v3491, %v3875
        %v4004 = vmul.f32 %v3492, %v3876
        %v4005 = vmul.f32 %v3493, %v3877
        %v4006 = vmul.f32 %v3494, %v3878
        %v4007 = vmul.f32 %v3495, %v3879
        %v4008 = vmul.f32 %v3496, %v3880
        %v4009 = vmul.f32 %v3497, %v3881
        %v4010 = vmul.f32 %v3498, %v3882
        %v4011 = vmul.f32 %v3499, %v3883
        %v4012 = vmul.f32 %v3500, %v3884
        %v4013 = vmul.f32 %v3501, %v3885
        %v4014 = vmul.f32 %v3502, %v3886
        %v4015 = vmul.f32 %v3503, %v3887
        %v4016 = vmul.f32 %v3504, %v3888
        %v4017 = vmul.f32 %v3505, %v3889
        %v4018 = vmul.f32 %v3506, %v3890
        %v4019 = vmul.f32 %v3507, %v3891
        %v4020 = vadd.f32 %v3636, %v3892
        %v4021 = vadd.f32 %v3637, %v3893
        %v4022 = vadd.f32 %v3638, %v3894
        %v4023 = vadd.f32 %v3639, %v3895
        %v4024 = vadd.f32 %v3640, %v3896
        %v4025 = vadd.f32 %v3641, %v3897
        %v4026 = vadd.f32 %v3642, %v3898
        %v4027 = vadd.f32 %v3643, %v3899
        %v4028 = vadd.f32 %v3644, %v3900
        %v4029 = vadd.f32 %v3645, %v3901
        %v4030 = vadd.f32 %v3646, %v3902
        %v4031 = vadd.f32 %v3647, %v3903
        %v4032 = vadd.f32 %v3648, %v3904
        %v4033 = vadd.f32 %v3649, %v3905
        %v4034 = vadd.f32 %v3650, %v3906
        %v4035 = vadd.f32 %v3651, %v3907
        %v4036 = vadd.f32 %v3652, %v3908
        %v4037 = vadd.f32 %v3653, %v3909
        %v4038 = vadd.f32 %v3654, %v3910
        %v4039 = vadd.f32 %v3655, %v3911
        %v4040 = vadd.f32 %v3656, %v3912
        %v4041 = vadd.f32 %v3657, %v3913
        %v4042 = vadd.f32 %v3658, %v3914
        %v4043 = vadd.f32 %v3659, %v3915
        %v4044 = vadd.f32 %v3660, %v3916
        %v4045 = vadd.f32 %v3661, %v3917
        %v4046 = vadd.f32 %v3662, %v3918
        %v4047 = vadd.f32 %v3663, %v3919
        %v4048 = vadd.f32 %v3664, %v3920
        %v4049 = vadd.f32 %v3665, %v3921
        %v4050 = vadd.f32 %v3666, %v3922
        %v4051 = vadd.f32 %v3667, %v3923
        %v4052 = vadd.f32 %v3668, %v3924
        %v4053 = vadd.f32 %v3669, %v3925
        %v4054 = vadd.f32 %v3670, %v3926
        %v4055 = vadd.f32 %v3671, %v3927
        %v4056 = vadd.f32 %v3672, %v3928
        %v4057 = vadd.f32 %v3673, %v3929
        %v4058 = vadd.f32 %v3674, %v3930
        %v4059 = vadd.f32 %v3675, %v3931
        %v4060 = vadd.f32 %v3676, %v3932
        %v4061 = vadd.f32 %v3677, %v3933
        %v4062 = vadd.f32 %v3678, %v3934
        %v4063 = vadd.f32 %v3679, %v3935
        %v4064 = vadd.f32 %v3680, %v3936
        %v4065 = vadd.f32 %v3681, %v3937
        %v4066 = vadd.f32 %v3682, %v3938
        %v4067 = vadd.f32 %v3683, %v3939
        %v4068 = vadd.f32 %v3684, %v3940
        %v4069 = vadd.f32 %v3685, %v3941
        %v4070 = vadd.f32 %v3686, %v3942
        %v4071 = vadd.f32 %v3687, %v3943
        %v4072 = vadd.f32 %v3688, %v3944
        %v4073 = vadd.f32 %v3689, %v3945
        %v4074 = vadd.f32 %v3690, %v3946
        %v4075 = vadd.f32 %v3691, %v3947
        %v4076 = vadd.f32 %v3692, %v3948
        %v4077 = vadd.f32 %v3693, %v3949
        %v4078 = vadd.f32 %v3694, %v3950
        %v4079 = vadd.f32 %v3695, %v3951
        %v4080 = vadd.f32 %v3696, %v3952
        %v4081 = vadd.f32 %v3697, %v3953
        %v4082 = vadd.f32 %v3698, %v3954
        %v4083 = vadd.f32 %v3699, %v3955
        %v4084 = vadd.f32 %v3700, %v3956
        %v4085 = vadd.f32 %v3701, %v3957
        %v4086 = vadd.f32 %v3702, %v3958
        %v4087 = vadd.f32 %v3703, %v3959
        %v4088 = vadd.f32 %v3704, %v3960
        %v4089 = vadd.f32 %v3705, %v3961
        %v4090 = vadd.f32 %v3706, %v3962
        %v4091 = vadd.f32 %v3707, %v3963
        %v4092 = vadd.f32 %v3708, %v3964
        %v4093 = vadd.f32 %v3709, %v3965
        %v4094 = vadd.f32 %v3710, %v3966
        %v4095 = vadd.f32 %v3711, %v3967
        %v4096 = vadd.f32 %v3712, %v3968
        %v4097 = vadd.f32 %v3713, %v3969
        %v4098 = vadd.f32 %v3714, %v3970
        %v4099 = vadd.f32 %v3715, %v3971
        %v4100 = vadd.f32 %v3716, %v3972
        %v4101 = vadd.f32 %v3717, %v3973
        %v4102 = vadd.f32 %v3718, %v3974
        %v4103 = vadd.f32 %v3719, %v3975
        %v4104 = vadd.f32 %v3720, %v3976
        %v4105 = vadd.f32 %v3721, %v3977
        %v4106 = vadd.f32 %v3722, %v3978
        %v4107 = vadd.f32 %v3723, %v3979
        %v4108 = vadd.f32 %v3724, %v3980
        %v4109 = vadd.f32 %v3725, %v3981
        %v4110 = vadd.f32 %v3726, %v3982
        %v4111 = vadd.f32 %v3727, %v3983
        %v4112 = vadd.f32 %v3728, %v3984
        %v4113 = vadd.f32 %v3729, %v3985
        %v4114 = vadd.f32 %v3730, %v3986
        %v4115 = vadd.f32 %v3731, %v3987
        %v4116 = vadd.f32 %v3732, %v3988
        %v4117 = vadd.f32 %v3733, %v3989
        %v4118 = vadd.f32 %v3734, %v3990
        %v4119 = vadd.f32 %v3735, %v3991
        %v4120 = vadd.f32 %v3736, %v3992
        %v4121 = vadd.f32 %v3737, %v3993
        %v4122 = vadd.f32 %v3738, %v3994
        %v4123 = vadd.f32 %v3739, %v3995
        %v4124 = vadd.f32 %v3740, %v3996
        %v4125 = vadd.f32 %v3741, %v3997
        %v4126 = vadd.f32 %v3742, %v3998
        %v4127 = vadd.f32 %v3743, %v3999
        %v4128 = vadd.f32 %v3744, %v4000
        %v4129 = vadd.f32 %v3745, %v4001
        %v4130 = vadd.f32 %v3746, %v4002
        %v4131 = vadd.f32 %v3747, %v4003
        %v4132 = vadd.f32 %v3748, %v4004
        %v4133 = vadd.f32 %v3749, %v4005
        %v4134 = vadd.f32 %v3750, %v4006
        %v4135 = vadd.f32 %v3751, %v4007
        %v4136 = vadd.f32 %v3752, %v4008
        %v4137 = vadd.f32 %v3753, %v4009
        %v4138 = vadd.f32 %v3754, %v4010
        %v4139 = vadd.f32 %v3755, %v4011
        %v4140 = vadd.f32 %v3756, %v4012
        %v4141 = vadd.f32 %v3757, %v4013
        %v4142 = vadd.f32 %v3758, %v4014
        %v4143 = vadd.f32 %v3759, %v4015
        %v4144 = vadd.f32 %v3760, %v4016
        %v4145 = vadd.f32 %v3761, %v4017
        %v4146 = vadd.f32 %v3762, %v4018
        %v4147 = vadd.f32 %v3763, %v4019
        %v4148 = vmul.f32 %v3508, %v4020
        %v4149 = vmul.f32 %v3509, %v4021
        %v4150 = vmul.f32 %v3510, %v4022
        %v4151 = vmul.f32 %v3511, %v4023
        %v4152 = vmul.f32 %v3512, %v4024
        %v4153 = vmul.f32 %v3513, %v4025
        %v4154 = vmul.f32 %v3514, %v4026
        %v4155 = vmul.f32 %v3515, %v4027
        %v4156 = vmul.f32 %v3516, %v4028
        %v4157 = vmul.f32 %v3517, %v4029
        %v4158 = vmul.f32 %v3518, %v4030
        %v4159 = vmul.f32 %v3519, %v4031
        %v4160 = vmul.f32 %v3520, %v4032
        %v4161 = vmul.f32 %v3521, %v4033
        %v4162 = vmul.f32 %v3522, %v4034
        %v4163 = vmul.f32 %v3523, %v4035
        %v4164 = vmul.f32 %v3524, %v4036
        %v4165 = vmul.f32 %v3525, %v4037
        %v4166 = vmul.f32 %v3526, %v4038
        %v4167 = vmul.f32 %v3527, %v4039
        %v4168 = vmul.f32 %v3528, %v4040
        %v4169 = vmul.f32 %v3529, %v4041
        %v4170 = vmul.f32 %v3530, %v4042
        %v4171 = vmul.f32 %v3531, %v4043
        %v4172 = vmul.f32 %v3532, %v4044
        %v4173 = vmul.f32 %v3533, %v4045
        %v4174 = vmul.f32 %v3534, %v4046
        %v4175 = vmul.f32 %v3535, %v4047
        %v4176 = vmul.f32 %v3536, %v4048
        %v4177 = vmul.f32 %v3537, %v4049
        %v4178 = vmul.f32 %v3538, %v4050
        %v4179 = vmul.f32 %v3539, %v4051
        %v4180 = vmul.f32 %v3540, %v4052
        %v4181 = vmul.f32 %v3541, %v4053
        %v4182 = vmul.f32 %v3542, %v4054
        %v4183 = vmul.f32 %v3543, %v4055
        %v4184 = vmul.f32 %v3544, %v4056
        %v4185 = vmul.f32 %v3545, %v4057
        %v4186 = vmul.f32 %v3546, %v4058
        %v4187 = vmul.f32 %v3547, %v4059
        %v4188 = vmul.f32 %v3548, %v4060
        %v4189 = vmul.f32 %v3549, %v4061
        %v4190 = vmul.f32 %v3550, %v4062
        %v4191 = vmul.f32 %v3551, %v4063
        %v4192 = vmul.f32 %v3552, %v4064
        %v4193 = vmul.f32 %v3553, %v4065
        %v4194 = vmul.f32 %v3554, %v4066
        %v4195 = vmul.f32 %v3555, %v4067
        %v4196 = vmul.f32 %v3556, %v4068
        %v4197 = vmul.f32 %v3557, %v4069
        %v4198 = vmul.f32 %v3558, %v4070
        %v4199 = vmul.f32 %v3559, %v4071
        %v4200 = vmul.f32 %v3560, %v4072
        %v4201 = vmul.f32 %v3561, %v4073
        %v4202 = vmul.f32 %v3562, %v4074
        %v4203 = vmul.f32 %v3563, %v4075
        %v4204 = vmul.f32 %v3564, %v4076
        %v4205 = vmul.f32 %v3565, %v4077
        %v4206 = vmul.f32 %v3566, %v4078
        %v4207 = vmul.f32 %v3567, %v4079
        %v4208 = vmul.f32 %v3568, %v4080
        %v4209 = vmul.f32 %v3569, %v4081
        %v4210 = vmul.f32 %v3570, %v4082
        %v4211 = vmul.f32 %v3571, %v4083
        %v4212 = vmul.f32 %v3572, %v4084
        %v4213 = vmul.f32 %v3573, %v4085
        %v4214 = vmul.f32 %v3574, %v4086
        %v4215 = vmul.f32 %v3575, %v4087
        %v4216 = vmul.f32 %v3576, %v4088
        %v4217 = vmul.f32 %v3577, %v4089
        %v4218 = vmul.f32 %v3578, %v4090
        %v4219 = vmul.f32 %v3579, %v4091
        %v4220 = vmul.f32 %v3580, %v4092
        %v4221 = vmul.f32 %v3581, %v4093
        %v4222 = vmul.f32 %v3582, %v4094
        %v4223 = vmul.f32 %v3583, %v4095
        %v4224 = vmul.f32 %v3584, %v4096
        %v4225 = vmul.f32 %v3585, %v4097
        %v4226 = vmul.f32 %v3586, %v4098
        %v4227 = vmul.f32 %v3587, %v4099
        %v4228 = vmul.f32 %v3588, %v4100
        %v4229 = vmul.f32 %v3589, %v4101
        %v4230 = vmul.f32 %v3590, %v4102
        %v4231 = vmul.f32 %v3591, %v4103
        %v4232 = vmul.f32 %v3592, %v4104
        %v4233 = vmul.f32 %v3593, %v4105
        %v4234 = vmul.f32 %v3594, %v4106
        %v4235 = vmul.f32 %v3595, %v4107
        %v4236 = vmul.f32 %v3596, %v4108
        %v4237 = vmul.f32 %v3597, %v4109
        %v4238 = vmul.f32 %v3598, %v4110
        %v4239 = vmul.f32 %v3599, %v4111
        %v4240 = vmul.f32 %v3600, %v4112
        %v4241 = vmul.f32 %v3601, %v4113
        %v4242 = vmul.f32 %v3602, %v4114
        %v4243 = vmul.f32 %v3603, %v4115
        %v4244 = vmul.f32 %v3604, %v4116
        %v4245 = vmul.f32 %v3605, %v4117
        %v4246 = vmul.f32 %v3606, %v4118
        %v4247 = vmul.f32 %v3607, %v4119
        %v4248 = vmul.f32 %v3608, %v4120
        %v4249 = vmul.f32 %v3609, %v4121
        %v4250 = vmul.f32 %v3610, %v4122
        %v4251 = vmul.f32 %v3611, %v4123
        %v4252 = vmul.f32 %v3612, %v4124
        %v4253 = vmul.f32 %v3613, %v4125
        %v4254 = vmul.f32 %v3614, %v4126
        %v4255 = vmul.f32 %v3615, %v4127
        %v4256 = vmul.f32 %v3616, %v4128
        %v4257 = vmul.f32 %v3617, %v4129
        %v4258 = vmul.f32 %v3618, %v4130
        %v4259 = vmul.f32 %v3619, %v4131
        %v4260 = vmul.f32 %v3620, %v4132
        %v4261 = vmul.f32 %v3621, %v4133
        %v4262 = vmul.f32 %v3622, %v4134
        %v4263 = vmul.f32 %v3623, %v4135
        %v4264 = vmul.f32 %v3624, %v4136
        %v4265 = vmul.f32 %v3625, %v4137
        %v4266 = vmul.f32 %v3626, %v4138
        %v4267 = vmul.f32 %v3627, %v4139
        %v4268 = vmul.f32 %v3628, %v4140
        %v4269 = vmul.f32 %v3629, %v4141
        %v4270 = vmul.f32 %v3630, %v4142
        %v4271 = vmul.f32 %v3631, %v4143
        %v4272 = vmul.f32 %v3632, %v4144
        %v4273 = vmul.f32 %v3633, %v4145
        %v4274 = vmul.f32 %v3634, %v4146
        %v4275 = vmul.f32 %v3635, %v4147
        %v4276 = vld [vmem:[#allocation2] sm:$0xff]
        %v4277 = vld [vmem:[#allocation2 + $0x8] sm:$0xff]
        %v4278 = vld [vmem:[%s1551] sm:$0xff]
        %v4279 = vld [vmem:[%s1551 + $0x8] sm:$0xff]
        %v4280 = vld [vmem:[%s1551 + $0x10] sm:$0xff]
        %v4281 = vld [vmem:[%s1551 + $0x18] sm:$0xff]
        %4282 = vmatprep.subr.mxu0 %v4179
        %4283 = vmatpush1.msra.mxu0 %v4178
        %4284 = vmatprep.subr.mxu0 %v4177
        %4285 = vmatpush1.msra.mxu0 %v4176
        %4286 = vmatprep.subr.mxu0 %v4175
        %4287 = vmatpush1.msra.mxu0 %v4174
        %4288 = vmatprep.subr.mxu0 %v4173
        %4289 = vmatpush1.msra.mxu0 %v4172
        %4290 = vmatprep.subr.mxu0 %v4171
        %4291 = vmatpush1.msra.mxu0 %v4170
        %4292 = vmatprep.subr.mxu0 %v4169
        %4293 = vmatpush1.msra.mxu0 %v4168
        %4294 = vmatprep.subr.mxu0 %v4167
        %4295 = vmatpush1.msra.mxu0 %v4166
        %4296 = vmatprep.subr.mxu0 %v4165
        %4297 = vmatpush1.msra.mxu0 %v4164
        %4298 = vmatprep.subr.mxu0 %v4163
        %4299 = vmatpush1.msra.mxu0 %v4162
        %4300 = vmatprep.subr.mxu0 %v4161
        %4301 = vmatpush1.msra.mxu0 %v4160
        %4302 = vmatprep.subr.mxu0 %v4159
        %4303 = vmatpush1.msra.mxu0 %v4158
        %4304 = vmatprep.subr.mxu0 %v4157
        %4305 = vmatpush1.msra.mxu0 %v4156
        %4306 = vmatprep.subr.mxu0 %v4155
        %4307 = vmatpush1.msra.mxu0 %v4154
        %4308 = vmatprep.subr.mxu0 %v4153
        %4309 = vmatpush1.msra.mxu0 %v4152
        %4310 = vmatprep.subr.mxu0 %v4151
        %4311 = vmatpush1.msra.mxu0 %v4150
        %4312 = vmatprep.subr.mxu0 %v4149
        %4313 = vmatpush1.msra.mxu0 %v4148
        %4314 = vmatprep.subr.mxu0 %v4211
        %4315 = vmatpush2.msra.mxu0 %v4210
        %4316 = vmatprep.subr.mxu0 %v4209
        %4317 = vmatpush2.msra.mxu0 %v4208
        %4318 = vmatprep.subr.mxu0 %v4207
        %4319 = vmatpush2.msra.mxu0 %v4206
        %4320 = vmatprep.subr.mxu0 %v4205
        %4321 = vmatpush2.msra.mxu0 %v4204
        %4322 = vmatprep.subr.mxu0 %v4203
        %4323 = vmatpush2.msra.mxu0 %v4202
        %4324 = vmatprep.subr.mxu0 %v4201
        %4325 = vmatpush2.msra.mxu0 %v4200
        %4326 = vmatprep.subr.mxu0 %v4199
        %4327 = vmatpush2.msra.mxu0 %v4198
        %4328 = vmatprep.subr.mxu0 %v4197
        %4329 = vmatpush2.msra.mxu0 %v4196
        %4330 = vmatprep.subr.mxu0 %v4195
        %4331 = vmatpush2.msra.mxu0 %v4194
        %4332 = vmatprep.subr.mxu0 %v4193
        %4333 = vmatpush2.msra.mxu0 %v4192
        %4334 = vmatprep.subr.mxu0 %v4191
        %4335 = vmatpush2.msra.mxu0 %v4190
        %4336 = vmatprep.subr.mxu0 %v4189
        %4337 = vmatpush2.msra.mxu0 %v4188
        %4338 = vmatprep.subr.mxu0 %v4187
        %4339 = vmatpush2.msra.mxu0 %v4186
        %4340 = vmatprep.subr.mxu0 %v4185
        %4341 = vmatpush2.msra.mxu0 %v4184
        %4342 = vmatprep.subr.mxu0 %v4183
        %4343 = vmatpush2.msra.mxu0 %v4182
        %4344 = vmatprep.subr.mxu0 %v4181
        %4345 = vmatpush2.msra.mxu0 %v4180
        %4346 = vmatprep.mubr.f32.mxu0 %v4279
        %4347 = vmatmul.mubr.f32.gmra.mxu0 %v4278
        %v4348 = vpop.f32.mrf.mxu0
        %v4349 = vadd.f32 0.0, %v4348
        %v4350 = vpop.f32.mrf.mxu0
        %v4351 = vadd.f32 0.0, %v4350
        %4352 = vdwg.mxu0
        %4353 = vmatprep.subr.mxu0 %v4243
        %4354 = vmatpush1.msra.mxu0 %v4242
        %4355 = vmatprep.subr.mxu0 %v4241
        %4356 = vmatpush1.msra.mxu0 %v4240
        %4357 = vmatprep.subr.mxu0 %v4239
        %4358 = vmatpush1.msra.mxu0 %v4238
        %4359 = vmatprep.subr.mxu0 %v4237
        %4360 = vmatpush1.msra.mxu0 %v4236
        %4361 = vmatprep.subr.mxu0 %v4235
        %4362 = vmatpush1.msra.mxu0 %v4234
        %4363 = vmatprep.subr.mxu0 %v4233
        %4364 = vmatpush1.msra.mxu0 %v4232
        %4365 = vmatprep.subr.mxu0 %v4231
        %4366 = vmatpush1.msra.mxu0 %v4230
        %4367 = vmatprep.subr.mxu0 %v4229
        %4368 = vmatpush1.msra.mxu0 %v4228
        %4369 = vmatprep.subr.mxu0 %v4227
        %4370 = vmatpush1.msra.mxu0 %v4226
        %4371 = vmatprep.subr.mxu0 %v4225
        %4372 = vmatpush1.msra.mxu0 %v4224
        %4373 = vmatprep.subr.mxu0 %v4223
        %4374 = vmatpush1.msra.mxu0 %v4222
        %4375 = vmatprep.subr.mxu0 %v4221
        %4376 = vmatpush1.msra.mxu0 %v4220
        %4377 = vmatprep.subr.mxu0 %v4219
        %4378 = vmatpush1.msra.mxu0 %v4218
        %4379 = vmatprep.subr.mxu0 %v4217
        %4380 = vmatpush1.msra.mxu0 %v4216
        %4381 = vmatprep.subr.mxu0 %v4215
        %4382 = vmatpush1.msra.mxu0 %v4214
        %4383 = vmatprep.subr.mxu0 %v4213
        %4384 = vmatpush1.msra.mxu0 %v4212
        %4385 = vmatprep.subr.mxu0 %v4275
        %4386 = vmatpush2.msra.mxu0 %v4274
        %4387 = vmatprep.subr.mxu0 %v4273
        %4388 = vmatpush2.msra.mxu0 %v4272
        %4389 = vmatprep.subr.mxu0 %v4271
        %4390 = vmatpush2.msra.mxu0 %v4270
        %4391 = vmatprep.subr.mxu0 %v4269
        %4392 = vmatpush2.msra.mxu0 %v4268
        %4393 = vmatprep.subr.mxu0 %v4267
        %4394 = vmatpush2.msra.mxu0 %v4266
        %4395 = vmatprep.subr.mxu0 %v4265
        %4396 = vmatpush2.msra.mxu0 %v4264
        %4397 = vmatprep.subr.mxu0 %v4263
        %4398 = vmatpush2.msra.mxu0 %v4262
        %4399 = vmatprep.subr.mxu0 %v4261
        %4400 = vmatpush2.msra.mxu0 %v4260
        %4401 = vmatprep.subr.mxu0 %v4259
        %4402 = vmatpush2.msra.mxu0 %v4258
        %4403 = vmatprep.subr.mxu0 %v4257
        %4404 = vmatpush2.msra.mxu0 %v4256
        %4405 = vmatprep.subr.mxu0 %v4255
        %4406 = vmatpush2.msra.mxu0 %v4254
        %4407 = vmatprep.subr.mxu0 %v4253
        %4408 = vmatpush2.msra.mxu0 %v4252
        %4409 = vmatprep.subr.mxu0 %v4251
        %4410 = vmatpush2.msra.mxu0 %v4250
        %4411 = vmatprep.subr.mxu0 %v4249
        %4412 = vmatpush2.msra.mxu0 %v4248
        %4413 = vmatprep.subr.mxu0 %v4247
        %4414 = vmatpush2.msra.mxu0 %v4246
        %4415 = vmatprep.subr.mxu0 %v4245
        %4416 = vmatpush2.msra.mxu0 %v4244
        %4417 = vmatprep.mubr.f32.mxu0 %v4281
        %4418 = vmatmul.mubr.f32.gmra.mxu0 %v4280
        %v4419 = vpop.f32.mrf.mxu0
        %v4420 = vadd.f32 %v4349, %v4419
        %v4421 = vpop.f32.mrf.mxu0
        %v4422 = vadd.f32 %v4351, %v4421
        %4423 = vdwg.mxu0
        %v4424 = vadd.f32 %v4276, %v4420
        %v4425 = vadd.f32 %v4277, %v4422
        %4426 = vst [vmem:[#allocation2] sm:$0xff] %v4424
        %4427 = vst [vmem:[#allocation2 + $0x8] sm:$0xff] %v4425
        %p4428 = scmp.eq.s32.totalorder %s24, 1
        // Predicated region
        $region149: #{bayesian_linear_forward.1} parent=127 // pred_check
          %p4429 = pneg %p4428
        $region150: #{bayesian_linear_forward.1} parent=127 // pred_check_branch
          %4431 = sbr.rel (%p4429) target = $region152
        $region151: #{bayesian_linear_forward.1} parent=127 // pred_region
          %v4432 = vld [vmem:[%s1569] sm:$0x3]
          %vm4433 = vcmp.gt.f32.partialorder %v4432, 20.0
          %v4434 = vmin.f32 %v4432, 20.0
          %v4435 = vmul.f32 %v4434, 1.442695
          %v4436 = vpow.pop %v4435
          %v4437 = vadd.f32 %v4436, 1.0
          %v4438 = vlog2.pop %v4437
          %v4439 = vmul.f32 %v4438, 0.6931472
          %v4440 = vmul.f32 -0.5, %v4436
          %v4441 = vadd.f32 %v4440, 1.0
          %v4442 = vmul.f32 %v4441, %v4436
          %v4443 = vand.u32 2147483647, %v4436
          %vm4444 = vcmp.lt.f32.partialorder %v4443, 0.0004427343
          %v4445 = vsel %vm4444, %v4442, %v4439
          %v4446 = vsel %vm4433, %v4432, %v4445
          %v4447 = vld [vmem:[%s1564] sm:$0x3]
          %v4448 = vld [vmem:[%s1574] sm:$0x3]
          %v4449 = vmul.f32 %v4446, %v4448
          %v4450 = vadd.f32 %v4447, %v4449
          %v4451 = vld [vmem:[#allocation2] sm:$0xff]
          %v4452 = vld [vmem:[#allocation2 + $0x8] sm:$0xff]
          %v4454 = vlaneseq
          %v4455 = vshrl.u32 %v4454, 7
          %v4456 = vsub.s32 0, %v4455
          %v4457 = vrot.slane %v4450, %v4456
          %v4458 = vlaneseq
          %v4459 = vshrl.u32 %v4458, 7
          %v4460 = vsub.s32 1, %v4459
          %v4461 = vrot.slane %v4450, %v4460
          %v4464 = vadd.f32 %v4451, %v4457
          %v4465 = vadd.f32 %v4452, %v4461
          %4466 = vst [vmem:[%s1580] sm:$0xff] %v4464
          %4467 = vst [vmem:[%s1580 + $0x8] sm:$0xff] %v4465
        $region152: #{bayesian_linear_forward.1} parent=127 // pred_fallthru
          _
        %s4468 = smul.u32 2, %s23
        %p4469 = scmp.lt.s32.totalorder %s4468, 3
        %s4470 = scalar_select %p4469, %s4468, 3
        %s4471 = smul.addr %s4470, 8
        %s4472 = scalar_lea.vmem %s8, %s4471
        // Predicated region
        $region153: #{bayesian_linear_forward.1} parent=127 // pred_check
          %p4473 = pneg %p265
        $region154: #{bayesian_linear_forward.1} parent=127 // pred_check_branch
          %4475 = sbr.rel (%p4473) target = $region156
        $region155: #{bayesian_linear_forward.1} parent=127 // pred_region
          %s4476 = smul.u32 2, %s23
        $region156: #{bayesian_linear_forward.1} parent=127 // pred_fallthru
          _
      $region128: #{bayesian_linear_forward.1} parent=5 // pred_fallthru
        _
      %p4477 = scmp.le.s32.totalorder 2, %s14
      // Predicated region
      $region157: #{bayesian_linear_forward.1} parent=5 // pred_check
        %p4478 = pneg %p4477
      $region158: #{bayesian_linear_forward.1} parent=5 // pred_check_branch
        %4480 = sbr.rel (%p4478) target = $region160
      $region159: #{bayesian_linear_forward.1} parent=5 // pred_region
        %s4481 = ssub.s32 %s14, 2
        // Predicated region
        $region161: #{bayesian_linear_forward.1} parent=159 // pred_check
          %p4482 = pneg %p271
        $region162: #{bayesian_linear_forward.1} parent=159 // pred_check_branch
          %4484 = sbr.rel (%p4482) target = $region164
        $region163: #{bayesian_linear_forward.1} parent=159 // pred_region
          %s4485 = smul.u32 2, %s25
          %p4486 = scmp.lt.s32.totalorder %s4485, 3
          %s4487 = scalar_select %p4486, %s4485, 3
          %s4488 = smul.addr %s4487, 8
          %s4489 = scalar_lea.vmem %s8, %s4488
        $region164: #{bayesian_linear_forward.1} parent=159 // pred_fallthru
          _
      $region160: #{bayesian_linear_forward.1} parent=5 // pred_fallthru
        _
    $region6: #{bayesian_linear_forward.1} parent=1 // loop_footer
      %s18 = sadd.s32 1, %s14
    $region7: #{bayesian_linear_forward.1} parent=1 // loop_footer_branch
      %13 = sbr.rel target = $region3
    $region8: #{bayesian_linear_forward.1} parent=1 // loop_exit
      _

</llo_original>
